<compile_context>
chip_gen: v5e
topology: v5e:2x2
jax: 0.10.0
libtpu: 0.0.40
codegen_flags: <defaults>
</compile_context>

<pallas_src>
import functools
import math

import jax
import jax.numpy as jnp
from jax import lax
from jax.experimental import pallas as pl
from jax.experimental.pallas import tpu as pltpu


def _round_up(v, m):
    return ((v + m - 1) // m) * m


def _vmem_capacity_bytes():
    """Per-core VMEM capacity; conservative fallback if the query is unavailable."""
    try:
        return int(pltpu.get_tpu_info().vmem_capacity_bytes)
    except Exception:
        return 64 << 20  # v7x per-TensorCore size; safe lower bound for v5e/v6e too


# ----------------------------------------------------------------------------
# In-kernel im2col gather: kH*kW tap patches, each as an (M, Cin) value.
# ----------------------------------------------------------------------------
def _gather_tap_patches(x_ref, *, flat_x, h_base, stride, dilation,
                        kH, kW, TH, OW, Cin):
    M = TH * OW
    pieces = []
    for kh in range(kH):
        r0 = h_base + kh * dilation
        rows = pl.ds(r0, TH) if stride == 1 else pl.ds(r0, TH, stride)
        for kw in range(kW):
            if flat_x:
                # x_ref: (Hp, Wp*Cin) lane-dense rows; one contiguous lane span per tap.
                c0 = kw * dilation * Cin
                if stride == 1:
                    piece = x_ref[rows, pl.ds(c0, OW * Cin)].reshape(M, Cin)
                else:
                    span = x_ref[rows, pl.ds(c0, OW * stride * Cin)]
                    piece = span.reshape(M, stride * Cin)[:, :Cin]
            else:
                # x_ref: (Hp, Wp, Cin); Cin sits in the (lane-padded) minor dim.
                c0 = kw * dilation
                cols = pl.ds(c0, OW) if stride == 1 else pl.ds(c0, OW, stride)
                piece = x_ref[rows, cols, :].reshape(M, Cin)
            pieces.append(piece)
    return pieces


# ----------------------------------------------------------------------------
# Primary kernel: build the (M, K_pad) im2col block in vregs, one fused MXU dot.
# ----------------------------------------------------------------------------
def _phm_conv2d_kernel(x_ref, w_ref, b_ref, o_ref, *, flat_x, stride, dilation,
                       kH, kW, TH, OW, Cin, K, K_pad):
    # x_ref: padded image of one batch element (layout depends on flat_x)
    # w_ref: (K_pad, Cout_pad) kron-summed weight (resident)
    # b_ref: (1, Cout_pad) zero-padded bias (resident)
    # o_ref: (M, Cout_pad) output row block, lane dense
    M = TH * OW
    h_base = pl.multiple_of(pl.program_id(1) * (TH * stride), TH * stride)
    pieces = _gather_tap_patches(x_ref, flat_x=flat_x, h_base=h_base, stride=stride,
                                 dilation=dilation, kH=kH, kW=kW, TH=TH, OW=OW, Cin=Cin)
    if K_pad > K:  # zero-pad the contraction dim to match the 128-aligned weight rows
        pieces.append(jnp.zeros((M, K_pad - K), dtype=pieces[0].dtype))
    col = jnp.concatenate(pieces, axis=-1)                      # (M, K_pad) in vregs
    acc = jnp.dot(col, w_ref[...], preferred_element_type=jnp.float32)
    o_ref[...] = (acc + b_ref[...]).astype(o_ref.dtype)


# ----------------------------------------------------------------------------
# Fallback kernel: stage the im2col block through a VMEM scratch (older Mosaic
# builds without the lane split/concat relayouts used by the primary path).
# ----------------------------------------------------------------------------
def _phm_conv2d_kernel_scratch(x_ref, w_ref, b_ref, o_ref, col_ref, *, stride,
                               dilation, kH, kW, TH, OW, Cin, K, K_pad):
    M = TH * OW
    h_base = pl.multiple_of(pl.program_id(1) * (TH * stride), TH * stride)
    pieces = _gather_tap_patches(x_ref, flat_x=False, h_base=h_base, stride=stride,
                                 dilation=dilation, kH=kH, kW=kW, TH=TH, OW=OW, Cin=Cin)
    for idx, piece in enumerate(pieces):
        col_ref[:, pl.ds(idx * Cin, Cin)] = piece
    if K_pad > K:  # zero the pad columns every step (scratch is per-core persistent)
        col_ref[:, pl.ds(K, K_pad - K)] = jnp.zeros((M, K_pad - K), col_ref.dtype)
    acc = jnp.dot(col_ref[...], w_ref[...], preferred_element_type=jnp.float32)
    o_ref[...] = (acc + b_ref[...]).astype(o_ref.dtype)


# ----------------------------------------------------------------------------
# PHM (kronecker) weight construction — mirrors kronecker_product1(...).sum(0).
# ----------------------------------------------------------------------------
def phm_weight(A, Fp, n, out_features, in_features):
    # A : (n, n, n), Fp : (n, out//n, in//n, kH, kW)
    kH, kW = Fp.shape[-2:]
    res = A[:, :, None, :, None, None, None] * Fp[:, None, :, None, :, :, :]
    return res.reshape(n, out_features, in_features, kH, kW).sum(axis=0)


# ----------------------------------------------------------------------------
# Wrapper: layout plumbing + tiled pallas_call.
# ----------------------------------------------------------------------------
def phm_conv2d(x_nchw, A, Fp, bias, *, n, stride=1, padding=0, dilation=1,
               target_block_m=512, compute_dtype=jnp.float32):
    """PHMConv2d.forward.  compute_dtype=jnp.bfloat16 is the fast MXU/DMA path on all
    of v5e/v6e/v7x (accumulation stays f32); the f32 default matches PyTorch numerics.
    """
    out_features = int(Fp.shape[1]) * n
    in_features = int(Fp.shape[2]) * n
    kH, kW = int(Fp.shape[-2]), int(Fp.shape[-1])

    x_nchw = x_nchw.astype(jnp.float32)          # PyTorch casts input to weight dtype
    N, Cin, H, Wd = x_nchw.shape
    assert Cin == in_features
    OH = (H + 2 * padding - dilation * (kH - 1) - 1) // stride + 1
    OW = (Wd + 2 * padding - dilation * (kW - 1) - 1) // stride + 1
    Cout = out_features

    # ---- kron-summed weight -> lane-aligned (K_pad, Cout_pad) matmul operand -------
    W = phm_weight(A, Fp, n, out_features, in_features)          # (Cout, Cin, kH, kW)
    K = kH * kW * Cin
    K_pad = _round_up(K, 128)                    # 128-aligned contraction dim
    Cout_pad = _round_up(Cout, 128)              # lane-dense output stores
    Wmat = jnp.transpose(W, (2, 3, 1, 0)).reshape(K, Cout)       # rows = (kh, kw, ci)
    Wmat = jnp.pad(Wmat, ((0, K_pad - K), (0, Cout_pad - Cout))).astype(compute_dtype)
    b_pad = jnp.pad(bias.astype(jnp.float32), (0, Cout_pad - Cout)).reshape(1, Cout_pad)

    # ---- tiling: M = TH*OW rows per step; OH padded up to a multiple of TH ---------
    isz = jnp.dtype(compute_dtype).itemsize
    vmem_budget = int(0.85 * _vmem_capacity_bytes())   # ~54 MiB v7x, ~108 MiB v5e/v6e
    Wp = max(Wd + 2 * padding, (kW - 1) * dilation + OW * stride)
    WpC = Wp * Cin

    def plan(th):
        th = max(1, min(th, OH))
        while (th * OW) % 8 != 0 and th < OH:    # keep output blocks sublane aligned
            th += 1
        n_hb = pl.cdiv(OH, th)
        oh_pad = n_hb * th
        hp = max(H + 2 * padding, (oh_pad - 1) * stride + (kH - 1) * dilation + 1)
        m = th * OW
        est = (2 * _round_up(hp, 8) * _round_up(WpC, 128) * isz  # resident image (x2)
               + 2 * _round_up(m, 8) * Cout_pad * 4              # output block   (x2)
               + _round_up(K_pad, 8) * Cout_pad * isz            # weight (single buf)
               + 2 * _round_up(m, 8) * K_pad * isz               # in-vreg im2col spill
               + (4 << 20))                                      # slack
        return th, n_hb, oh_pad, hp, m, est

    TH, n_hb, OH_pad, Hp, M, est = plan(max(1, target_block_m // max(OW, 1)))
    while est > vmem_budget and TH > 1:          # shrink the row block if it can't fit
        nxt = plan(TH // 2)
        if nxt[0] >= TH:
            break
        TH, n_hb, OH_pad, Hp, M, est = nxt
    # TODO(synk): for very large Hp*Wp*Cin keep x in HBM (memory_space=pl.ANY) and
    # manually DMA only the TH*stride + (kH-1)*dilation halo rows per grid step.

    def run(flat_x, use_scratch, single_buffer_consts):
        # NCHW -> NHWC + conv zero padding (+ ragged-OH / stride slack rows & cols).
        # TODO(synk): keep activations NHWC end-to-end in a full model so the input
        # and output transposes disappear.
        xp = jnp.transpose(x_nchw, (0, 2, 3, 1)).astype(compute_dtype)
        xp = jnp.pad(xp, ((0, 0), (padding, Hp - H - padding),
                          (padding, Wp - Wd - padding), (0, 0)))
        if flat_x:
            xp = xp.reshape(N, Hp, WpC)          # lane-dense rows: (W, Cin) flattened
            x_spec = pl.BlockSpec((None, Hp, WpC), lambda b, h: (b, 0, 0))
            x_blk = _round_up(Hp, 8) * _round_up(WpC, 128) * isz
        else:
            x_spec = pl.BlockSpec((None, Hp, Wp, Cin), lambda b, h: (b, 0, 0, 0))
            x_blk = Hp * _round_up(Wp, 8) * _round_up(Cin, 128) * isz

        # Constant-index operands never re-DMA after the first fetch; one buffer.
        ckw = dict(pipeline_mode=pl.Buffered(1)) if single_buffer_consts else {}
        w_spec = pl.BlockSpec((K_pad, Cout_pad), lambda b, h: (0, 0), **ckw)
        b_spec = pl.BlockSpec((1, Cout_pad), lambda b, h: (0, 0), **ckw)

        common = dict(stride=stride, dilation=dilation, kH=kH, kW=kW,
                      TH=TH, OW=OW, Cin=Cin, K=K, K_pad=K_pad)
        if use_scratch:
            kernel = functools.partial(_phm_conv2d_kernel_scratch, **common)
            scratch = [pltpu.VMEM((M, K_pad), compute_dtype)]
        else:
            kernel = functools.partial(_phm_conv2d_kernel, flat_x=flat_x, **common)
            scratch = []

        n_wbuf = 1 if single_buffer_consts else 2
        vmem_est = (2 * x_blk + 2 * _round_up(M, 8) * Cout_pad * 4
                    + n_wbuf * _round_up(K_pad, 8) * Cout_pad * isz
                    + 2 * _round_up(M, 8) * K_pad * isz + (4 << 20))
        vmem_limit = int(min(max(vmem_est, 16 << 20), vmem_budget))

        return pl.pallas_call(
            kernel,
            out_shape=jax.ShapeDtypeStruct((N, OH_pad * OW, Cout_pad), jnp.float32),
            grid_spec=pltpu.PrefetchScalarGridSpec(
                num_scalar_prefetch=0,
                grid=(N, n_hb),
                in_specs=[x_spec, w_spec, b_spec],
                out_specs=pl.BlockSpec((None, M, Cout_pad), lambda b, h: (b, h, 0)),
                scratch_shapes=scratch),
            compiler_params=pltpu.CompilerParams(
                dimension_semantics=("parallel", "parallel"),
                vmem_limit_bytes=vmem_limit),
        )(xp, Wmat, b_pad)

    # Preferred configuration first; degrade gracefully on Pallas/Mosaic versions that
    # lack per-operand buffer counts or the lane split/concat relayouts it relies on.
    attempts = ((True, False, True),    # flat x, in-vreg im2col, single-buffer consts
                (True, False, False),   # flat x, in-vreg im2col
                (False, False, False),  # 3-D x block, in-vreg im2col
                (False, True, False))   # 3-D x block, VMEM-scratch im2col
    out_padded, last_err = None, None
    for flat_x, use_scratch, single_buf in attempts:
        try:
            out_padded = run(flat_x, use_scratch, single_buf)
            break
        except Exception as e:          # compatibility fallback (see comment above)
            last_err = e
    if out_padded is None:
        raise last_err

    # Strip row/channel padding, back to NCHW (PyTorch convention).
    out = out_padded.reshape(N, OH_pad, OW, Cout_pad)[:, :OH, :, :Cout]
    return jnp.transpose(out, (0, 3, 1, 2))


if __name__ == "__main__":
    # Module hyper-params (small, consistent with PHMConv2d.__init__).
    n = 2
    in_features = 4
    out_features = 8
    kernel_size = 3
    stride, padding, dilation = 1, 1, 1

    key = jax.random.PRNGKey(0)
    kA, kF, kB, kX = jax.random.split(key, 4)

    # Deterministic parameter init (shapes match the PyTorch module).
    boundA = math.sqrt(6.0 / (n + n))                         # xavier_uniform on (n,n,n)
    A = jax.random.uniform(kA, (n, n, n), jnp.float32, -boundA, boundA)

    rf = kernel_size * kernel_size                            # xavier_uniform on F
    boundF = math.sqrt(6.0 / ((in_features // n) * rf + (out_features // n) * rf))
    Fp = jax.random.uniform(
        kF, (n, out_features // n, in_features // n, kernel_size, kernel_size),
        jnp.float32, -boundF, boundF)

    boundB = 1.0 / math.sqrt(in_features)                     # U(-1/sqrt(fan_in), ...)
    bias = jax.random.uniform(kB, (out_features,), jnp.float32, -boundB, boundB)

    # Input, NCHW like PyTorch.
    x = jax.random.normal(kX, (2, in_features, 16, 16), jnp.float32)

    out = phm_conv2d(x, A, Fp, bias, n=n, stride=stride, padding=padding,
                     dilation=dilation)
    out = jax.block_until_ready(out)

    # Cross-check against XLA's conv on the same kron-summed weight.
    W = phm_weight(A, Fp, n, out_features, in_features)
    ref = lax.conv_general_dilated(
        x, W, window_strides=(stride, stride),
        padding=[(padding, padding), (padding, padding)],
        rhs_dilation=(dilation, dilation),
        dimension_numbers=("NCHW", "OIHW", "NCHW"),
    ) + bias[None, :, None, None]

    assert out.shape == (2, out_features, 16, 16)
    assert jnp.allclose(out, ref, rtol=1e-4, atol=1e-4), "mismatch vs XLA conv reference"

    print("KERNEL_OK")
</pallas_src>

<mosaic_0001>
module attributes {stable_mosaic.version = 11 : i64} {
  func.func @_phm_conv2d_kernel(%arg0: i32, %arg1: i32, %arg2: memref<1x18x72xf32, #tpu.memory_space<vmem>>, %arg3: memref<128x128xf32, #tpu.memory_space<vmem>>, %arg4: memref<1x128xf32, #tpu.memory_space<vmem>>, %arg5: memref<1x256x128xf32, #tpu.memory_space<vmem>>) attributes {dimension_semantics = [#tpu.dimension_semantics<parallel>, #tpu.dimension_semantics<parallel>], iteration_bounds = array<i64: 2, 1>, scalar_prefetch = 0 : i64, scratch_operands = 0 : i64, tpu.core_type = #tpu.core_type<tc>, window_params = [{transform_indices = @transform_0, window_bounds = array<i64: 1, 18, 72>}, {pipeline_mode = #tpu.pipeline_mode<synchronous>, transform_indices = @transform_1, window_bounds = array<i64: 128, 128>}, {pipeline_mode = #tpu.pipeline_mode<synchronous>, transform_indices = @transform_2, window_bounds = array<i64: 1, 128>}, {transform_indices = @transform_3, window_bounds = array<i64: 1, 256, 128>}]} {
    %c16_i32 = arith.constant 16 : i32
    %0 = arith.muli %arg1, %c16_i32 : i32
    %1 = tpu.assume_multiple %0, 16 : i32
    %c0_i32 = arith.constant 0 : i32
    %2 = arith.addi %1, %c0_i32 : i32
    %c0 = arith.constant 0 : index
    %3 = arith.index_cast %2 : i32 to index
    %c0_0 = arith.constant 0 : index
    %4 = vector.load %arg2[%c0, %3, %c0_0] : memref<1x18x72xf32, #tpu.memory_space<vmem>>, vector<1x16x64xf32>
    %5 = vector.shape_cast %4 : vector<1x16x64xf32> to vector<16x64xf32>
    %6 = vector.shape_cast %5 : vector<16x64xf32> to vector<256x4xf32>
    %c0_1 = arith.constant 0 : index
    %7 = arith.index_cast %2 : i32 to index
    %c4 = arith.constant 4 : index
    %8 = vector.load %arg2[%c0_1, %7, %c4] : memref<1x18x72xf32, #tpu.memory_space<vmem>>, vector<1x16x64xf32>
    %9 = vector.shape_cast %8 : vector<1x16x64xf32> to vector<16x64xf32>
    %10 = vector.shape_cast %9 : vector<16x64xf32> to vector<256x4xf32>
    %c0_2 = arith.constant 0 : index
    %11 = arith.index_cast %2 : i32 to index
    %c8 = arith.constant 8 : index
    %12 = vector.load %arg2[%c0_2, %11, %c8] : memref<1x18x72xf32, #tpu.memory_space<vmem>>, vector<1x16x64xf32>
    %13 = vector.shape_cast %12 : vector<1x16x64xf32> to vector<16x64xf32>
    %14 = vector.shape_cast %13 : vector<16x64xf32> to vector<256x4xf32>
    %c1_i32 = arith.constant 1 : i32
    %15 = arith.addi %1, %c1_i32 : i32
    %c0_3 = arith.constant 0 : index
    %16 = arith.index_cast %15 : i32 to index
    %c0_4 = arith.constant 0 : index
    %17 = vector.load %arg2[%c0_3, %16, %c0_4] : memref<1x18x72xf32, #tpu.memory_space<vmem>>, vector<1x16x64xf32>
    %18 = vector.shape_cast %17 : vector<1x16x64xf32> to vector<16x64xf32>
    %19 = vector.shape_cast %18 : vector<16x64xf32> to vector<256x4xf32>
    %c0_5 = arith.constant 0 : index
    %20 = arith.index_cast %15 : i32 to index
    %c4_6 = arith.constant 4 : index
    %21 = vector.load %arg2[%c0_5, %20, %c4_6] : memref<1x18x72xf32, #tpu.memory_space<vmem>>, vector<1x16x64xf32>
    %22 = vector.shape_cast %21 : vector<1x16x64xf32> to vector<16x64xf32>
    %23 = vector.shape_cast %22 : vector<16x64xf32> to vector<256x4xf32>
    %c0_7 = arith.constant 0 : index
    %24 = arith.index_cast %15 : i32 to index
    %c8_8 = arith.constant 8 : index
    %25 = vector.load %arg2[%c0_7, %24, %c8_8] : memref<1x18x72xf32, #tpu.memory_space<vmem>>, vector<1x16x64xf32>
    %26 = vector.shape_cast %25 : vector<1x16x64xf32> to vector<16x64xf32>
    %27 = vector.shape_cast %26 : vector<16x64xf32> to vector<256x4xf32>
    %c2_i32 = arith.constant 2 : i32
    %28 = arith.addi %1, %c2_i32 : i32
    %c0_9 = arith.constant 0 : index
    %29 = arith.index_cast %28 : i32 to index
    %c0_10 = arith.constant 0 : index
    %30 = vector.load %arg2[%c0_9, %29, %c0_10] : memref<1x18x72xf32, #tpu.memory_space<vmem>>, vector<1x16x64xf32>
    %31 = vector.shape_cast %30 : vector<1x16x64xf32> to vector<16x64xf32>
    %32 = vector.shape_cast %31 : vector<16x64xf32> to vector<256x4xf32>
    %c0_11 = arith.constant 0 : index
    %33 = arith.index_cast %28 : i32 to index
    %c4_12 = arith.constant 4 : index
    %34 = vector.load %arg2[%c0_11, %33, %c4_12] : memref<1x18x72xf32, #tpu.memory_space<vmem>>, vector<1x16x64xf32>
    %35 = vector.shape_cast %34 : vector<1x16x64xf32> to vector<16x64xf32>
    %36 = vector.shape_cast %35 : vector<16x64xf32> to vector<256x4xf32>
    %c0_13 = arith.constant 0 : index
    %37 = arith.index_cast %28 : i32 to index
    %c8_14 = arith.constant 8 : index
    %38 = vector.load %arg2[%c0_13, %37, %c8_14] : memref<1x18x72xf32, #tpu.memory_space<vmem>>, vector<1x16x64xf32>
    %39 = vector.shape_cast %38 : vector<1x16x64xf32> to vector<16x64xf32>
    %40 = vector.shape_cast %39 : vector<16x64xf32> to vector<256x4xf32>
    %cst = arith.constant 0.000000e+00 : f32
    %41 = vector.broadcast %cst : f32 to vector<256x92xf32>
    %42 = tpu.concatenate %6, %10, %14, %19, %23, %27, %32, %36, %40, %41 in 1 : vector<256x4xf32>, vector<256x4xf32>, vector<256x4xf32>, vector<256x4xf32>, vector<256x4xf32>, vector<256x4xf32>, vector<256x4xf32>, vector<256x4xf32>, vector<256x4xf32>, vector<256x92xf32> -> vector<256x128xf32>
    %c0_15 = arith.constant 0 : index
    %c0_16 = arith.constant 0 : index
    %43 = vector.load %arg3[%c0_15, %c0_16] : memref<128x128xf32, #tpu.memory_space<vmem>>, vector<128x128xf32>
    %cst_17 = arith.constant dense<0.000000e+00> : vector<256x128xf32>
    %44 = tpu.matmul %42, %43, %cst_17 {dimension_numbers = #tpu.dot_dimension_numbers<[1], [0], [0], [1], [0, 0, 1, 1], [], []>} : vector<256x128xf32>, vector<128x128xf32>, vector<256x128xf32> -> vector<256x128xf32>
    %c0_18 = arith.constant 0 : index
    %c0_19 = arith.constant 0 : index
    %45 = vector.load %arg4[%c0_18, %c0_19] : memref<1x128xf32, #tpu.memory_space<vmem>>, vector<1x128xf32>
    %46 = vector.broadcast %45 : vector<1x128xf32> to vector<256x128xf32>
    %47 = arith.addf %44, %46 : vector<256x128xf32>
    %c0_20 = arith.constant 0 : index
    %c0_21 = arith.constant 0 : index
    %c0_22 = arith.constant 0 : index
    %48 = vector.load %arg5[%c0_20, %c0_21, %c0_22] : memref<1x256x128xf32, #tpu.memory_space<vmem>>, vector<1x256x128xf32>
    %49 = vector.shape_cast %48 : vector<1x256x128xf32> to vector<256x128xf32>
    %50 = vector.shape_cast %47 : vector<256x128xf32> to vector<1x256x128xf32>
    tpu.vector_store %arg5[%c0_20, %c0_21, %c0_22], %50 {strides = array<i32>} : memref<1x256x128xf32, #tpu.memory_space<vmem>>, vector<1x256x128xf32>,
    return
  }
  func.func @transform_0(%arg0: i32, %arg1: i32) -> (i32, i32, i32) {
    %c0_i32 = arith.constant 0 : i32
    %c0_i32_0 = arith.constant 0 : i32
    %c0_i32_1 = arith.constant 0 : i32
    return %arg0, %c0_i32, %c0_i32_0 : i32, i32, i32
  }
  func.func @transform_1(%arg0: i32, %arg1: i32) -> (i32, i32) {
    %c0_i32 = arith.constant 0 : i32
    %c0_i32_0 = arith.constant 0 : i32
    %c0_i32_1 = arith.constant 0 : i32
    return %c0_i32, %c0_i32_0 : i32, i32
  }
  func.func @transform_2(%arg0: i32, %arg1: i32) -> (i32, i32) {
    %c0_i32 = arith.constant 0 : i32
    %c0_i32_0 = arith.constant 0 : i32
    %c0_i32_1 = arith.constant 0 : i32
    return %c0_i32, %c0_i32_0 : i32, i32
  }
  func.func @transform_3(%arg0: i32, %arg1: i32) -> (i32, i32, i32) {
    %c0_i32 = arith.constant 0 : i32
    %c0_i32_0 = arith.constant 0 : i32
    return %arg0, %arg1, %c0_i32 : i32, i32, i32
  }
}

module attributes {stable_mosaic.version = 11 : i64} {
  func.func @_phm_conv2d_kernel(%arg0: i32, %arg1: i32, %arg2: memref<1x18x72xf32, #tpu.memory_space<vmem>>, %arg3: memref<128x128xf32, #tpu.memory_space<vmem>>, %arg4: memref<1x128xf32, #tpu.memory_space<vmem>>, %arg5: memref<1x256x128xf32, #tpu.memory_space<vmem>>) attributes {dimension_semantics = [#tpu.dimension_semantics<parallel>, #tpu.dimension_semantics<parallel>], iteration_bounds = array<i64: 2, 1>, scalar_prefetch = 0 : i64, scratch_operands = 0 : i64, tpu.core_type = #tpu.core_type<tc>, window_params = [{transform_indices = @transform_0, window_bounds = array<i64: 1, 18, 72>}, {pipeline_mode = #tpu.pipeline_mode<synchronous>, transform_indices = @transform_1, window_bounds = array<i64: 128, 128>}, {pipeline_mode = #tpu.pipeline_mode<synchronous>, transform_indices = @transform_2, window_bounds = array<i64: 1, 128>}, {transform_indices = @transform_3, window_bounds = array<i64: 1, 256, 128>}]} {
    %c16_i32 = arith.constant 16 : i32
    %0 = arith.muli %arg1, %c16_i32 : i32
    %1 = tpu.assume_multiple %0, 16 : i32
    %c0_i32 = arith.constant 0 : i32
    %2 = arith.addi %1, %c0_i32 : i32
    %c0 = arith.constant 0 : index
    %3 = arith.index_cast %2 : i32 to index
    %c0_0 = arith.constant 0 : index
    %4 = vector.load %arg2[%c0, %3, %c0_0] : memref<1x18x72xf32, #tpu.memory_space<vmem>>, vector<1x16x64xf32>
    %5 = vector.shape_cast %4 : vector<1x16x64xf32> to vector<16x64xf32>
    %6 = vector.shape_cast %5 : vector<16x64xf32> to vector<256x4xf32>
    %c0_1 = arith.constant 0 : index
    %7 = arith.index_cast %2 : i32 to index
    %c4 = arith.constant 4 : index
    %8 = vector.load %arg2[%c0_1, %7, %c4] : memref<1x18x72xf32, #tpu.memory_space<vmem>>, vector<1x16x64xf32>
    %9 = vector.shape_cast %8 : vector<1x16x64xf32> to vector<16x64xf32>
    %10 = vector.shape_cast %9 : vector<16x64xf32> to vector<256x4xf32>
    %c0_2 = arith.constant 0 : index
    %11 = arith.index_cast %2 : i32 to index
    %c8 = arith.constant 8 : index
    %12 = vector.load %arg2[%c0_2, %11, %c8] : memref<1x18x72xf32, #tpu.memory_space<vmem>>, vector<1x16x64xf32>
    %13 = vector.shape_cast %12 : vector<1x16x64xf32> to vector<16x64xf32>
    %14 = vector.shape_cast %13 : vector<16x64xf32> to vector<256x4xf32>
    %c1_i32 = arith.constant 1 : i32
    %15 = arith.addi %1, %c1_i32 : i32
    %c0_3 = arith.constant 0 : index
    %16 = arith.index_cast %15 : i32 to index
    %c0_4 = arith.constant 0 : index
    %17 = vector.load %arg2[%c0_3, %16, %c0_4] : memref<1x18x72xf32, #tpu.memory_space<vmem>>, vector<1x16x64xf32>
    %18 = vector.shape_cast %17 : vector<1x16x64xf32> to vector<16x64xf32>
    %19 = vector.shape_cast %18 : vector<16x64xf32> to vector<256x4xf32>
    %c0_5 = arith.constant 0 : index
    %20 = arith.index_cast %15 : i32 to index
    %c4_6 = arith.constant 4 : index
    %21 = vector.load %arg2[%c0_5, %20, %c4_6] : memref<1x18x72xf32, #tpu.memory_space<vmem>>, vector<1x16x64xf32>
    %22 = vector.shape_cast %21 : vector<1x16x64xf32> to vector<16x64xf32>
    %23 = vector.shape_cast %22 : vector<16x64xf32> to vector<256x4xf32>
    %c0_7 = arith.constant 0 : index
    %24 = arith.index_cast %15 : i32 to index
    %c8_8 = arith.constant 8 : index
    %25 = vector.load %arg2[%c0_7, %24, %c8_8] : memref<1x18x72xf32, #tpu.memory_space<vmem>>, vector<1x16x64xf32>
    %26 = vector.shape_cast %25 : vector<1x16x64xf32> to vector<16x64xf32>
    %27 = vector.shape_cast %26 : vector<16x64xf32> to vector<256x4xf32>
    %c2_i32 = arith.constant 2 : i32
    %28 = arith.addi %1, %c2_i32 : i32
    %c0_9 = arith.constant 0 : index
    %29 = arith.index_cast %28 : i32 to index
    %c0_10 = arith.constant 0 : index
    %30 = vector.load %arg2[%c0_9, %29, %c0_10] : memref<1x18x72xf32, #tpu.memory_space<vmem>>, vector<1x16x64xf32>
    %31 = vector.shape_cast %30 : vector<1x16x64xf32> to vector<16x64xf32>
    %32 = vector.shape_cast %31 : vector<16x64xf32> to vector<256x4xf32>
    %c0_11 = arith.constant 0 : index
    %33 = arith.index_cast %28 : i32 to index
    %c4_12 = arith.constant 4 : index
    %34 = vector.load %arg2[%c0_11, %33, %c4_12] : memref<1x18x72xf32, #tpu.memory_space<vmem>>, vector<1x16x64xf32>
    %35 = vector.shape_cast %34 : vector<1x16x64xf32> to vector<16x64xf32>
    %36 = vector.shape_cast %35 : vector<16x64xf32> to vector<256x4xf32>
    %c0_13 = arith.constant 0 : index
    %37 = arith.index_cast %28 : i32 to index
    %c8_14 = arith.constant 8 : index
    %38 = vector.load %arg2[%c0_13, %37, %c8_14] : memref<1x18x72xf32, #tpu.memory_space<vmem>>, vector<1x16x64xf32>
    %39 = vector.shape_cast %38 : vector<1x16x64xf32> to vector<16x64xf32>
    %40 = vector.shape_cast %39 : vector<16x64xf32> to vector<256x4xf32>
    %cst = arith.constant 0.000000e+00 : f32
    %41 = vector.broadcast %cst : f32 to vector<256x92xf32>
    %42 = tpu.concatenate %6, %10, %14, %19, %23, %27, %32, %36, %40, %41 in 1 : vector<256x4xf32>, vector<256x4xf32>, vector<256x4xf32>, vector<256x4xf32>, vector<256x4xf32>, vector<256x4xf32>, vector<256x4xf32>, vector<256x4xf32>, vector<256x4xf32>, vector<256x92xf32> -> vector<256x128xf32>
    %c0_15 = arith.constant 0 : index
    %c0_16 = arith.constant 0 : index
    %43 = vector.load %arg3[%c0_15, %c0_16] : memref<128x128xf32, #tpu.memory_space<vmem>>, vector<128x128xf32>
    %cst_17 = arith.constant dense<0.000000e+00> : vector<256x128xf32>
    %44 = tpu.matmul %42, %43, %cst_17 {dimension_numbers = #tpu.dot_dimension_numbers<[1], [0], [0], [1], [0, 0, 1, 1], [], []>} : vector<256x128xf32>, vector<128x128xf32>, vector<256x128xf32> -> vector<256x128xf32>
    %c0_18 = arith.constant 0 : index
    %c0_19 = arith.constant 0 : index
    %45 = vector.load %arg4[%c0_18, %c0_19] : memref<1x128xf32, #tpu.memory_space<vmem>>, vector<1x128xf32>
    %46 = vector.broadcast %45 : vector<1x128xf32> to vector<256x128xf32>
    %47 = arith.addf %44, %46 : vector<256x128xf32>
    %c0_20 = arith.constant 0 : index
    %c0_21 = arith.constant 0 : index
    %c0_22 = arith.constant 0 : index
    %48 = vector.load %arg5[%c0_20, %c0_21, %c0_22] : memref<1x256x128xf32, #tpu.memory_space<vmem>>, vector<1x256x128xf32>
    %49 = vector.shape_cast %48 : vector<1x256x128xf32> to vector<256x128xf32>
    %50 = vector.shape_cast %47 : vector<256x128xf32> to vector<1x256x128xf32>
    tpu.vector_store %arg5[%c0_20, %c0_21, %c0_22], %50 {strides = array<i32>} : memref<1x256x128xf32, #tpu.memory_space<vmem>>, vector<1x256x128xf32>,
    return
  }
  func.func @transform_0(%arg0: i32, %arg1: i32) -> (i32, i32, i32) {
    %c0_i32 = arith.constant 0 : i32
    %c0_i32_0 = arith.constant 0 : i32
    %c0_i32_1 = arith.constant 0 : i32
    return %arg0, %c0_i32, %c0_i32_0 : i32, i32, i32
  }
  func.func @transform_1(%arg0: i32, %arg1: i32) -> (i32, i32) {
    %c0_i32 = arith.constant 0 : i32
    %c0_i32_0 = arith.constant 0 : i32
    %c0_i32_1 = arith.constant 0 : i32
    return %c0_i32, %c0_i32_0 : i32, i32
  }
  func.func @transform_2(%arg0: i32, %arg1: i32) -> (i32, i32) {
    %c0_i32 = arith.constant 0 : i32
    %c0_i32_0 = arith.constant 0 : i32
    %c0_i32_1 = arith.constant 0 : i32
    return %c0_i32, %c0_i32_0 : i32, i32
  }
  func.func @transform_3(%arg0: i32, %arg1: i32) -> (i32, i32, i32) {
    %c0_i32 = arith.constant 0 : i32
    %c0_i32_0 = arith.constant 0 : i32
    return %arg0, %arg1, %c0_i32 : i32, i32, i32
  }
}

module attributes {stable_mosaic.version = 11 : i64} {
  func.func @_phm_conv2d_kernel(%arg0: i32, %arg1: i32, %arg2: memref<1x18x18x4xf32, #tpu.memory_space<vmem>>, %arg3: memref<128x128xf32, #tpu.memory_space<vmem>>, %arg4: memref<1x128xf32, #tpu.memory_space<vmem>>, %arg5: memref<1x256x128xf32, #tpu.memory_space<vmem>>) attributes {dimension_semantics = [#tpu.dimension_semantics<parallel>, #tpu.dimension_semantics<parallel>], iteration_bounds = array<i64: 2, 1>, scalar_prefetch = 0 : i64, scratch_operands = 0 : i64, tpu.core_type = #tpu.core_type<tc>, window_params = [{transform_indices = @transform_0, window_bounds = array<i64: 1, 18, 18, 4>}, {pipeline_mode = #tpu.pipeline_mode<synchronous>, transform_indices = @transform_1, window_bounds = array<i64: 128, 128>}, {pipeline_mode = #tpu.pipeline_mode<synchronous>, transform_indices = @transform_2, window_bounds = array<i64: 1, 128>}, {transform_indices = @transform_3, window_bounds = array<i64: 1, 256, 128>}]} {
    %c16_i32 = arith.constant 16 : i32
    %0 = arith.muli %arg1, %c16_i32 : i32
    %1 = tpu.assume_multiple %0, 16 : i32
    %c0_i32 = arith.constant 0 : i32
    %2 = arith.addi %1, %c0_i32 : i32
    %c0 = arith.constant 0 : index
    %3 = arith.index_cast %2 : i32 to index
    %c0_0 = arith.constant 0 : index
    %c0_1 = arith.constant 0 : index
    %4 = vector.load %arg2[%c0, %3, %c0_0, %c0_1] : memref<1x18x18x4xf32, #tpu.memory_space<vmem>>, vector<1x16x16x4xf32>
    %5 = vector.shape_cast %4 : vector<1x16x16x4xf32> to vector<16x16x4xf32>
    %6 = vector.shape_cast %5 : vector<16x16x4xf32> to vector<256x4xf32>
    %c0_2 = arith.constant 0 : index
    %7 = arith.index_cast %2 : i32 to index
    %c1 = arith.constant 1 : index
    %c0_3 = arith.constant 0 : index
    %8 = vector.load %arg2[%c0_2, %7, %c1, %c0_3] : memref<1x18x18x4xf32, #tpu.memory_space<vmem>>, vector<1x16x16x4xf32>
    %9 = vector.shape_cast %8 : vector<1x16x16x4xf32> to vector<16x16x4xf32>
    %10 = vector.shape_cast %9 : vector<16x16x4xf32> to vector<256x4xf32>
    %c0_4 = arith.constant 0 : index
    %11 = arith.index_cast %2 : i32 to index
    %c2 = arith.constant 2 : index
    %c0_5 = arith.constant 0 : index
    %12 = vector.load %arg2[%c0_4, %11, %c2, %c0_5] : memref<1x18x18x4xf32, #tpu.memory_space<vmem>>, vector<1x16x16x4xf32>
    %13 = vector.shape_cast %12 : vector<1x16x16x4xf32> to vector<16x16x4xf32>
    %14 = vector.shape_cast %13 : vector<16x16x4xf32> to vector<256x4xf32>
    %c1_i32 = arith.constant 1 : i32
    %15 = arith.addi %1, %c1_i32 : i32
    %c0_6 = arith.constant 0 : index
    %16 = arith.index_cast %15 : i32 to index
    %c0_7 = arith.constant 0 : index
    %c0_8 = arith.constant 0 : index
    %17 = vector.load %arg2[%c0_6, %16, %c0_7, %c0_8] : memref<1x18x18x4xf32, #tpu.memory_space<vmem>>, vector<1x16x16x4xf32>
    %18 = vector.shape_cast %17 : vector<1x16x16x4xf32> to vector<16x16x4xf32>
    %19 = vector.shape_cast %18 : vector<16x16x4xf32> to vector<256x4xf32>
    %c0_9 = arith.constant 0 : index
    %20 = arith.index_cast %15 : i32 to index
    %c1_10 = arith.constant 1 : index
    %c0_11 = arith.constant 0 : index
    %21 = vector.load %arg2[%c0_9, %20, %c1_10, %c0_11] : memref<1x18x18x4xf32, #tpu.memory_space<vmem>>, vector<1x16x16x4xf32>
    %22 = vector.shape_cast %21 : vector<1x16x16x4xf32> to vector<16x16x4xf32>
    %23 = vector.shape_cast %22 : vector<16x16x4xf32> to vector<256x4xf32>
    %c0_12 = arith.constant 0 : index
    %24 = arith.index_cast %15 : i32 to index
    %c2_13 = arith.constant 2 : index
    %c0_14 = arith.constant 0 : index
    %25 = vector.load %arg2[%c0_12, %24, %c2_13, %c0_14] : memref<1x18x18x4xf32, #tpu.memory_space<vmem>>, vector<1x16x16x4xf32>
    %26 = vector.shape_cast %25 : vector<1x16x16x4xf32> to vector<16x16x4xf32>
    %27 = vector.shape_cast %26 : vector<16x16x4xf32> to vector<256x4xf32>
    %c2_i32 = arith.constant 2 : i32
    %28 = arith.addi %1, %c2_i32 : i32
    %c0_15 = arith.constant 0 : index
    %29 = arith.index_cast %28 : i32 to index
    %c0_16 = arith.constant 0 : index
    %c0_17 = arith.constant 0 : index
    %30 = vector.load %arg2[%c0_15, %29, %c0_16, %c0_17] : memref<1x18x18x4xf32, #tpu.memory_space<vmem>>, vector<1x16x16x4xf32>
    %31 = vector.shape_cast %30 : vector<1x16x16x4xf32> to vector<16x16x4xf32>
    %32 = vector.shape_cast %31 : vector<16x16x4xf32> to vector<256x4xf32>
    %c0_18 = arith.constant 0 : index
    %33 = arith.index_cast %28 : i32 to index
    %c1_19 = arith.constant 1 : index
    %c0_20 = arith.constant 0 : index
    %34 = vector.load %arg2[%c0_18, %33, %c1_19, %c0_20] : memref<1x18x18x4xf32, #tpu.memory_space<vmem>>, vector<1x16x16x4xf32>
    %35 = vector.shape_cast %34 : vector<1x16x16x4xf32> to vector<16x16x4xf32>
    %36 = vector.shape_cast %35 : vector<16x16x4xf32> to vector<256x4xf32>
    %c0_21 = arith.constant 0 : index
    %37 = arith.index_cast %28 : i32 to index
    %c2_22 = arith.constant 2 : index
    %c0_23 = arith.constant 0 : index
    %38 = vector.load %arg2[%c0_21, %37, %c2_22, %c0_23] : memref<1x18x18x4xf32, #tpu.memory_space<vmem>>, vector<1x16x16x4xf32>
    %39 = vector.shape_cast %38 : vector<1x16x16x4xf32> to vector<16x16x4xf32>
    %40 = vector.shape_cast %39 : vector<16x16x4xf32> to vector<256x4xf32>
    %cst = arith.constant 0.000000e+00 : f32
    %41 = vector.broadcast %cst : f32 to vector<256x92xf32>
    %42 = tpu.concatenate %6, %10, %14, %19, %23, %27, %32, %36, %40, %41 in 1 : vector<256x4xf32>, vector<256x4xf32>, vector<256x4xf32>, vector<256x4xf32>, vector<256x4xf32>, vector<256x4xf32>, vector<256x4xf32>, vector<256x4xf32>, vector<256x4xf32>, vector<256x92xf32> -> vector<256x128xf32>
    %c0_24 = arith.constant 0 : index
    %c0_25 = arith.constant 0 : index
    %43 = vector.load %arg3[%c0_24, %c0_25] : memref<128x128xf32, #tpu.memory_space<vmem>>, vector<128x128xf32>
    %cst_26 = arith.constant dense<0.000000e+00> : vector<256x128xf32>
    %44 = tpu.matmul %42, %43, %cst_26 {dimension_numbers = #tpu.dot_dimension_numbers<[1], [0], [0], [1], [0, 0, 1, 1], [], []>} : vector<256x128xf32>, vector<128x128xf32>, vector<256x128xf32> -> vector<256x128xf32>
    %c0_27 = arith.constant 0 : index
    %c0_28 = arith.constant 0 : index
    %45 = vector.load %arg4[%c0_27, %c0_28] : memref<1x128xf32, #tpu.memory_space<vmem>>, vector<1x128xf32>
    %46 = vector.broadcast %45 : vector<1x128xf32> to vector<256x128xf32>
    %47 = arith.addf %44, %46 : vector<256x128xf32>
    %c0_29 = arith.constant 0 : index
    %c0_30 = arith.constant 0 : index
    %c0_31 = arith.constant 0 : index
    %48 = vector.load %arg5[%c0_29, %c0_30, %c0_31] : memref<1x256x128xf32, #tpu.memory_space<vmem>>, vector<1x256x128xf32>
    %49 = vector.shape_cast %48 : vector<1x256x128xf32> to vector<256x128xf32>
    %50 = vector.shape_cast %47 : vector<256x128xf32> to vector<1x256x128xf32>
    tpu.vector_store %arg5[%c0_29, %c0_30, %c0_31], %50 {strides = array<i32>} : memref<1x256x128xf32, #tpu.memory_space<vmem>>, vector<1x256x128xf32>,
    return
  }
  func.func @transform_0(%arg0: i32, %arg1: i32) -> (i32, i32, i32, i32) {
    %c0_i32 = arith.constant 0 : i32
    %c0_i32_0 = arith.constant 0 : i32
    %c0_i32_1 = arith.constant 0 : i32
    %c0_i32_2 = arith.constant 0 : i32
    return %arg0, %c0_i32, %c0_i32_0, %c0_i32_1 : i32, i32, i32, i32
  }
  func.func @transform_1(%arg0: i32, %arg1: i32) -> (i32, i32) {
    %c0_i32 = arith.constant 0 : i32
    %c0_i32_0 = arith.constant 0 : i32
    %c0_i32_1 = arith.constant 0 : i32
    return %c0_i32, %c0_i32_0 : i32, i32
  }
  func.func @transform_2(%arg0: i32, %arg1: i32) -> (i32, i32) {
    %c0_i32 = arith.constant 0 : i32
    %c0_i32_0 = arith.constant 0 : i32
    %c0_i32_1 = arith.constant 0 : i32
    return %c0_i32, %c0_i32_0 : i32, i32
  }
  func.func @transform_3(%arg0: i32, %arg1: i32) -> (i32, i32, i32) {
    %c0_i32 = arith.constant 0 : i32
    %c0_i32_0 = arith.constant 0 : i32
    return %arg0, %arg1, %c0_i32 : i32, i32, i32
  }
}

module attributes {stable_mosaic.version = 11 : i64} {
  func.func @_phm_conv2d_kernel_scratch(%arg0: i32, %arg1: i32, %arg2: memref<1x18x18x4xf32, #tpu.memory_space<vmem>>, %arg3: memref<128x128xf32, #tpu.memory_space<vmem>>, %arg4: memref<1x128xf32, #tpu.memory_space<vmem>>, %arg5: memref<1x256x128xf32, #tpu.memory_space<vmem>>, %arg6: memref<256x128xf32, #tpu.memory_space<vmem>>) attributes {dimension_semantics = [#tpu.dimension_semantics<parallel>, #tpu.dimension_semantics<parallel>], iteration_bounds = array<i64: 2, 1>, scalar_prefetch = 0 : i64, scratch_operands = 1 : i64, tpu.core_type = #tpu.core_type<tc>, window_params = [{transform_indices = @transform_0, window_bounds = array<i64: 1, 18, 18, 4>}, {pipeline_mode = #tpu.pipeline_mode<synchronous>, transform_indices = @transform_1, window_bounds = array<i64: 128, 128>}, {pipeline_mode = #tpu.pipeline_mode<synchronous>, transform_indices = @transform_2, window_bounds = array<i64: 1, 128>}, {transform_indices = @transform_3, window_bounds = array<i64: 1, 256, 128>}]} {
    %c16_i32 = arith.constant 16 : i32
    %0 = arith.muli %arg1, %c16_i32 : i32
    %1 = tpu.assume_multiple %0, 16 : i32
    %c0_i32 = arith.constant 0 : i32
    %2 = arith.addi %1, %c0_i32 : i32
    %c0 = arith.constant 0 : index
    %3 = arith.index_cast %2 : i32 to index
    %c0_0 = arith.constant 0 : index
    %c0_1 = arith.constant 0 : index
    %4 = vector.load %arg2[%c0, %3, %c0_0, %c0_1] : memref<1x18x18x4xf32, #tpu.memory_space<vmem>>, vector<1x16x16x4xf32>
    %5 = vector.shape_cast %4 : vector<1x16x16x4xf32> to vector<16x16x4xf32>
    %6 = vector.shape_cast %5 : vector<16x16x4xf32> to vector<256x4xf32>
    %c0_2 = arith.constant 0 : index
    %7 = arith.index_cast %2 : i32 to index
    %c1 = arith.constant 1 : index
    %c0_3 = arith.constant 0 : index
    %8 = vector.load %arg2[%c0_2, %7, %c1, %c0_3] : memref<1x18x18x4xf32, #tpu.memory_space<vmem>>, vector<1x16x16x4xf32>
    %9 = vector.shape_cast %8 : vector<1x16x16x4xf32> to vector<16x16x4xf32>
    %10 = vector.shape_cast %9 : vector<16x16x4xf32> to vector<256x4xf32>
    %c0_4 = arith.constant 0 : index
    %11 = arith.index_cast %2 : i32 to index
    %c2 = arith.constant 2 : index
    %c0_5 = arith.constant 0 : index
    %12 = vector.load %arg2[%c0_4, %11, %c2, %c0_5] : memref<1x18x18x4xf32, #tpu.memory_space<vmem>>, vector<1x16x16x4xf32>
    %13 = vector.shape_cast %12 : vector<1x16x16x4xf32> to vector<16x16x4xf32>
    %14 = vector.shape_cast %13 : vector<16x16x4xf32> to vector<256x4xf32>
    %c1_i32 = arith.constant 1 : i32
    %15 = arith.addi %1, %c1_i32 : i32
    %c0_6 = arith.constant 0 : index
    %16 = arith.index_cast %15 : i32 to index
    %c0_7 = arith.constant 0 : index
    %c0_8 = arith.constant 0 : index
    %17 = vector.load %arg2[%c0_6, %16, %c0_7, %c0_8] : memref<1x18x18x4xf32, #tpu.memory_space<vmem>>, vector<1x16x16x4xf32>
    %18 = vector.shape_cast %17 : vector<1x16x16x4xf32> to vector<16x16x4xf32>
    %19 = vector.shape_cast %18 : vector<16x16x4xf32> to vector<256x4xf32>
    %c0_9 = arith.constant 0 : index
    %20 = arith.index_cast %15 : i32 to index
    %c1_10 = arith.constant 1 : index
    %c0_11 = arith.constant 0 : index
    %21 = vector.load %arg2[%c0_9, %20, %c1_10, %c0_11] : memref<1x18x18x4xf32, #tpu.memory_space<vmem>>, vector<1x16x16x4xf32>
    %22 = vector.shape_cast %21 : vector<1x16x16x4xf32> to vector<16x16x4xf32>
    %23 = vector.shape_cast %22 : vector<16x16x4xf32> to vector<256x4xf32>
    %c0_12 = arith.constant 0 : index
    %24 = arith.index_cast %15 : i32 to index
    %c2_13 = arith.constant 2 : index
    %c0_14 = arith.constant 0 : index
    %25 = vector.load %arg2[%c0_12, %24, %c2_13, %c0_14] : memref<1x18x18x4xf32, #tpu.memory_space<vmem>>, vector<1x16x16x4xf32>
    %26 = vector.shape_cast %25 : vector<1x16x16x4xf32> to vector<16x16x4xf32>
    %27 = vector.shape_cast %26 : vector<16x16x4xf32> to vector<256x4xf32>
    %c2_i32 = arith.constant 2 : i32
    %28 = arith.addi %1, %c2_i32 : i32
    %c0_15 = arith.constant 0 : index
    %29 = arith.index_cast %28 : i32 to index
    %c0_16 = arith.constant 0 : index
    %c0_17 = arith.constant 0 : index
    %30 = vector.load %arg2[%c0_15, %29, %c0_16, %c0_17] : memref<1x18x18x4xf32, #tpu.memory_space<vmem>>, vector<1x16x16x4xf32>
    %31 = vector.shape_cast %30 : vector<1x16x16x4xf32> to vector<16x16x4xf32>
    %32 = vector.shape_cast %31 : vector<16x16x4xf32> to vector<256x4xf32>
    %c0_18 = arith.constant 0 : index
    %33 = arith.index_cast %28 : i32 to index
    %c1_19 = arith.constant 1 : index
    %c0_20 = arith.constant 0 : index
    %34 = vector.load %arg2[%c0_18, %33, %c1_19, %c0_20] : memref<1x18x18x4xf32, #tpu.memory_space<vmem>>, vector<1x16x16x4xf32>
    %35 = vector.shape_cast %34 : vector<1x16x16x4xf32> to vector<16x16x4xf32>
    %36 = vector.shape_cast %35 : vector<16x16x4xf32> to vector<256x4xf32>
    %c0_21 = arith.constant 0 : index
    %37 = arith.index_cast %28 : i32 to index
    %c2_22 = arith.constant 2 : index
    %c0_23 = arith.constant 0 : index
    %38 = vector.load %arg2[%c0_21, %37, %c2_22, %c0_23] : memref<1x18x18x4xf32, #tpu.memory_space<vmem>>, vector<1x16x16x4xf32>
    %39 = vector.shape_cast %38 : vector<1x16x16x4xf32> to vector<16x16x4xf32>
    %40 = vector.shape_cast %39 : vector<16x16x4xf32> to vector<256x4xf32>
    %c0_24 = arith.constant 0 : index
    %c0_25 = arith.constant 0 : index
    %41 = vector.load %arg6[%c0_24, %c0_25] : memref<256x128xf32, #tpu.memory_space<vmem>>, vector<256x4xf32>
    tpu.vector_store %arg6[%c0_24, %c0_25], %6 {strides = array<i32>} : memref<256x128xf32, #tpu.memory_space<vmem>>, vector<256x4xf32>,
    %c0_26 = arith.constant 0 : index
    %c4 = arith.constant 4 : index
    %42 = vector.load %arg6[%c0_26, %c4] : memref<256x128xf32, #tpu.memory_space<vmem>>, vector<256x4xf32>
    tpu.vector_store %arg6[%c0_26, %c4], %10 {strides = array<i32>} : memref<256x128xf32, #tpu.memory_space<vmem>>, vector<256x4xf32>,
    %c0_27 = arith.constant 0 : index
    %c8 = arith.constant 8 : index
    %43 = vector.load %arg6[%c0_27, %c8] : memref<256x128xf32, #tpu.memory_space<vmem>>, vector<256x4xf32>
    tpu.vector_store %arg6[%c0_27, %c8], %14 {strides = array<i32>} : memref<256x128xf32, #tpu.memory_space<vmem>>, vector<256x4xf32>,
    %c0_28 = arith.constant 0 : index
    %c12 = arith.constant 12 : index
    %44 = vector.load %arg6[%c0_28, %c12] : memref<256x128xf32, #tpu.memory_space<vmem>>, vector<256x4xf32>
    tpu.vector_store %arg6[%c0_28, %c12], %19 {strides = array<i32>} : memref<256x128xf32, #tpu.memory_space<vmem>>, vector<256x4xf32>,
    %c0_29 = arith.constant 0 : index
    %c16 = arith.constant 16 : index
    %45 = vector.load %arg6[%c0_29, %c16] : memref<256x128xf32, #tpu.memory_space<vmem>>, vector<256x4xf32>
    tpu.vector_store %arg6[%c0_29, %c16], %23 {strides = array<i32>} : memref<256x128xf32, #tpu.memory_space<vmem>>, vector<256x4xf32>,
    %c0_30 = arith.constant 0 : index
    %c20 = arith.constant 20 : index
    %46 = vector.load %arg6[%c0_30, %c20] : memref<256x128xf32, #tpu.memory_space<vmem>>, vector<256x4xf32>
    tpu.vector_store %arg6[%c0_30, %c20], %27 {strides = array<i32>} : memref<256x128xf32, #tpu.memory_space<vmem>>, vector<256x4xf32>,
    %c0_31 = arith.constant 0 : index
    %c24 = arith.constant 24 : index
    %47 = vector.load %arg6[%c0_31, %c24] : memref<256x128xf32, #tpu.memory_space<vmem>>, vector<256x4xf32>
    tpu.vector_store %arg6[%c0_31, %c24], %32 {strides = array<i32>} : memref<256x128xf32, #tpu.memory_space<vmem>>, vector<256x4xf32>,
    %c0_32 = arith.constant 0 : index
    %c28 = arith.constant 28 : index
    %48 = vector.load %arg6[%c0_32, %c28] : memref<256x128xf32, #tpu.memory_space<vmem>>, vector<256x4xf32>
    tpu.vector_store %arg6[%c0_32, %c28], %36 {strides = array<i32>} : memref<256x128xf32, #tpu.memory_space<vmem>>, vector<256x4xf32>,
    %c0_33 = arith.constant 0 : index
    %c32 = arith.constant 32 : index
    %49 = vector.load %arg6[%c0_33, %c32] : memref<256x128xf32, #tpu.memory_space<vmem>>, vector<256x4xf32>
    tpu.vector_store %arg6[%c0_33, %c32], %40 {strides = array<i32>} : memref<256x128xf32, #tpu.memory_space<vmem>>, vector<256x4xf32>,
    %cst = arith.constant 0.000000e+00 : f32
    %50 = vector.broadcast %cst : f32 to vector<256x92xf32>
    %c0_34 = arith.constant 0 : index
    %c36 = arith.constant 36 : index
    %51 = vector.load %arg6[%c0_34, %c36] : memref<256x128xf32, #tpu.memory_space<vmem>>, vector<256x92xf32>
    tpu.vector_store %arg6[%c0_34, %c36], %50 {strides = array<i32>} : memref<256x128xf32, #tpu.memory_space<vmem>>, vector<256x92xf32>,
    %c0_35 = arith.constant 0 : index
    %c0_36 = arith.constant 0 : index
    %52 = vector.load %arg6[%c0_35, %c0_36] : memref<256x128xf32, #tpu.memory_space<vmem>>, vector<256x128xf32>
    %c0_37 = arith.constant 0 : index
    %c0_38 = arith.constant 0 : index
    %53 = vector.load %arg3[%c0_37, %c0_38] : memref<128x128xf32, #tpu.memory_space<vmem>>, vector<128x128xf32>
    %cst_39 = arith.constant dense<0.000000e+00> : vector<256x128xf32>
    %54 = tpu.matmul %52, %53, %cst_39 {dimension_numbers = #tpu.dot_dimension_numbers<[1], [0], [0], [1], [0, 0, 1, 1], [], []>} : vector<256x128xf32>, vector<128x128xf32>, vector<256x128xf32> -> vector<256x128xf32>
    %c0_40 = arith.constant 0 : index
    %c0_41 = arith.constant 0 : index
    %55 = vector.load %arg4[%c0_40, %c0_41] : memref<1x128xf32, #tpu.memory_space<vmem>>, vector<1x128xf32>
    %56 = vector.broadcast %55 : vector<1x128xf32> to vector<256x128xf32>
    %57 = arith.addf %54, %56 : vector<256x128xf32>
    %c0_42 = arith.constant 0 : index
    %c0_43 = arith.constant 0 : index
    %c0_44 = arith.constant 0 : index
    %58 = vector.load %arg5[%c0_42, %c0_43, %c0_44] : memref<1x256x128xf32, #tpu.memory_space<vmem>>, vector<1x256x128xf32>
    %59 = vector.shape_cast %58 : vector<1x256x128xf32> to vector<256x128xf32>
    %60 = vector.shape_cast %57 : vector<256x128xf32> to vector<1x256x128xf32>
    tpu.vector_store %arg5[%c0_42, %c0_43, %c0_44], %60 {strides = array<i32>} : memref<1x256x128xf32, #tpu.memory_space<vmem>>, vector<1x256x128xf32>,
    return
  }
  func.func @transform_0(%arg0: i32, %arg1: i32) -> (i32, i32, i32, i32) {
    %c0_i32 = arith.constant 0 : i32
    %c0_i32_0 = arith.constant 0 : i32
    %c0_i32_1 = arith.constant 0 : i32
    %c0_i32_2 = arith.constant 0 : i32
    return %arg0, %c0_i32, %c0_i32_0, %c0_i32_1 : i32, i32, i32, i32
  }
  func.func @transform_1(%arg0: i32, %arg1: i32) -> (i32, i32) {
    %c0_i32 = arith.constant 0 : i32
    %c0_i32_0 = arith.constant 0 : i32
    %c0_i32_1 = arith.constant 0 : i32
    return %c0_i32, %c0_i32_0 : i32, i32
  }
  func.func @transform_2(%arg0: i32, %arg1: i32) -> (i32, i32) {
    %c0_i32 = arith.constant 0 : i32
    %c0_i32_0 = arith.constant 0 : i32
    %c0_i32_1 = arith.constant 0 : i32
    return %c0_i32, %c0_i32_0 : i32, i32
  }
  func.func @transform_3(%arg0: i32, %arg1: i32) -> (i32, i32, i32) {
    %c0_i32 = arith.constant 0 : i32
    %c0_i32_0 = arith.constant 0 : i32
    return %arg0, %arg1, %c0_i32 : i32, i32, i32
  }
}

</mosaic_0001>

<llo_original>
// kernel: tpu_custom_call.1
$region0: #{tpu_custom_call.1}
  #allocation0 [shape = 'u32[]', space=smem, size = 0x4, offset = 0x4, fixed_abs, tag = 'smem constant byte address 0x4 - core index']
  #allocation1 [shape = 'u32[72,128]{1,0:T(1,128)}', space=vmem, size = 0x9000, scoped, tag = 'internal scratch']
  %s0 = inlined_call_operand.vmem [shape: f32[2,18,18,4], index: 0, kind: input, shape index: {}]
  %s1 = inlined_call_operand.vmem [shape: f32[128,128], index: 1, kind: input, shape index: {}]
  %s2 = inlined_call_operand.vmem [shape: f32[1,128], index: 2, kind: input, shape index: {}]
  %s3 = inlined_call_operand.hbm [shape: f32[2,256,128], index: 3, kind: output, shape index: {}]
  %s4 = sld [smem:[#allocation0]]
  $region45: #{tpu_custom_call.1} parent=0
    _
  %s6 = ssub.s32 1, %s4
  %s7 = scalar_select 0, %s6, %s4
  $region1: #{tpu_custom_call.1} parent=0
    #allocation2 [shape = 'u8[262144]{0}', space=vmem, size = 0x40000, scoped, tag = 'output window, operand 0']
    #allocation3 [shape = 's32[2]{0}', space=sflag, size = 0x8, scoped, tag = 'scoped memory for tpu_custom_call.1']
    %8 = vsyncpa [#allocation3], 0
    %s9 = scalar_lea.sflag [#allocation3], 1
    %10 = vsyncpa %s9, 0
    loop: start=0, step=1, limit=4
    $region2: #{tpu_custom_call.1} parent=1 // loop_pre_header
      _
    $region3: #{tpu_custom_call.1} parent=1 // loop_header
      %s12 = sphi 0, %s16
      %p13 = scmp.ge.s32.totalorder %s12, 4
      %s19 = sphi 0, %s31
      %s20 = sphi 0, %s27
      %s21 = sphi 0, %s19
      %s22 = sphi 0, %s20
      %s23 = sphi 0, %s21
      %s24 = sphi 0, %s22
      %s34 = sphi 0, %s36
      %s37 = sphi 0, %s34
      %s38 = sphi 0, %s37
      %s54 = sphi 0, %s38
      %s58 = sphi 0, %s58
      %s60 = sphi 0, %s58
      %s61 = sphi 0, %s60
      %s75 = sphi 0, %s61
      %s79 = sphi 0, %s79
      %s81 = sphi 0, %s79
      %s82 = sphi 0, %s81
      %s96 = sphi 0, %s82
      %s104 = sphi 0, %s106
      %s107 = sphi 0, %s104
      %s108 = sphi 0, %s107
      %s124 = sphi 0, %s108
    $region4: #{tpu_custom_call.1} parent=1 // loop_header_branch
      %15 = sbr.rel (%p13) target = $region8
    $region5: #{tpu_custom_call.1} parent=1 // loop_body
      %s17 = ssub.s32 %s12, 1
      %s18 = ssub.s32 %s12, 2
      %s25 = sadd.s32 1, %s20
      %p26 = scmp.ge.s32.totalorder %s25, 1
      %s27 = scalar_select %p26, 0, %s25
      %s28 = sadd.s32 1, %s19
      %s29 = scalar_select %p26, %s28, %s19
      %p30 = scmp.ge.s32.totalorder %s29, 2
      %s31 = scalar_select %p30, 0, %s29
      %s32 = ssub.s32 %s19, %s31
      %p33 = scmp.eq.s32.totalorder %s32, 0
      %s35 = sadd.s32 %s34, 1
      %s36 = scalar_select %p33, %s34, %s35
      %p39 = pneg %p33
      %p40 = scmp.eq.s32.totalorder %s12, 1
      %p41 = por %p39, %p40
      %p42 = scmp.ne.s32.totalorder %s34, %s37
      %p43 = scmp.eq.s32.totalorder %s12, 0
      %p44 = por %p42, %p43
      %p45 = scmp.ne.s32.totalorder %s34, %s37
      %p46 = scmp.eq.s32.totalorder %s17, 1
      %p47 = por %p45, %p46
      %p48 = scmp.ne.s32.totalorder %s37, %s38
      %p49 = scmp.eq.s32.totalorder %s17, 0
      %p50 = por %p48, %p49
      %p51 = scmp.ne.s32.totalorder %s37, %s38
      %p52 = scmp.eq.s32.totalorder %s18, 1
      %p53 = por %p51, %p52
      %p55 = scmp.ne.s32.totalorder %s38, %s54
      %p56 = scmp.eq.s32.totalorder %s18, 0
      %p57 = por %p55, %p56
      %s59 = sadd.s32 %s58, 1
      %p62 = scmp.eq.s32.totalorder %s12, 1
      %p63 = scmp.ne.s32.totalorder %s58, %s60
      %p64 = scmp.eq.s32.totalorder %s12, 0
      %p65 = por %p63, %p64
      %p66 = scmp.ne.s32.totalorder %s58, %s60
      %p67 = scmp.eq.s32.totalorder %s17, 1
      %p68 = por %p66, %p67
      %p69 = scmp.ne.s32.totalorder %s60, %s61
      %p70 = scmp.eq.s32.totalorder %s17, 0
      %p71 = por %p69, %p70
      %p72 = scmp.ne.s32.totalorder %s60, %s61
      %p73 = scmp.eq.s32.totalorder %s18, 1
      %p74 = por %p72, %p73
      %p76 = scmp.ne.s32.totalorder %s61, %s75
      %p77 = scmp.eq.s32.totalorder %s18, 0
      %p78 = por %p76, %p77
      %s80 = sadd.s32 %s79, 1
      %p83 = scmp.eq.s32.totalorder %s12, 1
      %p84 = scmp.ne.s32.totalorder %s79, %s81
      %p85 = scmp.eq.s32.totalorder %s12, 0
      %p86 = por %p84, %p85
      %p87 = scmp.ne.s32.totalorder %s79, %s81
      %p88 = scmp.eq.s32.totalorder %s17, 1
      %p89 = por %p87, %p88
      %p90 = scmp.ne.s32.totalorder %s81, %s82
      %p91 = scmp.eq.s32.totalorder %s17, 0
      %p92 = por %p90, %p91
      %p93 = scmp.ne.s32.totalorder %s81, %s82
      %p94 = scmp.eq.s32.totalorder %s18, 1
      %p95 = por %p93, %p94
      %p97 = scmp.ne.s32.totalorder %s82, %s96
      %p98 = scmp.eq.s32.totalorder %s18, 0
      %p99 = por %p97, %p98
      %s100 = ssub.s32 %s19, %s31
      %s101 = ssub.s32 %s20, %s27
      %s102 = sor.u32 %s100, %s101
      %p103 = scmp.eq.s32.totalorder %s102, 0
      %s105 = sadd.s32 %s104, 1
      %s106 = scalar_select %p103, %s104, %s105
      %p109 = pneg %p103
      %p110 = scmp.eq.s32.totalorder %s12, 1
      %p111 = por %p109, %p110
      %p112 = scmp.ne.s32.totalorder %s104, %s107
      %p113 = scmp.eq.s32.totalorder %s12, 0
      %p114 = por %p112, %p113
      %p115 = scmp.ne.s32.totalorder %s104, %s107
      %p116 = scmp.eq.s32.totalorder %s17, 1
      %p117 = por %p115, %p116
      %p118 = scmp.ne.s32.totalorder %s107, %s108
      %p119 = scmp.eq.s32.totalorder %s17, 0
      %p120 = por %p118, %p119
      %p121 = scmp.ne.s32.totalorder %s107, %s108
      %p122 = scmp.eq.s32.totalorder %s18, 1
      %p123 = por %p121, %p122
      %p125 = scmp.ne.s32.totalorder %s108, %s124
      %p126 = scmp.eq.s32.totalorder %s18, 0
      %p127 = por %p125, %p126
      %p128 = scmp.le.s32.totalorder 1, %s12
      %p129 = scmp.lt.s32.totalorder %s12, 3
      %p130 = pnand %p128, %p129
      %p131 = pneg %p130
      // Predicated region
      $region9: #{tpu_custom_call.1} parent=5 // pred_check
        _
      $region10: #{tpu_custom_call.1} parent=5 // pred_check_branch
        %133 = sbr.rel (%p130) target = $region12
      $region11: #{tpu_custom_call.1} parent=5 // pred_region
        %s134 = ssub.s32 %s12, 1
        // Predicated region
        $region13: #{tpu_custom_call.1} parent=11 // pred_check
          %p135 = pneg %p71
        $region14: #{tpu_custom_call.1} parent=11 // pred_check_branch
          %137 = sbr.rel (%p135) target = $region16
        $region15: #{tpu_custom_call.1} parent=11 // pred_region
          _
        $region16: #{tpu_custom_call.1} parent=11 // pred_fallthru
          _
        // Predicated region
        $region17: #{tpu_custom_call.1} parent=11 // pred_check
          %p138 = pneg %p92
        $region18: #{tpu_custom_call.1} parent=11 // pred_check_branch
          %140 = sbr.rel (%p138) target = $region20
        $region19: #{tpu_custom_call.1} parent=11 // pred_region
          _
        $region20: #{tpu_custom_call.1} parent=11 // pred_fallthru
          _
      $region12: #{tpu_custom_call.1} parent=5 // pred_fallthru
        _
      %p141 = scmp.lt.s32.totalorder %s12, 2
      // Predicated region
      $region21: #{tpu_custom_call.1} parent=5 // pred_check
        %p142 = pneg %p141
      $region22: #{tpu_custom_call.1} parent=5 // pred_check_branch
        %144 = sbr.rel (%p142) target = $region24
      $region23: #{tpu_custom_call.1} parent=5 // pred_region
        // Predicated region
        $region25: #{tpu_custom_call.1} parent=23 // pred_check
          %p145 = pneg %p44
        $region26: #{tpu_custom_call.1} parent=23 // pred_check_branch
          %147 = sbr.rel (%p145) target = $region28
        $region27: #{tpu_custom_call.1} parent=23 // pred_region
          %p148 = scmp.lt.s32.totalorder %s19, 1
          %s149 = scalar_select %p148, %s19, 1
          %s150 = smul.addr %s149, 54
          %s151 = smul.addr %s150, 8
          %s152 = scalar_lea.vmem %s0, %s151
        $region28: #{tpu_custom_call.1} parent=23 // pred_fallthru
          _
      $region24: #{tpu_custom_call.1} parent=5 // pred_fallthru
        _
      %p153 = scmp.le.s32.totalorder 1, %s12
      %p154 = scmp.lt.s32.totalorder %s12, 3
      %p155 = pnand %p153, %p154
      %p156 = pneg %p155
      // Predicated region
      $region29: #{tpu_custom_call.1} parent=5 // pred_check
        _
      $region30: #{tpu_custom_call.1} parent=5 // pred_check_branch
        %158 = sbr.rel (%p155) target = $region32
      $region31: #{tpu_custom_call.1} parent=5 // pred_region
        %s159 = ssub.s32 %s12, 1
        %p160 = scmp.lt.s32.totalorder %s21, 1
        %s161 = scalar_select %p160, %s21, 1
        %s162 = smul.addr %s161, 54
        %s163 = smul.addr %s162, 8
        %s164 = scalar_lea.vmem %s0, %s163
        %p165 = pneg %p50
        %p166 = pneg %p47
        %p167 = pneg %p71
        %p168 = pneg %p68
        %p169 = pneg %p92
        %p170 = pneg %p89
        %p171 = pneg %p120
        %p172 = pneg %p117
        %s173 = sand.u32 %s107, 1
        %s174 = scalar_lea.sflag [#allocation3], %s173
        %s175 = sand.u32 %s107, 1
        %s176 = smul.addr %s175, 256
        %s177 = scalar_lea.vmem [#allocation2], %s176
        %p178 = scmp.lt.s32.totalorder %s21, 1
        %s179 = scalar_select %p178, %s21, 1
        %s180 = smul.addr %s179, 54
        %s181 = smul.addr %s180, 8
        %s182 = scalar_lea.vmem %s0, %s181
        %s183 = smul.u32 32, %s22
        %s184 = smul.u32 %s22, 16
        %s185 = smul.u32 %s184, 24
        %s186 = scalar_lea.vmem %s182, %s185
        %v187 = vld [vmem:[%s186] sm:$0xff]
        %v188 = vld [vmem:[%s186 + $0x8] sm:$0xff]
        %v189 = vld [vmem:[%s186 + $0x18] sm:$0xff]
        %v190 = vld [vmem:[%s186 + $0x20] sm:$0xff]
        %v191 = vld [vmem:[%s186 + $0x30] sm:$0xff]
        %v192 = vld [vmem:[%s186 + $0x38] sm:$0xff]
        %v193 = vld [vmem:[%s186 + $0x48] sm:$0xff]
        %v194 = vld [vmem:[%s186 + $0x50] sm:$0xff]
        %v195 = vld [vmem:[%s186 + $0x60] sm:$0xff]
        %v196 = vld [vmem:[%s186 + $0x68] sm:$0xff]
        %v197 = vld [vmem:[%s186 + $0x78] sm:$0xff]
        %v198 = vld [vmem:[%s186 + $0x80] sm:$0xff]
        %v199 = vld [vmem:[%s186 + $0x90] sm:$0xff]
        %v200 = vld [vmem:[%s186 + $0x98] sm:$0xff]
        %v201 = vld [vmem:[%s186 + $0xa8] sm:$0xff]
        %v202 = vld [vmem:[%s186 + $0xb0] sm:$0xff]
        %v203 = vld [vmem:[%s186 + $0xc0] sm:$0xff]
        %v204 = vld [vmem:[%s186 + $0xc8] sm:$0xff]
        %v205 = vld [vmem:[%s186 + $0xd8] sm:$0xff]
        %v206 = vld [vmem:[%s186 + $0xe0] sm:$0xff]
        %v207 = vld [vmem:[%s186 + $0xf0] sm:$0xff]
        %v208 = vld [vmem:[%s186 + $0xf8] sm:$0xff]
        %v209 = vld [vmem:[%s186 + $0x108] sm:$0xff]
        %v210 = vld [vmem:[%s186 + $0x110] sm:$0xff]
        %v211 = vld [vmem:[%s186 + $0x120] sm:$0xff]
        %v212 = vld [vmem:[%s186 + $0x128] sm:$0xff]
        %v213 = vld [vmem:[%s186 + $0x138] sm:$0xff]
        %v214 = vld [vmem:[%s186 + $0x140] sm:$0xff]
        %v215 = vld [vmem:[%s186 + $0x150] sm:$0xff]
        %v216 = vld [vmem:[%s186 + $0x158] sm:$0xff]
        %v217 = vld [vmem:[%s186 + $0x168] sm:$0xff]
        %v218 = vld [vmem:[%s186 + $0x170] sm:$0xff]
        %v219 = vld [vmem:[%s186 + $0x1] sm:$0xff]
        %v220 = vld [vmem:[%s186 + $0x9] sm:$0xff]
        %v221 = vld [vmem:[%s186 + $0x19] sm:$0xff]
        %v222 = vld [vmem:[%s186 + $0x21] sm:$0xff]
        %v223 = vld [vmem:[%s186 + $0x31] sm:$0xff]
        %v224 = vld [vmem:[%s186 + $0x39] sm:$0xff]
        %v225 = vld [vmem:[%s186 + $0x49] sm:$0xff]
        %v226 = vld [vmem:[%s186 + $0x51] sm:$0xff]
        %v227 = vld [vmem:[%s186 + $0x61] sm:$0xff]
        %v228 = vld [vmem:[%s186 + $0x69] sm:$0xff]
        %v229 = vld [vmem:[%s186 + $0x79] sm:$0xff]
        %v230 = vld [vmem:[%s186 + $0x81] sm:$0xff]
        %v231 = vld [vmem:[%s186 + $0x91] sm:$0xff]
        %v232 = vld [vmem:[%s186 + $0x99] sm:$0xff]
        %v233 = vld [vmem:[%s186 + $0xa9] sm:$0xff]
        %v234 = vld [vmem:[%s186 + $0xb1] sm:$0xff]
        %v235 = vld [vmem:[%s186 + $0xc1] sm:$0xff]
        %v236 = vld [vmem:[%s186 + $0xc9] sm:$0xff]
        %v237 = vld [vmem:[%s186 + $0xd9] sm:$0xff]
        %v238 = vld [vmem:[%s186 + $0xe1] sm:$0xff]
        %v239 = vld [vmem:[%s186 + $0xf1] sm:$0xff]
        %v240 = vld [vmem:[%s186 + $0xf9] sm:$0xff]
        %v241 = vld [vmem:[%s186 + $0x109] sm:$0xff]
        %v242 = vld [vmem:[%s186 + $0x111] sm:$0xff]
        %v243 = vld [vmem:[%s186 + $0x121] sm:$0xff]
        %v244 = vld [vmem:[%s186 + $0x129] sm:$0xff]
        %v245 = vld [vmem:[%s186 + $0x139] sm:$0xff]
        %v246 = vld [vmem:[%s186 + $0x141] sm:$0xff]
        %v247 = vld [vmem:[%s186 + $0x151] sm:$0xff]
        %v248 = vld [vmem:[%s186 + $0x159] sm:$0xff]
        %v249 = vld [vmem:[%s186 + $0x169] sm:$0xff]
        %v250 = vld [vmem:[%s186 + $0x171] sm:$0xff]
        %v251 = vld [vmem:[%s186 + $0x2] sm:$0xff]
        %v252 = vld [vmem:[%s186 + $0xa] sm:$0xff]
        %v253 = vld [vmem:[%s186 + $0x1a] sm:$0xff]
        %v254 = vld [vmem:[%s186 + $0x22] sm:$0xff]
        %v255 = vld [vmem:[%s186 + $0x32] sm:$0xff]
        %v256 = vld [vmem:[%s186 + $0x3a] sm:$0xff]
        %v257 = vld [vmem:[%s186 + $0x4a] sm:$0xff]
        %v258 = vld [vmem:[%s186 + $0x52] sm:$0xff]
        %v259 = vld [vmem:[%s186 + $0x62] sm:$0xff]
        %v260 = vld [vmem:[%s186 + $0x6a] sm:$0xff]
        %v261 = vld [vmem:[%s186 + $0x7a] sm:$0xff]
        %v262 = vld [vmem:[%s186 + $0x82] sm:$0xff]
        %v263 = vld [vmem:[%s186 + $0x92] sm:$0xff]
        %v264 = vld [vmem:[%s186 + $0x9a] sm:$0xff]
        %v265 = vld [vmem:[%s186 + $0xaa] sm:$0xff]
        %v266 = vld [vmem:[%s186 + $0xb2] sm:$0xff]
        %v267 = vld [vmem:[%s186 + $0xc2] sm:$0xff]
        %v268 = vld [vmem:[%s186 + $0xca] sm:$0xff]
        %v269 = vld [vmem:[%s186 + $0xda] sm:$0xff]
        %v270 = vld [vmem:[%s186 + $0xe2] sm:$0xff]
        %v271 = vld [vmem:[%s186 + $0xf2] sm:$0xff]
        %v272 = vld [vmem:[%s186 + $0xfa] sm:$0xff]
        %v273 = vld [vmem:[%s186 + $0x10a] sm:$0xff]
        %v274 = vld [vmem:[%s186 + $0x112] sm:$0xff]
        %v275 = vld [vmem:[%s186 + $0x122] sm:$0xff]
        %v276 = vld [vmem:[%s186 + $0x12a] sm:$0xff]
        %v277 = vld [vmem:[%s186 + $0x13a] sm:$0xff]
        %v278 = vld [vmem:[%s186 + $0x142] sm:$0xff]
        %v279 = vld [vmem:[%s186 + $0x152] sm:$0xff]
        %v280 = vld [vmem:[%s186 + $0x15a] sm:$0xff]
        %v281 = vld [vmem:[%s186 + $0x16a] sm:$0xff]
        %v282 = vld [vmem:[%s186 + $0x172] sm:$0xff]
        %s283 = sadd.s32 %s184, 1
        %s284 = smul.u32 %s283, 24
        %s285 = scalar_lea.vmem %s182, %s284
        %v286 = vld [vmem:[%s285] sm:$0xff]
        %v287 = vld [vmem:[%s285 + $0x8] sm:$0xff]
        %v288 = vld [vmem:[%s285 + $0x18] sm:$0xff]
        %v289 = vld [vmem:[%s285 + $0x20] sm:$0xff]
        %v290 = vld [vmem:[%s285 + $0x30] sm:$0xff]
        %v291 = vld [vmem:[%s285 + $0x38] sm:$0xff]
        %v292 = vld [vmem:[%s285 + $0x48] sm:$0xff]
        %v293 = vld [vmem:[%s285 + $0x50] sm:$0xff]
        %v294 = vld [vmem:[%s285 + $0x60] sm:$0xff]
        %v295 = vld [vmem:[%s285 + $0x68] sm:$0xff]
        %v296 = vld [vmem:[%s285 + $0x78] sm:$0xff]
        %v297 = vld [vmem:[%s285 + $0x80] sm:$0xff]
        %v298 = vld [vmem:[%s285 + $0x90] sm:$0xff]
        %v299 = vld [vmem:[%s285 + $0x98] sm:$0xff]
        %v300 = vld [vmem:[%s285 + $0xa8] sm:$0xff]
        %v301 = vld [vmem:[%s285 + $0xb0] sm:$0xff]
        %v302 = vld [vmem:[%s285 + $0xc0] sm:$0xff]
        %v303 = vld [vmem:[%s285 + $0xc8] sm:$0xff]
        %v304 = vld [vmem:[%s285 + $0xd8] sm:$0xff]
        %v305 = vld [vmem:[%s285 + $0xe0] sm:$0xff]
        %v306 = vld [vmem:[%s285 + $0xf0] sm:$0xff]
        %v307 = vld [vmem:[%s285 + $0xf8] sm:$0xff]
        %v308 = vld [vmem:[%s285 + $0x108] sm:$0xff]
        %v309 = vld [vmem:[%s285 + $0x110] sm:$0xff]
        %v310 = vld [vmem:[%s285 + $0x120] sm:$0xff]
        %v311 = vld [vmem:[%s285 + $0x128] sm:$0xff]
        %v312 = vld [vmem:[%s285 + $0x138] sm:$0xff]
        %v313 = vld [vmem:[%s285 + $0x140] sm:$0xff]
        %v314 = vld [vmem:[%s285 + $0x150] sm:$0xff]
        %v315 = vld [vmem:[%s285 + $0x158] sm:$0xff]
        %v316 = vld [vmem:[%s285 + $0x168] sm:$0xff]
        %v317 = vld [vmem:[%s285 + $0x170] sm:$0xff]
        %v318 = vld [vmem:[%s285 + $0x1] sm:$0xff]
        %v319 = vld [vmem:[%s285 + $0x9] sm:$0xff]
        %v320 = vld [vmem:[%s285 + $0x19] sm:$0xff]
        %v321 = vld [vmem:[%s285 + $0x21] sm:$0xff]
        %v322 = vld [vmem:[%s285 + $0x31] sm:$0xff]
        %v323 = vld [vmem:[%s285 + $0x39] sm:$0xff]
        %v324 = vld [vmem:[%s285 + $0x49] sm:$0xff]
        %v325 = vld [vmem:[%s285 + $0x51] sm:$0xff]
        %v326 = vld [vmem:[%s285 + $0x61] sm:$0xff]
        %v327 = vld [vmem:[%s285 + $0x69] sm:$0xff]
        %v328 = vld [vmem:[%s285 + $0x79] sm:$0xff]
        %v329 = vld [vmem:[%s285 + $0x81] sm:$0xff]
        %v330 = vld [vmem:[%s285 + $0x91] sm:$0xff]
        %v331 = vld [vmem:[%s285 + $0x99] sm:$0xff]
        %v332 = vld [vmem:[%s285 + $0xa9] sm:$0xff]
        %v333 = vld [vmem:[%s285 + $0xb1] sm:$0xff]
        %v334 = vld [vmem:[%s285 + $0xc1] sm:$0xff]
        %v335 = vld [vmem:[%s285 + $0xc9] sm:$0xff]
        %v336 = vld [vmem:[%s285 + $0xd9] sm:$0xff]
        %v337 = vld [vmem:[%s285 + $0xe1] sm:$0xff]
        %v338 = vld [vmem:[%s285 + $0xf1] sm:$0xff]
        %v339 = vld [vmem:[%s285 + $0xf9] sm:$0xff]
        %v340 = vld [vmem:[%s285 + $0x109] sm:$0xff]
        %v341 = vld [vmem:[%s285 + $0x111] sm:$0xff]
        %v342 = vld [vmem:[%s285 + $0x121] sm:$0xff]
        %v343 = vld [vmem:[%s285 + $0x129] sm:$0xff]
        %v344 = vld [vmem:[%s285 + $0x139] sm:$0xff]
        %v345 = vld [vmem:[%s285 + $0x141] sm:$0xff]
        %v346 = vld [vmem:[%s285 + $0x151] sm:$0xff]
        %v347 = vld [vmem:[%s285 + $0x159] sm:$0xff]
        %v348 = vld [vmem:[%s285 + $0x169] sm:$0xff]
        %v349 = vld [vmem:[%s285 + $0x171] sm:$0xff]
        %v350 = vld [vmem:[%s285 + $0x2] sm:$0xff]
        %v351 = vld [vmem:[%s285 + $0xa] sm:$0xff]
        %v352 = vld [vmem:[%s285 + $0x1a] sm:$0xff]
        %v353 = vld [vmem:[%s285 + $0x22] sm:$0xff]
        %v354 = vld [vmem:[%s285 + $0x32] sm:$0xff]
        %v355 = vld [vmem:[%s285 + $0x3a] sm:$0xff]
        %v356 = vld [vmem:[%s285 + $0x4a] sm:$0xff]
        %v357 = vld [vmem:[%s285 + $0x52] sm:$0xff]
        %v358 = vld [vmem:[%s285 + $0x62] sm:$0xff]
        %v359 = vld [vmem:[%s285 + $0x6a] sm:$0xff]
        %v360 = vld [vmem:[%s285 + $0x7a] sm:$0xff]
        %v361 = vld [vmem:[%s285 + $0x82] sm:$0xff]
        %v362 = vld [vmem:[%s285 + $0x92] sm:$0xff]
        %v363 = vld [vmem:[%s285 + $0x9a] sm:$0xff]
        %v364 = vld [vmem:[%s285 + $0xaa] sm:$0xff]
        %v365 = vld [vmem:[%s285 + $0xb2] sm:$0xff]
        %v366 = vld [vmem:[%s285 + $0xc2] sm:$0xff]
        %v367 = vld [vmem:[%s285 + $0xca] sm:$0xff]
        %v368 = vld [vmem:[%s285 + $0xda] sm:$0xff]
        %v369 = vld [vmem:[%s285 + $0xe2] sm:$0xff]
        %v370 = vld [vmem:[%s285 + $0xf2] sm:$0xff]
        %v371 = vld [vmem:[%s285 + $0xfa] sm:$0xff]
        %v372 = vld [vmem:[%s285 + $0x10a] sm:$0xff]
        %v373 = vld [vmem:[%s285 + $0x112] sm:$0xff]
        %v374 = vld [vmem:[%s285 + $0x122] sm:$0xff]
        %v375 = vld [vmem:[%s285 + $0x12a] sm:$0xff]
        %v376 = vld [vmem:[%s285 + $0x13a] sm:$0xff]
        %v377 = vld [vmem:[%s285 + $0x142] sm:$0xff]
        %v378 = vld [vmem:[%s285 + $0x152] sm:$0xff]
        %v379 = vld [vmem:[%s285 + $0x15a] sm:$0xff]
        %v380 = vld [vmem:[%s285 + $0x16a] sm:$0xff]
        %v381 = vld [vmem:[%s285 + $0x172] sm:$0xff]
        %s382 = sadd.s32 %s184, 2
        %s383 = smul.u32 %s382, 24
        %s384 = scalar_lea.vmem %s182, %s383
        %v385 = vld [vmem:[%s384] sm:$0xff]
        %v386 = vld [vmem:[%s384 + $0x8] sm:$0xff]
        %v387 = vld [vmem:[%s384 + $0x18] sm:$0xff]
        %v388 = vld [vmem:[%s384 + $0x20] sm:$0xff]
        %v389 = vld [vmem:[%s384 + $0x30] sm:$0xff]
        %v390 = vld [vmem:[%s384 + $0x38] sm:$0xff]
        %v391 = vld [vmem:[%s384 + $0x48] sm:$0xff]
        %v392 = vld [vmem:[%s384 + $0x50] sm:$0xff]
        %v393 = vld [vmem:[%s384 + $0x60] sm:$0xff]
        %v394 = vld [vmem:[%s384 + $0x68] sm:$0xff]
        %v395 = vld [vmem:[%s384 + $0x78] sm:$0xff]
        %v396 = vld [vmem:[%s384 + $0x80] sm:$0xff]
        %v397 = vld [vmem:[%s384 + $0x90] sm:$0xff]
        %v398 = vld [vmem:[%s384 + $0x98] sm:$0xff]
        %v399 = vld [vmem:[%s384 + $0xa8] sm:$0xff]
        %v400 = vld [vmem:[%s384 + $0xb0] sm:$0xff]
        %v401 = vld [vmem:[%s384 + $0xc0] sm:$0xff]
        %v402 = vld [vmem:[%s384 + $0xc8] sm:$0xff]
        %v403 = vld [vmem:[%s384 + $0xd8] sm:$0xff]
        %v404 = vld [vmem:[%s384 + $0xe0] sm:$0xff]
        %v405 = vld [vmem:[%s384 + $0xf0] sm:$0xff]
        %v406 = vld [vmem:[%s384 + $0xf8] sm:$0xff]
        %v407 = vld [vmem:[%s384 + $0x108] sm:$0xff]
        %v408 = vld [vmem:[%s384 + $0x110] sm:$0xff]
        %v409 = vld [vmem:[%s384 + $0x120] sm:$0xff]
        %v410 = vld [vmem:[%s384 + $0x128] sm:$0xff]
        %v411 = vld [vmem:[%s384 + $0x138] sm:$0xff]
        %v412 = vld [vmem:[%s384 + $0x140] sm:$0xff]
        %v413 = vld [vmem:[%s384 + $0x150] sm:$0xff]
        %v414 = vld [vmem:[%s384 + $0x158] sm:$0xff]
        %v415 = vld [vmem:[%s384 + $0x168] sm:$0xff]
        %v416 = vld [vmem:[%s384 + $0x170] sm:$0xff]
        %v417 = vld [vmem:[%s384 + $0x1] sm:$0xff]
        %v418 = vld [vmem:[%s384 + $0x9] sm:$0xff]
        %v419 = vld [vmem:[%s384 + $0x19] sm:$0xff]
        %v420 = vld [vmem:[%s384 + $0x21] sm:$0xff]
        %v421 = vld [vmem:[%s384 + $0x31] sm:$0xff]
        %v422 = vld [vmem:[%s384 + $0x39] sm:$0xff]
        %v423 = vld [vmem:[%s384 + $0x49] sm:$0xff]
        %v424 = vld [vmem:[%s384 + $0x51] sm:$0xff]
        %v425 = vld [vmem:[%s384 + $0x61] sm:$0xff]
        %v426 = vld [vmem:[%s384 + $0x69] sm:$0xff]
        %v427 = vld [vmem:[%s384 + $0x79] sm:$0xff]
        %v428 = vld [vmem:[%s384 + $0x81] sm:$0xff]
        %v429 = vld [vmem:[%s384 + $0x91] sm:$0xff]
        %v430 = vld [vmem:[%s384 + $0x99] sm:$0xff]
        %v431 = vld [vmem:[%s384 + $0xa9] sm:$0xff]
        %v432 = vld [vmem:[%s384 + $0xb1] sm:$0xff]
        %v433 = vld [vmem:[%s384 + $0xc1] sm:$0xff]
        %v434 = vld [vmem:[%s384 + $0xc9] sm:$0xff]
        %v435 = vld [vmem:[%s384 + $0xd9] sm:$0xff]
        %v436 = vld [vmem:[%s384 + $0xe1] sm:$0xff]
        %v437 = vld [vmem:[%s384 + $0xf1] sm:$0xff]
        %v438 = vld [vmem:[%s384 + $0xf9] sm:$0xff]
        %v439 = vld [vmem:[%s384 + $0x109] sm:$0xff]
        %v440 = vld [vmem:[%s384 + $0x111] sm:$0xff]
        %v441 = vld [vmem:[%s384 + $0x121] sm:$0xff]
        %v442 = vld [vmem:[%s384 + $0x129] sm:$0xff]
        %v443 = vld [vmem:[%s384 + $0x139] sm:$0xff]
        %v444 = vld [vmem:[%s384 + $0x141] sm:$0xff]
        %v445 = vld [vmem:[%s384 + $0x151] sm:$0xff]
        %v446 = vld [vmem:[%s384 + $0x159] sm:$0xff]
        %v447 = vld [vmem:[%s384 + $0x169] sm:$0xff]
        %v448 = vld [vmem:[%s384 + $0x171] sm:$0xff]
        %v449 = vld [vmem:[%s384 + $0x2] sm:$0xff]
        %v450 = vld [vmem:[%s384 + $0xa] sm:$0xff]
        %v451 = vld [vmem:[%s384 + $0x1a] sm:$0xff]
        %v452 = vld [vmem:[%s384 + $0x22] sm:$0xff]
        %v453 = vld [vmem:[%s384 + $0x32] sm:$0xff]
        %v454 = vld [vmem:[%s384 + $0x3a] sm:$0xff]
        %v455 = vld [vmem:[%s384 + $0x4a] sm:$0xff]
        %v456 = vld [vmem:[%s384 + $0x52] sm:$0xff]
        %v457 = vld [vmem:[%s384 + $0x62] sm:$0xff]
        %v458 = vld [vmem:[%s384 + $0x6a] sm:$0xff]
        %v459 = vld [vmem:[%s384 + $0x7a] sm:$0xff]
        %v460 = vld [vmem:[%s384 + $0x82] sm:$0xff]
        %v461 = vld [vmem:[%s384 + $0x92] sm:$0xff]
        %v462 = vld [vmem:[%s384 + $0x9a] sm:$0xff]
        %v463 = vld [vmem:[%s384 + $0xaa] sm:$0xff]
        %v464 = vld [vmem:[%s384 + $0xb2] sm:$0xff]
        %v465 = vld [vmem:[%s384 + $0xc2] sm:$0xff]
        %v466 = vld [vmem:[%s384 + $0xca] sm:$0xff]
        %v467 = vld [vmem:[%s384 + $0xda] sm:$0xff]
        %v468 = vld [vmem:[%s384 + $0xe2] sm:$0xff]
        %v469 = vld [vmem:[%s384 + $0xf2] sm:$0xff]
        %v470 = vld [vmem:[%s384 + $0xfa] sm:$0xff]
        %v471 = vld [vmem:[%s384 + $0x10a] sm:$0xff]
        %v472 = vld [vmem:[%s384 + $0x112] sm:$0xff]
        %v473 = vld [vmem:[%s384 + $0x122] sm:$0xff]
        %v474 = vld [vmem:[%s384 + $0x12a] sm:$0xff]
        %v475 = vld [vmem:[%s384 + $0x13a] sm:$0xff]
        %v476 = vld [vmem:[%s384 + $0x142] sm:$0xff]
        %v477 = vld [vmem:[%s384 + $0x152] sm:$0xff]
        %v478 = vld [vmem:[%s384 + $0x15a] sm:$0xff]
        %v479 = vld [vmem:[%s384 + $0x16a] sm:$0xff]
        %v480 = vld [vmem:[%s384 + $0x172] sm:$0xff]
        %513 = vrot.lane.b32.xlu0 %v219, 4
        %v514 = vpop.permute.xlu0 %513
        %515 = vrot.lane.b32.xlu0 %v220, 4
        %v516 = vpop.permute.xlu0 %515
        %517 = vrot.lane.b32.xlu0 %v221, 4
        %v518 = vpop.permute.xlu0 %517
        %519 = vrot.lane.b32.xlu0 %v222, 4
        %v520 = vpop.permute.xlu0 %519
        %521 = vrot.lane.b32.xlu0 %v223, 4
        %v522 = vpop.permute.xlu0 %521
        %523 = vrot.lane.b32.xlu0 %v224, 4
        %v524 = vpop.permute.xlu0 %523
        %525 = vrot.lane.b32.xlu0 %v225, 4
        %v526 = vpop.permute.xlu0 %525
        %527 = vrot.lane.b32.xlu0 %v226, 4
        %v528 = vpop.permute.xlu0 %527
        %529 = vrot.lane.b32.xlu0 %v227, 4
        %v530 = vpop.permute.xlu0 %529
        %531 = vrot.lane.b32.xlu0 %v228, 4
        %v532 = vpop.permute.xlu0 %531
        %533 = vrot.lane.b32.xlu0 %v229, 4
        %v534 = vpop.permute.xlu0 %533
        %535 = vrot.lane.b32.xlu0 %v230, 4
        %v536 = vpop.permute.xlu0 %535
        %537 = vrot.lane.b32.xlu0 %v231, 4
        %v538 = vpop.permute.xlu0 %537
        %539 = vrot.lane.b32.xlu0 %v232, 4
        %v540 = vpop.permute.xlu0 %539
        %541 = vrot.lane.b32.xlu0 %v233, 4
        %v542 = vpop.permute.xlu0 %541
        %543 = vrot.lane.b32.xlu0 %v234, 4
        %v544 = vpop.permute.xlu0 %543
        %545 = vrot.lane.b32.xlu0 %v235, 4
        %v546 = vpop.permute.xlu0 %545
        %547 = vrot.lane.b32.xlu0 %v236, 4
        %v548 = vpop.permute.xlu0 %547
        %549 = vrot.lane.b32.xlu0 %v237, 4
        %v550 = vpop.permute.xlu0 %549
        %551 = vrot.lane.b32.xlu0 %v238, 4
        %v552 = vpop.permute.xlu0 %551
        %553 = vrot.lane.b32.xlu0 %v239, 4
        %v554 = vpop.permute.xlu0 %553
        %555 = vrot.lane.b32.xlu0 %v240, 4
        %v556 = vpop.permute.xlu0 %555
        %557 = vrot.lane.b32.xlu0 %v241, 4
        %v558 = vpop.permute.xlu0 %557
        %559 = vrot.lane.b32.xlu0 %v242, 4
        %v560 = vpop.permute.xlu0 %559
        %561 = vrot.lane.b32.xlu0 %v243, 4
        %v562 = vpop.permute.xlu0 %561
        %563 = vrot.lane.b32.xlu0 %v244, 4
        %v564 = vpop.permute.xlu0 %563
        %565 = vrot.lane.b32.xlu0 %v245, 4
        %v566 = vpop.permute.xlu0 %565
        %567 = vrot.lane.b32.xlu0 %v246, 4
        %v568 = vpop.permute.xlu0 %567
        %569 = vrot.lane.b32.xlu0 %v247, 4
        %v570 = vpop.permute.xlu0 %569
        %571 = vrot.lane.b32.xlu0 %v248, 4
        %v572 = vpop.permute.xlu0 %571
        %573 = vrot.lane.b32.xlu0 %v249, 4
        %v574 = vpop.permute.xlu0 %573
        %575 = vrot.lane.b32.xlu0 %v250, 4
        %v576 = vpop.permute.xlu0 %575
        %641 = vrot.lane.b32.xlu0 %v251, 8
        %v642 = vpop.permute.xlu0 %641
        %643 = vrot.lane.b32.xlu0 %v252, 8
        %v644 = vpop.permute.xlu0 %643
        %645 = vrot.lane.b32.xlu0 %v253, 8
        %v646 = vpop.permute.xlu0 %645
        %647 = vrot.lane.b32.xlu0 %v254, 8
        %v648 = vpop.permute.xlu0 %647
        %649 = vrot.lane.b32.xlu0 %v255, 8
        %v650 = vpop.permute.xlu0 %649
        %651 = vrot.lane.b32.xlu0 %v256, 8
        %v652 = vpop.permute.xlu0 %651
        %653 = vrot.lane.b32.xlu0 %v257, 8
        %v654 = vpop.permute.xlu0 %653
        %655 = vrot.lane.b32.xlu0 %v258, 8
        %v656 = vpop.permute.xlu0 %655
        %657 = vrot.lane.b32.xlu0 %v259, 8
        %v658 = vpop.permute.xlu0 %657
        %659 = vrot.lane.b32.xlu0 %v260, 8
        %v660 = vpop.permute.xlu0 %659
        %661 = vrot.lane.b32.xlu0 %v261, 8
        %v662 = vpop.permute.xlu0 %661
        %663 = vrot.lane.b32.xlu0 %v262, 8
        %v664 = vpop.permute.xlu0 %663
        %665 = vrot.lane.b32.xlu0 %v263, 8
        %v666 = vpop.permute.xlu0 %665
        %667 = vrot.lane.b32.xlu0 %v264, 8
        %v668 = vpop.permute.xlu0 %667
        %669 = vrot.lane.b32.xlu0 %v265, 8
        %v670 = vpop.permute.xlu0 %669
        %671 = vrot.lane.b32.xlu0 %v266, 8
        %v672 = vpop.permute.xlu0 %671
        %673 = vrot.lane.b32.xlu0 %v267, 8
        %v674 = vpop.permute.xlu0 %673
        %675 = vrot.lane.b32.xlu0 %v268, 8
        %v676 = vpop.permute.xlu0 %675
        %677 = vrot.lane.b32.xlu0 %v269, 8
        %v678 = vpop.permute.xlu0 %677
        %679 = vrot.lane.b32.xlu0 %v270, 8
        %v680 = vpop.permute.xlu0 %679
        %681 = vrot.lane.b32.xlu0 %v271, 8
        %v682 = vpop.permute.xlu0 %681
        %683 = vrot.lane.b32.xlu0 %v272, 8
        %v684 = vpop.permute.xlu0 %683
        %685 = vrot.lane.b32.xlu0 %v273, 8
        %v686 = vpop.permute.xlu0 %685
        %687 = vrot.lane.b32.xlu0 %v274, 8
        %v688 = vpop.permute.xlu0 %687
        %689 = vrot.lane.b32.xlu0 %v275, 8
        %v690 = vpop.permute.xlu0 %689
        %691 = vrot.lane.b32.xlu0 %v276, 8
        %v692 = vpop.permute.xlu0 %691
        %693 = vrot.lane.b32.xlu0 %v277, 8
        %v694 = vpop.permute.xlu0 %693
        %695 = vrot.lane.b32.xlu0 %v278, 8
        %v696 = vpop.permute.xlu0 %695
        %697 = vrot.lane.b32.xlu0 %v279, 8
        %v698 = vpop.permute.xlu0 %697
        %699 = vrot.lane.b32.xlu0 %v280, 8
        %v700 = vpop.permute.xlu0 %699
        %701 = vrot.lane.b32.xlu0 %v281, 8
        %v702 = vpop.permute.xlu0 %701
        %703 = vrot.lane.b32.xlu0 %v282, 8
        %v704 = vpop.permute.xlu0 %703
        %769 = vrot.lane.b32.xlu0 %v286, 12
        %v770 = vpop.permute.xlu0 %769
        %771 = vrot.lane.b32.xlu0 %v287, 12
        %v772 = vpop.permute.xlu0 %771
        %773 = vrot.lane.b32.xlu0 %v288, 12
        %v774 = vpop.permute.xlu0 %773
        %775 = vrot.lane.b32.xlu0 %v289, 12
        %v776 = vpop.permute.xlu0 %775
        %777 = vrot.lane.b32.xlu0 %v290, 12
        %v778 = vpop.permute.xlu0 %777
        %779 = vrot.lane.b32.xlu0 %v291, 12
        %v780 = vpop.permute.xlu0 %779
        %781 = vrot.lane.b32.xlu0 %v292, 12
        %v782 = vpop.permute.xlu0 %781
        %783 = vrot.lane.b32.xlu0 %v293, 12
        %v784 = vpop.permute.xlu0 %783
        %785 = vrot.lane.b32.xlu0 %v294, 12
        %v786 = vpop.permute.xlu0 %785
        %787 = vrot.lane.b32.xlu0 %v295, 12
        %v788 = vpop.permute.xlu0 %787
        %789 = vrot.lane.b32.xlu0 %v296, 12
        %v790 = vpop.permute.xlu0 %789
        %791 = vrot.lane.b32.xlu0 %v297, 12
        %v792 = vpop.permute.xlu0 %791
        %793 = vrot.lane.b32.xlu0 %v298, 12
        %v794 = vpop.permute.xlu0 %793
        %795 = vrot.lane.b32.xlu0 %v299, 12
        %v796 = vpop.permute.xlu0 %795
        %797 = vrot.lane.b32.xlu0 %v300, 12
        %v798 = vpop.permute.xlu0 %797
        %799 = vrot.lane.b32.xlu0 %v301, 12
        %v800 = vpop.permute.xlu0 %799
        %801 = vrot.lane.b32.xlu0 %v302, 12
        %v802 = vpop.permute.xlu0 %801
        %803 = vrot.lane.b32.xlu0 %v303, 12
        %v804 = vpop.permute.xlu0 %803
        %805 = vrot.lane.b32.xlu0 %v304, 12
        %v806 = vpop.permute.xlu0 %805
        %807 = vrot.lane.b32.xlu0 %v305, 12
        %v808 = vpop.permute.xlu0 %807
        %809 = vrot.lane.b32.xlu0 %v306, 12
        %v810 = vpop.permute.xlu0 %809
        %811 = vrot.lane.b32.xlu0 %v307, 12
        %v812 = vpop.permute.xlu0 %811
        %813 = vrot.lane.b32.xlu0 %v308, 12
        %v814 = vpop.permute.xlu0 %813
        %815 = vrot.lane.b32.xlu0 %v309, 12
        %v816 = vpop.permute.xlu0 %815
        %817 = vrot.lane.b32.xlu0 %v310, 12
        %v818 = vpop.permute.xlu0 %817
        %819 = vrot.lane.b32.xlu0 %v311, 12
        %v820 = vpop.permute.xlu0 %819
        %821 = vrot.lane.b32.xlu0 %v312, 12
        %v822 = vpop.permute.xlu0 %821
        %823 = vrot.lane.b32.xlu0 %v313, 12
        %v824 = vpop.permute.xlu0 %823
        %825 = vrot.lane.b32.xlu0 %v314, 12
        %v826 = vpop.permute.xlu0 %825
        %827 = vrot.lane.b32.xlu0 %v315, 12
        %v828 = vpop.permute.xlu0 %827
        %829 = vrot.lane.b32.xlu0 %v316, 12
        %v830 = vpop.permute.xlu0 %829
        %831 = vrot.lane.b32.xlu0 %v317, 12
        %v832 = vpop.permute.xlu0 %831
        %897 = vrot.lane.b32.xlu0 %v318, 16
        %v898 = vpop.permute.xlu0 %897
        %899 = vrot.lane.b32.xlu0 %v319, 16
        %v900 = vpop.permute.xlu0 %899
        %901 = vrot.lane.b32.xlu0 %v320, 16
        %v902 = vpop.permute.xlu0 %901
        %903 = vrot.lane.b32.xlu0 %v321, 16
        %v904 = vpop.permute.xlu0 %903
        %905 = vrot.lane.b32.xlu0 %v322, 16
        %v906 = vpop.permute.xlu0 %905
        %907 = vrot.lane.b32.xlu0 %v323, 16
        %v908 = vpop.permute.xlu0 %907
        %909 = vrot.lane.b32.xlu0 %v324, 16
        %v910 = vpop.permute.xlu0 %909
        %911 = vrot.lane.b32.xlu0 %v325, 16
        %v912 = vpop.permute.xlu0 %911
        %913 = vrot.lane.b32.xlu0 %v326, 16
        %v914 = vpop.permute.xlu0 %913
        %915 = vrot.lane.b32.xlu0 %v327, 16
        %v916 = vpop.permute.xlu0 %915
        %917 = vrot.lane.b32.xlu0 %v328, 16
        %v918 = vpop.permute.xlu0 %917
        %919 = vrot.lane.b32.xlu0 %v329, 16
        %v920 = vpop.permute.xlu0 %919
        %921 = vrot.lane.b32.xlu0 %v330, 16
        %v922 = vpop.permute.xlu0 %921
        %923 = vrot.lane.b32.xlu0 %v331, 16
        %v924 = vpop.permute.xlu0 %923
        %925 = vrot.lane.b32.xlu0 %v332, 16
        %v926 = vpop.permute.xlu0 %925
        %927 = vrot.lane.b32.xlu0 %v333, 16
        %v928 = vpop.permute.xlu0 %927
        %929 = vrot.lane.b32.xlu0 %v334, 16
        %v930 = vpop.permute.xlu0 %929
        %931 = vrot.lane.b32.xlu0 %v335, 16
        %v932 = vpop.permute.xlu0 %931
        %933 = vrot.lane.b32.xlu0 %v336, 16
        %v934 = vpop.permute.xlu0 %933
        %935 = vrot.lane.b32.xlu0 %v337, 16
        %v936 = vpop.permute.xlu0 %935
        %937 = vrot.lane.b32.xlu0 %v338, 16
        %v938 = vpop.permute.xlu0 %937
        %939 = vrot.lane.b32.xlu0 %v339, 16
        %v940 = vpop.permute.xlu0 %939
        %941 = vrot.lane.b32.xlu0 %v340, 16
        %v942 = vpop.permute.xlu0 %941
        %943 = vrot.lane.b32.xlu0 %v341, 16
        %v944 = vpop.permute.xlu0 %943
        %945 = vrot.lane.b32.xlu0 %v342, 16
        %v946 = vpop.permute.xlu0 %945
        %947 = vrot.lane.b32.xlu0 %v343, 16
        %v948 = vpop.permute.xlu0 %947
        %949 = vrot.lane.b32.xlu0 %v344, 16
        %v950 = vpop.permute.xlu0 %949
        %951 = vrot.lane.b32.xlu0 %v345, 16
        %v952 = vpop.permute.xlu0 %951
        %953 = vrot.lane.b32.xlu0 %v346, 16
        %v954 = vpop.permute.xlu0 %953
        %955 = vrot.lane.b32.xlu0 %v347, 16
        %v956 = vpop.permute.xlu0 %955
        %957 = vrot.lane.b32.xlu0 %v348, 16
        %v958 = vpop.permute.xlu0 %957
        %959 = vrot.lane.b32.xlu0 %v349, 16
        %v960 = vpop.permute.xlu0 %959
        %1025 = vrot.lane.b32.xlu0 %v350, 20
        %v1026 = vpop.permute.xlu0 %1025
        %1027 = vrot.lane.b32.xlu0 %v351, 20
        %v1028 = vpop.permute.xlu0 %1027
        %1029 = vrot.lane.b32.xlu0 %v352, 20
        %v1030 = vpop.permute.xlu0 %1029
        %1031 = vrot.lane.b32.xlu0 %v353, 20
        %v1032 = vpop.permute.xlu0 %1031
        %1033 = vrot.lane.b32.xlu0 %v354, 20
        %v1034 = vpop.permute.xlu0 %1033
        %1035 = vrot.lane.b32.xlu0 %v355, 20
        %v1036 = vpop.permute.xlu0 %1035
        %1037 = vrot.lane.b32.xlu0 %v356, 20
        %v1038 = vpop.permute.xlu0 %1037
        %1039 = vrot.lane.b32.xlu0 %v357, 20
        %v1040 = vpop.permute.xlu0 %1039
        %1041 = vrot.lane.b32.xlu0 %v358, 20
        %v1042 = vpop.permute.xlu0 %1041
        %1043 = vrot.lane.b32.xlu0 %v359, 20
        %v1044 = vpop.permute.xlu0 %1043
        %1045 = vrot.lane.b32.xlu0 %v360, 20
        %v1046 = vpop.permute.xlu0 %1045
        %1047 = vrot.lane.b32.xlu0 %v361, 20
        %v1048 = vpop.permute.xlu0 %1047
        %1049 = vrot.lane.b32.xlu0 %v362, 20
        %v1050 = vpop.permute.xlu0 %1049
        %1051 = vrot.lane.b32.xlu0 %v363, 20
        %v1052 = vpop.permute.xlu0 %1051
        %1053 = vrot.lane.b32.xlu0 %v364, 20
        %v1054 = vpop.permute.xlu0 %1053
        %1055 = vrot.lane.b32.xlu0 %v365, 20
        %v1056 = vpop.permute.xlu0 %1055
        %1057 = vrot.lane.b32.xlu0 %v366, 20
        %v1058 = vpop.permute.xlu0 %1057
        %1059 = vrot.lane.b32.xlu0 %v367, 20
        %v1060 = vpop.permute.xlu0 %1059
        %1061 = vrot.lane.b32.xlu0 %v368, 20
        %v1062 = vpop.permute.xlu0 %1061
        %1063 = vrot.lane.b32.xlu0 %v369, 20
        %v1064 = vpop.permute.xlu0 %1063
        %1065 = vrot.lane.b32.xlu0 %v370, 20
        %v1066 = vpop.permute.xlu0 %1065
        %1067 = vrot.lane.b32.xlu0 %v371, 20
        %v1068 = vpop.permute.xlu0 %1067
        %1069 = vrot.lane.b32.xlu0 %v372, 20
        %v1070 = vpop.permute.xlu0 %1069
        %1071 = vrot.lane.b32.xlu0 %v373, 20
        %v1072 = vpop.permute.xlu0 %1071
        %1073 = vrot.lane.b32.xlu0 %v374, 20
        %v1074 = vpop.permute.xlu0 %1073
        %1075 = vrot.lane.b32.xlu0 %v375, 20
        %v1076 = vpop.permute.xlu0 %1075
        %1077 = vrot.lane.b32.xlu0 %v376, 20
        %v1078 = vpop.permute.xlu0 %1077
        %1079 = vrot.lane.b32.xlu0 %v377, 20
        %v1080 = vpop.permute.xlu0 %1079
        %1081 = vrot.lane.b32.xlu0 %v378, 20
        %v1082 = vpop.permute.xlu0 %1081
        %1083 = vrot.lane.b32.xlu0 %v379, 20
        %v1084 = vpop.permute.xlu0 %1083
        %1085 = vrot.lane.b32.xlu0 %v380, 20
        %v1086 = vpop.permute.xlu0 %1085
        %1087 = vrot.lane.b32.xlu0 %v381, 20
        %v1088 = vpop.permute.xlu0 %1087
        %1153 = vrot.lane.b32.xlu0 %v385, 24
        %v1154 = vpop.permute.xlu0 %1153
        %1155 = vrot.lane.b32.xlu0 %v386, 24
        %v1156 = vpop.permute.xlu0 %1155
        %1157 = vrot.lane.b32.xlu0 %v387, 24
        %v1158 = vpop.permute.xlu0 %1157
        %1159 = vrot.lane.b32.xlu0 %v388, 24
        %v1160 = vpop.permute.xlu0 %1159
        %1161 = vrot.lane.b32.xlu0 %v389, 24
        %v1162 = vpop.permute.xlu0 %1161
        %1163 = vrot.lane.b32.xlu0 %v390, 24
        %v1164 = vpop.permute.xlu0 %1163
        %1165 = vrot.lane.b32.xlu0 %v391, 24
        %v1166 = vpop.permute.xlu0 %1165
        %1167 = vrot.lane.b32.xlu0 %v392, 24
        %v1168 = vpop.permute.xlu0 %1167
        %1169 = vrot.lane.b32.xlu0 %v393, 24
        %v1170 = vpop.permute.xlu0 %1169
        %1171 = vrot.lane.b32.xlu0 %v394, 24
        %v1172 = vpop.permute.xlu0 %1171
        %1173 = vrot.lane.b32.xlu0 %v395, 24
        %v1174 = vpop.permute.xlu0 %1173
        %1175 = vrot.lane.b32.xlu0 %v396, 24
        %v1176 = vpop.permute.xlu0 %1175
        %1177 = vrot.lane.b32.xlu0 %v397, 24
        %v1178 = vpop.permute.xlu0 %1177
        %1179 = vrot.lane.b32.xlu0 %v398, 24
        %v1180 = vpop.permute.xlu0 %1179
        %1181 = vrot.lane.b32.xlu0 %v399, 24
        %v1182 = vpop.permute.xlu0 %1181
        %1183 = vrot.lane.b32.xlu0 %v400, 24
        %v1184 = vpop.permute.xlu0 %1183
        %1185 = vrot.lane.b32.xlu0 %v401, 24
        %v1186 = vpop.permute.xlu0 %1185
        %1187 = vrot.lane.b32.xlu0 %v402, 24
        %v1188 = vpop.permute.xlu0 %1187
        %1189 = vrot.lane.b32.xlu0 %v403, 24
        %v1190 = vpop.permute.xlu0 %1189
        %1191 = vrot.lane.b32.xlu0 %v404, 24
        %v1192 = vpop.permute.xlu0 %1191
        %1193 = vrot.lane.b32.xlu0 %v405, 24
        %v1194 = vpop.permute.xlu0 %1193
        %1195 = vrot.lane.b32.xlu0 %v406, 24
        %v1196 = vpop.permute.xlu0 %1195
        %1197 = vrot.lane.b32.xlu0 %v407, 24
        %v1198 = vpop.permute.xlu0 %1197
        %1199 = vrot.lane.b32.xlu0 %v408, 24
        %v1200 = vpop.permute.xlu0 %1199
        %1201 = vrot.lane.b32.xlu0 %v409, 24
        %v1202 = vpop.permute.xlu0 %1201
        %1203 = vrot.lane.b32.xlu0 %v410, 24
        %v1204 = vpop.permute.xlu0 %1203
        %1205 = vrot.lane.b32.xlu0 %v411, 24
        %v1206 = vpop.permute.xlu0 %1205
        %1207 = vrot.lane.b32.xlu0 %v412, 24
        %v1208 = vpop.permute.xlu0 %1207
        %1209 = vrot.lane.b32.xlu0 %v413, 24
        %v1210 = vpop.permute.xlu0 %1209
        %1211 = vrot.lane.b32.xlu0 %v414, 24
        %v1212 = vpop.permute.xlu0 %1211
        %1213 = vrot.lane.b32.xlu0 %v415, 24
        %v1214 = vpop.permute.xlu0 %1213
        %1215 = vrot.lane.b32.xlu0 %v416, 24
        %v1216 = vpop.permute.xlu0 %1215
        %1281 = vrot.lane.b32.xlu0 %v417, 28
        %v1282 = vpop.permute.xlu0 %1281
        %1283 = vrot.lane.b32.xlu0 %v418, 28
        %v1284 = vpop.permute.xlu0 %1283
        %1285 = vrot.lane.b32.xlu0 %v419, 28
        %v1286 = vpop.permute.xlu0 %1285
        %1287 = vrot.lane.b32.xlu0 %v420, 28
        %v1288 = vpop.permute.xlu0 %1287
        %1289 = vrot.lane.b32.xlu0 %v421, 28
        %v1290 = vpop.permute.xlu0 %1289
        %1291 = vrot.lane.b32.xlu0 %v422, 28
        %v1292 = vpop.permute.xlu0 %1291
        %1293 = vrot.lane.b32.xlu0 %v423, 28
        %v1294 = vpop.permute.xlu0 %1293
        %1295 = vrot.lane.b32.xlu0 %v424, 28
        %v1296 = vpop.permute.xlu0 %1295
        %1297 = vrot.lane.b32.xlu0 %v425, 28
        %v1298 = vpop.permute.xlu0 %1297
        %1299 = vrot.lane.b32.xlu0 %v426, 28
        %v1300 = vpop.permute.xlu0 %1299
        %1301 = vrot.lane.b32.xlu0 %v427, 28
        %v1302 = vpop.permute.xlu0 %1301
        %1303 = vrot.lane.b32.xlu0 %v428, 28
        %v1304 = vpop.permute.xlu0 %1303
        %1305 = vrot.lane.b32.xlu0 %v429, 28
        %v1306 = vpop.permute.xlu0 %1305
        %1307 = vrot.lane.b32.xlu0 %v430, 28
        %v1308 = vpop.permute.xlu0 %1307
        %1309 = vrot.lane.b32.xlu0 %v431, 28
        %v1310 = vpop.permute.xlu0 %1309
        %1311 = vrot.lane.b32.xlu0 %v432, 28
        %v1312 = vpop.permute.xlu0 %1311
        %1313 = vrot.lane.b32.xlu0 %v433, 28
        %v1314 = vpop.permute.xlu0 %1313
        %1315 = vrot.lane.b32.xlu0 %v434, 28
        %v1316 = vpop.permute.xlu0 %1315
        %1317 = vrot.lane.b32.xlu0 %v435, 28
        %v1318 = vpop.permute.xlu0 %1317
        %1319 = vrot.lane.b32.xlu0 %v436, 28
        %v1320 = vpop.permute.xlu0 %1319
        %1321 = vrot.lane.b32.xlu0 %v437, 28
        %v1322 = vpop.permute.xlu0 %1321
        %1323 = vrot.lane.b32.xlu0 %v438, 28
        %v1324 = vpop.permute.xlu0 %1323
        %1325 = vrot.lane.b32.xlu0 %v439, 28
        %v1326 = vpop.permute.xlu0 %1325
        %1327 = vrot.lane.b32.xlu0 %v440, 28
        %v1328 = vpop.permute.xlu0 %1327
        %1329 = vrot.lane.b32.xlu0 %v441, 28
        %v1330 = vpop.permute.xlu0 %1329
        %1331 = vrot.lane.b32.xlu0 %v442, 28
        %v1332 = vpop.permute.xlu0 %1331
        %1333 = vrot.lane.b32.xlu0 %v443, 28
        %v1334 = vpop.permute.xlu0 %1333
        %1335 = vrot.lane.b32.xlu0 %v444, 28
        %v1336 = vpop.permute.xlu0 %1335
        %1337 = vrot.lane.b32.xlu0 %v445, 28
        %v1338 = vpop.permute.xlu0 %1337
        %1339 = vrot.lane.b32.xlu0 %v446, 28
        %v1340 = vpop.permute.xlu0 %1339
        %1341 = vrot.lane.b32.xlu0 %v447, 28
        %v1342 = vpop.permute.xlu0 %1341
        %1343 = vrot.lane.b32.xlu0 %v448, 28
        %v1344 = vpop.permute.xlu0 %1343
        %1409 = vrot.lane.b32.xlu0 %v449, 32
        %v1410 = vpop.permute.xlu0 %1409
        %1411 = vrot.lane.b32.xlu0 %v450, 32
        %v1412 = vpop.permute.xlu0 %1411
        %1413 = vrot.lane.b32.xlu0 %v451, 32
        %v1414 = vpop.permute.xlu0 %1413
        %1415 = vrot.lane.b32.xlu0 %v452, 32
        %v1416 = vpop.permute.xlu0 %1415
        %1417 = vrot.lane.b32.xlu0 %v453, 32
        %v1418 = vpop.permute.xlu0 %1417
        %1419 = vrot.lane.b32.xlu0 %v454, 32
        %v1420 = vpop.permute.xlu0 %1419
        %1421 = vrot.lane.b32.xlu0 %v455, 32
        %v1422 = vpop.permute.xlu0 %1421
        %1423 = vrot.lane.b32.xlu0 %v456, 32
        %v1424 = vpop.permute.xlu0 %1423
        %1425 = vrot.lane.b32.xlu0 %v457, 32
        %v1426 = vpop.permute.xlu0 %1425
        %1427 = vrot.lane.b32.xlu0 %v458, 32
        %v1428 = vpop.permute.xlu0 %1427
        %1429 = vrot.lane.b32.xlu0 %v459, 32
        %v1430 = vpop.permute.xlu0 %1429
        %1431 = vrot.lane.b32.xlu0 %v460, 32
        %v1432 = vpop.permute.xlu0 %1431
        %1433 = vrot.lane.b32.xlu0 %v461, 32
        %v1434 = vpop.permute.xlu0 %1433
        %1435 = vrot.lane.b32.xlu0 %v462, 32
        %v1436 = vpop.permute.xlu0 %1435
        %1437 = vrot.lane.b32.xlu0 %v463, 32
        %v1438 = vpop.permute.xlu0 %1437
        %1439 = vrot.lane.b32.xlu0 %v464, 32
        %v1440 = vpop.permute.xlu0 %1439
        %1441 = vrot.lane.b32.xlu0 %v465, 32
        %v1442 = vpop.permute.xlu0 %1441
        %1443 = vrot.lane.b32.xlu0 %v466, 32
        %v1444 = vpop.permute.xlu0 %1443
        %1445 = vrot.lane.b32.xlu0 %v467, 32
        %v1446 = vpop.permute.xlu0 %1445
        %1447 = vrot.lane.b32.xlu0 %v468, 32
        %v1448 = vpop.permute.xlu0 %1447
        %1449 = vrot.lane.b32.xlu0 %v469, 32
        %v1450 = vpop.permute.xlu0 %1449
        %1451 = vrot.lane.b32.xlu0 %v470, 32
        %v1452 = vpop.permute.xlu0 %1451
        %1453 = vrot.lane.b32.xlu0 %v471, 32
        %v1454 = vpop.permute.xlu0 %1453
        %1455 = vrot.lane.b32.xlu0 %v472, 32
        %v1456 = vpop.permute.xlu0 %1455
        %1457 = vrot.lane.b32.xlu0 %v473, 32
        %v1458 = vpop.permute.xlu0 %1457
        %1459 = vrot.lane.b32.xlu0 %v474, 32
        %v1460 = vpop.permute.xlu0 %1459
        %1461 = vrot.lane.b32.xlu0 %v475, 32
        %v1462 = vpop.permute.xlu0 %1461
        %1463 = vrot.lane.b32.xlu0 %v476, 32
        %v1464 = vpop.permute.xlu0 %1463
        %1465 = vrot.lane.b32.xlu0 %v477, 32
        %v1466 = vpop.permute.xlu0 %1465
        %1467 = vrot.lane.b32.xlu0 %v478, 32
        %v1468 = vpop.permute.xlu0 %1467
        %1469 = vrot.lane.b32.xlu0 %v479, 32
        %v1470 = vpop.permute.xlu0 %1469
        %1471 = vrot.lane.b32.xlu0 %v480, 32
        %v1472 = vpop.permute.xlu0 %1471
        %vm1505 = vcmask 31744
        %v1506 = vsel %vm1505, %v187, %v514
        %v1507 = vsel %vm1505, %v188, %v516
        %v1508 = vsel %vm1505, %v189, %v518
        %v1509 = vsel %vm1505, %v190, %v520
        %v1510 = vsel %vm1505, %v191, %v522
        %v1511 = vsel %vm1505, %v192, %v524
        %v1512 = vsel %vm1505, %v193, %v526
        %v1513 = vsel %vm1505, %v194, %v528
        %v1514 = vsel %vm1505, %v195, %v530
        %v1515 = vsel %vm1505, %v196, %v532
        %v1516 = vsel %vm1505, %v197, %v534
        %v1517 = vsel %vm1505, %v198, %v536
        %v1518 = vsel %vm1505, %v199, %v538
        %v1519 = vsel %vm1505, %v200, %v540
        %v1520 = vsel %vm1505, %v201, %v542
        %v1521 = vsel %vm1505, %v202, %v544
        %v1522 = vsel %vm1505, %v203, %v546
        %v1523 = vsel %vm1505, %v204, %v548
        %v1524 = vsel %vm1505, %v205, %v550
        %v1525 = vsel %vm1505, %v206, %v552
        %v1526 = vsel %vm1505, %v207, %v554
        %v1527 = vsel %vm1505, %v208, %v556
        %v1528 = vsel %vm1505, %v209, %v558
        %v1529 = vsel %vm1505, %v210, %v560
        %v1530 = vsel %vm1505, %v211, %v562
        %v1531 = vsel %vm1505, %v212, %v564
        %v1532 = vsel %vm1505, %v213, %v566
        %v1533 = vsel %vm1505, %v214, %v568
        %v1534 = vsel %vm1505, %v215, %v570
        %v1535 = vsel %vm1505, %v216, %v572
        %v1536 = vsel %vm1505, %v217, %v574
        %v1537 = vsel %vm1505, %v218, %v576
        %vm1538 = vcmask 64512
        %v1539 = vsel %vm1538, %v1506, %v642
        %v1540 = vsel %vm1538, %v1507, %v644
        %v1541 = vsel %vm1538, %v1508, %v646
        %v1542 = vsel %vm1538, %v1509, %v648
        %v1543 = vsel %vm1538, %v1510, %v650
        %v1544 = vsel %vm1538, %v1511, %v652
        %v1545 = vsel %vm1538, %v1512, %v654
        %v1546 = vsel %vm1538, %v1513, %v656
        %v1547 = vsel %vm1538, %v1514, %v658
        %v1548 = vsel %vm1538, %v1515, %v660
        %v1549 = vsel %vm1538, %v1516, %v662
        %v1550 = vsel %vm1538, %v1517, %v664
        %v1551 = vsel %vm1538, %v1518, %v666
        %v1552 = vsel %vm1538, %v1519, %v668
        %v1553 = vsel %vm1538, %v1520, %v670
        %v1554 = vsel %vm1538, %v1521, %v672
        %v1555 = vsel %vm1538, %v1522, %v674
        %v1556 = vsel %vm1538, %v1523, %v676
        %v1557 = vsel %vm1538, %v1524, %v678
        %v1558 = vsel %vm1538, %v1525, %v680
        %v1559 = vsel %vm1538, %v1526, %v682
        %v1560 = vsel %vm1538, %v1527, %v684
        %v1561 = vsel %vm1538, %v1528, %v686
        %v1562 = vsel %vm1538, %v1529, %v688
        %v1563 = vsel %vm1538, %v1530, %v690
        %v1564 = vsel %vm1538, %v1531, %v692
        %v1565 = vsel %vm1538, %v1532, %v694
        %v1566 = vsel %vm1538, %v1533, %v696
        %v1567 = vsel %vm1538, %v1534, %v698
        %v1568 = vsel %vm1538, %v1535, %v700
        %v1569 = vsel %vm1538, %v1536, %v702
        %v1570 = vsel %vm1538, %v1537, %v704
        %vm1571 = vcmask 97280
        %v1572 = vsel %vm1571, %v1539, %v770
        %v1573 = vsel %vm1571, %v1540, %v772
        %v1574 = vsel %vm1571, %v1541, %v774
        %v1575 = vsel %vm1571, %v1542, %v776
        %v1576 = vsel %vm1571, %v1543, %v778
        %v1577 = vsel %vm1571, %v1544, %v780
        %v1578 = vsel %vm1571, %v1545, %v782
        %v1579 = vsel %vm1571, %v1546, %v784
        %v1580 = vsel %vm1571, %v1547, %v786
        %v1581 = vsel %vm1571, %v1548, %v788
        %v1582 = vsel %vm1571, %v1549, %v790
        %v1583 = vsel %vm1571, %v1550, %v792
        %v1584 = vsel %vm1571, %v1551, %v794
        %v1585 = vsel %vm1571, %v1552, %v796
        %v1586 = vsel %vm1571, %v1553, %v798
        %v1587 = vsel %vm1571, %v1554, %v800
        %v1588 = vsel %vm1571, %v1555, %v802
        %v1589 = vsel %vm1571, %v1556, %v804
        %v1590 = vsel %vm1571, %v1557, %v806
        %v1591 = vsel %vm1571, %v1558, %v808
        %v1592 = vsel %vm1571, %v1559, %v810
        %v1593 = vsel %vm1571, %v1560, %v812
        %v1594 = vsel %vm1571, %v1561, %v814
        %v1595 = vsel %vm1571, %v1562, %v816
        %v1596 = vsel %vm1571, %v1563, %v818
        %v1597 = vsel %vm1571, %v1564, %v820
        %v1598 = vsel %vm1571, %v1565, %v822
        %v1599 = vsel %vm1571, %v1566, %v824
        %v1600 = vsel %vm1571, %v1567, %v826
        %v1601 = vsel %vm1571, %v1568, %v828
        %v1602 = vsel %vm1571, %v1569, %v830
        %v1603 = vsel %vm1571, %v1570, %v832
        %vm1604 = vcmask 130048
        %v1605 = vsel %vm1604, %v1572, %v898
        %v1606 = vsel %vm1604, %v1573, %v900
        %v1607 = vsel %vm1604, %v1574, %v902
        %v1608 = vsel %vm1604, %v1575, %v904
        %v1609 = vsel %vm1604, %v1576, %v906
        %v1610 = vsel %vm1604, %v1577, %v908
        %v1611 = vsel %vm1604, %v1578, %v910
        %v1612 = vsel %vm1604, %v1579, %v912
        %v1613 = vsel %vm1604, %v1580, %v914
        %v1614 = vsel %vm1604, %v1581, %v916
        %v1615 = vsel %vm1604, %v1582, %v918
        %v1616 = vsel %vm1604, %v1583, %v920
        %v1617 = vsel %vm1604, %v1584, %v922
        %v1618 = vsel %vm1604, %v1585, %v924
        %v1619 = vsel %vm1604, %v1586, %v926
        %v1620 = vsel %vm1604, %v1587, %v928
        %v1621 = vsel %vm1604, %v1588, %v930
        %v1622 = vsel %vm1604, %v1589, %v932
        %v1623 = vsel %vm1604, %v1590, %v934
        %v1624 = vsel %vm1604, %v1591, %v936
        %v1625 = vsel %vm1604, %v1592, %v938
        %v1626 = vsel %vm1604, %v1593, %v940
        %v1627 = vsel %vm1604, %v1594, %v942
        %v1628 = vsel %vm1604, %v1595, %v944
        %v1629 = vsel %vm1604, %v1596, %v946
        %v1630 = vsel %vm1604, %v1597, %v948
        %v1631 = vsel %vm1604, %v1598, %v950
        %v1632 = vsel %vm1604, %v1599, %v952
        %v1633 = vsel %vm1604, %v1600, %v954
        %v1634 = vsel %vm1604, %v1601, %v956
        %v1635 = vsel %vm1604, %v1602, %v958
        %v1636 = vsel %vm1604, %v1603, %v960
        %vm1637 = vcmask 162816
        %v1638 = vsel %vm1637, %v1605, %v1026
        %v1639 = vsel %vm1637, %v1606, %v1028
        %v1640 = vsel %vm1637, %v1607, %v1030
        %v1641 = vsel %vm1637, %v1608, %v1032
        %v1642 = vsel %vm1637, %v1609, %v1034
        %v1643 = vsel %vm1637, %v1610, %v1036
        %v1644 = vsel %vm1637, %v1611, %v1038
        %v1645 = vsel %vm1637, %v1612, %v1040
        %v1646 = vsel %vm1637, %v1613, %v1042
        %v1647 = vsel %vm1637, %v1614, %v1044
        %v1648 = vsel %vm1637, %v1615, %v1046
        %v1649 = vsel %vm1637, %v1616, %v1048
        %v1650 = vsel %vm1637, %v1617, %v1050
        %v1651 = vsel %vm1637, %v1618, %v1052
        %v1652 = vsel %vm1637, %v1619, %v1054
        %v1653 = vsel %vm1637, %v1620, %v1056
        %v1654 = vsel %vm1637, %v1621, %v1058
        %v1655 = vsel %vm1637, %v1622, %v1060
        %v1656 = vsel %vm1637, %v1623, %v1062
        %v1657 = vsel %vm1637, %v1624, %v1064
        %v1658 = vsel %vm1637, %v1625, %v1066
        %v1659 = vsel %vm1637, %v1626, %v1068
        %v1660 = vsel %vm1637, %v1627, %v1070
        %v1661 = vsel %vm1637, %v1628, %v1072
        %v1662 = vsel %vm1637, %v1629, %v1074
        %v1663 = vsel %vm1637, %v1630, %v1076
        %v1664 = vsel %vm1637, %v1631, %v1078
        %v1665 = vsel %vm1637, %v1632, %v1080
        %v1666 = vsel %vm1637, %v1633, %v1082
        %v1667 = vsel %vm1637, %v1634, %v1084
        %v1668 = vsel %vm1637, %v1635, %v1086
        %v1669 = vsel %vm1637, %v1636, %v1088
        %vm1670 = vcmask 195584
        %v1671 = vsel %vm1670, %v1638, %v1154
        %v1672 = vsel %vm1670, %v1639, %v1156
        %v1673 = vsel %vm1670, %v1640, %v1158
        %v1674 = vsel %vm1670, %v1641, %v1160
        %v1675 = vsel %vm1670, %v1642, %v1162
        %v1676 = vsel %vm1670, %v1643, %v1164
        %v1677 = vsel %vm1670, %v1644, %v1166
        %v1678 = vsel %vm1670, %v1645, %v1168
        %v1679 = vsel %vm1670, %v1646, %v1170
        %v1680 = vsel %vm1670, %v1647, %v1172
        %v1681 = vsel %vm1670, %v1648, %v1174
        %v1682 = vsel %vm1670, %v1649, %v1176
        %v1683 = vsel %vm1670, %v1650, %v1178
        %v1684 = vsel %vm1670, %v1651, %v1180
        %v1685 = vsel %vm1670, %v1652, %v1182
        %v1686 = vsel %vm1670, %v1653, %v1184
        %v1687 = vsel %vm1670, %v1654, %v1186
        %v1688 = vsel %vm1670, %v1655, %v1188
        %v1689 = vsel %vm1670, %v1656, %v1190
        %v1690 = vsel %vm1670, %v1657, %v1192
        %v1691 = vsel %vm1670, %v1658, %v1194
        %v1692 = vsel %vm1670, %v1659, %v1196
        %v1693 = vsel %vm1670, %v1660, %v1198
        %v1694 = vsel %vm1670, %v1661, %v1200
        %v1695 = vsel %vm1670, %v1662, %v1202
        %v1696 = vsel %vm1670, %v1663, %v1204
        %v1697 = vsel %vm1670, %v1664, %v1206
        %v1698 = vsel %vm1670, %v1665, %v1208
        %v1699 = vsel %vm1670, %v1666, %v1210
        %v1700 = vsel %vm1670, %v1667, %v1212
        %v1701 = vsel %vm1670, %v1668, %v1214
        %v1702 = vsel %vm1670, %v1669, %v1216
        %vm1703 = vcmask 228352
        %v1704 = vsel %vm1703, %v1671, %v1282
        %v1705 = vsel %vm1703, %v1672, %v1284
        %v1706 = vsel %vm1703, %v1673, %v1286
        %v1707 = vsel %vm1703, %v1674, %v1288
        %v1708 = vsel %vm1703, %v1675, %v1290
        %v1709 = vsel %vm1703, %v1676, %v1292
        %v1710 = vsel %vm1703, %v1677, %v1294
        %v1711 = vsel %vm1703, %v1678, %v1296
        %v1712 = vsel %vm1703, %v1679, %v1298
        %v1713 = vsel %vm1703, %v1680, %v1300
        %v1714 = vsel %vm1703, %v1681, %v1302
        %v1715 = vsel %vm1703, %v1682, %v1304
        %v1716 = vsel %vm1703, %v1683, %v1306
        %v1717 = vsel %vm1703, %v1684, %v1308
        %v1718 = vsel %vm1703, %v1685, %v1310
        %v1719 = vsel %vm1703, %v1686, %v1312
        %v1720 = vsel %vm1703, %v1687, %v1314
        %v1721 = vsel %vm1703, %v1688, %v1316
        %v1722 = vsel %vm1703, %v1689, %v1318
        %v1723 = vsel %vm1703, %v1690, %v1320
        %v1724 = vsel %vm1703, %v1691, %v1322
        %v1725 = vsel %vm1703, %v1692, %v1324
        %v1726 = vsel %vm1703, %v1693, %v1326
        %v1727 = vsel %vm1703, %v1694, %v1328
        %v1728 = vsel %vm1703, %v1695, %v1330
        %v1729 = vsel %vm1703, %v1696, %v1332
        %v1730 = vsel %vm1703, %v1697, %v1334
        %v1731 = vsel %vm1703, %v1698, %v1336
        %v1732 = vsel %vm1703, %v1699, %v1338
        %v1733 = vsel %vm1703, %v1700, %v1340
        %v1734 = vsel %vm1703, %v1701, %v1342
        %v1735 = vsel %vm1703, %v1702, %v1344
        %vm1736 = vcmask 261120
        %v1737 = vsel %vm1736, %v1704, %v1410
        %v1738 = vsel %vm1736, %v1705, %v1412
        %v1739 = vsel %vm1736, %v1706, %v1414
        %v1740 = vsel %vm1736, %v1707, %v1416
        %v1741 = vsel %vm1736, %v1708, %v1418
        %v1742 = vsel %vm1736, %v1709, %v1420
        %v1743 = vsel %vm1736, %v1710, %v1422
        %v1744 = vsel %vm1736, %v1711, %v1424
        %v1745 = vsel %vm1736, %v1712, %v1426
        %v1746 = vsel %vm1736, %v1713, %v1428
        %v1747 = vsel %vm1736, %v1714, %v1430
        %v1748 = vsel %vm1736, %v1715, %v1432
        %v1749 = vsel %vm1736, %v1716, %v1434
        %v1750 = vsel %vm1736, %v1717, %v1436
        %v1751 = vsel %vm1736, %v1718, %v1438
        %v1752 = vsel %vm1736, %v1719, %v1440
        %v1753 = vsel %vm1736, %v1720, %v1442
        %v1754 = vsel %vm1736, %v1721, %v1444
        %v1755 = vsel %vm1736, %v1722, %v1446
        %v1756 = vsel %vm1736, %v1723, %v1448
        %v1757 = vsel %vm1736, %v1724, %v1450
        %v1758 = vsel %vm1736, %v1725, %v1452
        %v1759 = vsel %vm1736, %v1726, %v1454
        %v1760 = vsel %vm1736, %v1727, %v1456
        %v1761 = vsel %vm1736, %v1728, %v1458
        %v1762 = vsel %vm1736, %v1729, %v1460
        %v1763 = vsel %vm1736, %v1730, %v1462
        %v1764 = vsel %vm1736, %v1731, %v1464
        %v1765 = vsel %vm1736, %v1732, %v1466
        %v1766 = vsel %vm1736, %v1733, %v1468
        %v1767 = vsel %vm1736, %v1734, %v1470
        %v1768 = vsel %vm1736, %v1735, %v1472
        %vm1769 = vcmask 293888
        %v1770 = vsel %vm1769, %v1737, 0.0
        %v1771 = vsel %vm1769, %v1738, 0.0
        %v1772 = vsel %vm1769, %v1739, 0.0
        %v1773 = vsel %vm1769, %v1740, 0.0
        %v1774 = vsel %vm1769, %v1741, 0.0
        %v1775 = vsel %vm1769, %v1742, 0.0
        %v1776 = vsel %vm1769, %v1743, 0.0
        %v1777 = vsel %vm1769, %v1744, 0.0
        %v1778 = vsel %vm1769, %v1745, 0.0
        %v1779 = vsel %vm1769, %v1746, 0.0
        %v1780 = vsel %vm1769, %v1747, 0.0
        %v1781 = vsel %vm1769, %v1748, 0.0
        %v1782 = vsel %vm1769, %v1749, 0.0
        %v1783 = vsel %vm1769, %v1750, 0.0
        %v1784 = vsel %vm1769, %v1751, 0.0
        %v1785 = vsel %vm1769, %v1752, 0.0
        %v1786 = vsel %vm1769, %v1753, 0.0
        %v1787 = vsel %vm1769, %v1754, 0.0
        %v1788 = vsel %vm1769, %v1755, 0.0
        %v1789 = vsel %vm1769, %v1756, 0.0
        %v1790 = vsel %vm1769, %v1757, 0.0
        %v1791 = vsel %vm1769, %v1758, 0.0
        %v1792 = vsel %vm1769, %v1759, 0.0
        %v1793 = vsel %vm1769, %v1760, 0.0
        %v1794 = vsel %vm1769, %v1761, 0.0
        %v1795 = vsel %vm1769, %v1762, 0.0
        %v1796 = vsel %vm1769, %v1763, 0.0
        %v1797 = vsel %vm1769, %v1764, 0.0
        %v1798 = vsel %vm1769, %v1765, 0.0
        %v1799 = vsel %vm1769, %v1766, 0.0
        %v1800 = vsel %vm1769, %v1767, 0.0
        %v1801 = vsel %vm1769, %v1768, 0.0
        %v1802 = vld [vmem:[%s1] sm:$0xff]
        %v1803 = vld [vmem:[%s1 + $0x8] sm:$0xff]
        %v1804 = vld [vmem:[%s1 + $0x10] sm:$0xff]
        %v1805 = vld [vmem:[%s1 + $0x18] sm:$0xff]
        %v1806 = vld [vmem:[%s1 + $0x20] sm:$0xff]
        %v1807 = vld [vmem:[%s1 + $0x28] sm:$0xff]
        %v1808 = vld [vmem:[%s1 + $0x30] sm:$0xff]
        %v1809 = vld [vmem:[%s1 + $0x38] sm:$0xff]
        %v1810 = vld [vmem:[%s1 + $0x40] sm:$0xff]
        %v1811 = vld [vmem:[%s1 + $0x48] sm:$0xff]
        %v1812 = vld [vmem:[%s1 + $0x50] sm:$0xff]
        %v1813 = vld [vmem:[%s1 + $0x58] sm:$0xff]
        %v1814 = vld [vmem:[%s1 + $0x60] sm:$0xff]
        %v1815 = vld [vmem:[%s1 + $0x68] sm:$0xff]
        %v1816 = vld [vmem:[%s1 + $0x70] sm:$0xff]
        %v1817 = vld [vmem:[%s1 + $0x78] sm:$0xff]
        %v1818 = vld [vmem:[%s2] sm:$0x1]
        %v1820 = vperm.slane %v1818, 0
        %1822 = vmatpush.msra.mxu0 %v1817
        %1823 = vmatpush.msra.mxu0 %v1816
        %1824 = vmatpush.msra.mxu0 %v1815
        %1825 = vmatpush.msra.mxu0 %v1814
        %1826 = vmatpush.msra.mxu0 %v1813
        %1827 = vmatpush.msra.mxu0 %v1812
        %1828 = vmatpush.msra.mxu0 %v1811
        %1829 = vmatpush.msra.mxu0 %v1810
        %1830 = vmatpush.msra.mxu0 %v1809
        %1831 = vmatpush.msra.mxu0 %v1808
        %1832 = vmatpush.msra.mxu0 %v1807
        %1833 = vmatpush.msra.mxu0 %v1806
        %1834 = vmatpush.msra.mxu0 %v1805
        %1835 = vmatpush.msra.mxu0 %v1804
        %1836 = vmatpush.msra.mxu0 %v1803
        %1837 = vmatpush.msra.mxu0 %v1802
        %1838 = vmatmul.f32.gmra.mxu0 %v1770
        %v1839 = vpop.f32.mrf.mxu0
        %v1840 = vadd.f32 %v1820, %v1839
        %1841 = vmatmul.f32.gmra.mxu0 %v1771
        %v1842 = vpop.f32.mrf.mxu0
        %v1843 = vadd.f32 %v1820, %v1842
        %1844 = vmatmul.f32.gmra.mxu0 %v1772
        %v1845 = vpop.f32.mrf.mxu0
        %v1846 = vadd.f32 %v1820, %v1845
        %1847 = vmatmul.f32.gmra.mxu0 %v1773
        %v1848 = vpop.f32.mrf.mxu0
        %v1849 = vadd.f32 %v1820, %v1848
        %1850 = vmatmul.f32.gmra.mxu0 %v1774
        %v1851 = vpop.f32.mrf.mxu0
        %v1852 = vadd.f32 %v1820, %v1851
        %1853 = vmatmul.f32.gmra.mxu0 %v1775
        %v1854 = vpop.f32.mrf.mxu0
        %v1855 = vadd.f32 %v1820, %v1854
        %1856 = vmatmul.f32.gmra.mxu0 %v1776
        %v1857 = vpop.f32.mrf.mxu0
        %v1858 = vadd.f32 %v1820, %v1857
        %1859 = vmatmul.f32.gmra.mxu0 %v1777
        %v1860 = vpop.f32.mrf.mxu0
        %v1861 = vadd.f32 %v1820, %v1860
        %1862 = vmatmul.f32.gmra.mxu0 %v1778
        %v1863 = vpop.f32.mrf.mxu0
        %v1864 = vadd.f32 %v1820, %v1863
        %1865 = vmatmul.f32.gmra.mxu0 %v1779
        %v1866 = vpop.f32.mrf.mxu0
        %v1867 = vadd.f32 %v1820, %v1866
        %1868 = vmatmul.f32.gmra.mxu0 %v1780
        %v1869 = vpop.f32.mrf.mxu0
        %v1870 = vadd.f32 %v1820, %v1869
        %1871 = vmatmul.f32.gmra.mxu0 %v1781
        %v1872 = vpop.f32.mrf.mxu0
        %v1873 = vadd.f32 %v1820, %v1872
        %1874 = vmatmul.f32.gmra.mxu0 %v1782
        %v1875 = vpop.f32.mrf.mxu0
        %v1876 = vadd.f32 %v1820, %v1875
        %1877 = vmatmul.f32.gmra.mxu0 %v1783
        %v1878 = vpop.f32.mrf.mxu0
        %v1879 = vadd.f32 %v1820, %v1878
        %1880 = vmatmul.f32.gmra.mxu0 %v1784
        %v1881 = vpop.f32.mrf.mxu0
        %v1882 = vadd.f32 %v1820, %v1881
        %1883 = vmatmul.f32.gmra.mxu0 %v1785
        %v1884 = vpop.f32.mrf.mxu0
        %v1885 = vadd.f32 %v1820, %v1884
        %1886 = vmatmul.f32.gmra.mxu0 %v1786
        %v1887 = vpop.f32.mrf.mxu0
        %v1888 = vadd.f32 %v1820, %v1887
        %1889 = vmatmul.f32.gmra.mxu0 %v1787
        %v1890 = vpop.f32.mrf.mxu0
        %v1891 = vadd.f32 %v1820, %v1890
        %1892 = vmatmul.f32.gmra.mxu0 %v1788
        %v1893 = vpop.f32.mrf.mxu0
        %v1894 = vadd.f32 %v1820, %v1893
        %1895 = vmatmul.f32.gmra.mxu0 %v1789
        %v1896 = vpop.f32.mrf.mxu0
        %v1897 = vadd.f32 %v1820, %v1896
        %1898 = vmatmul.f32.gmra.mxu0 %v1790
        %v1899 = vpop.f32.mrf.mxu0
        %v1900 = vadd.f32 %v1820, %v1899
        %1901 = vmatmul.f32.gmra.mxu0 %v1791
        %v1902 = vpop.f32.mrf.mxu0
        %v1903 = vadd.f32 %v1820, %v1902
        %1904 = vmatmul.f32.gmra.mxu0 %v1792
        %v1905 = vpop.f32.mrf.mxu0
        %v1906 = vadd.f32 %v1820, %v1905
        %1907 = vmatmul.f32.gmra.mxu0 %v1793
        %v1908 = vpop.f32.mrf.mxu0
        %v1909 = vadd.f32 %v1820, %v1908
        %1910 = vmatmul.f32.gmra.mxu0 %v1794
        %v1911 = vpop.f32.mrf.mxu0
        %v1912 = vadd.f32 %v1820, %v1911
        %1913 = vmatmul.f32.gmra.mxu0 %v1795
        %v1914 = vpop.f32.mrf.mxu0
        %v1915 = vadd.f32 %v1820, %v1914
        %1916 = vmatmul.f32.gmra.mxu0 %v1796
        %v1917 = vpop.f32.mrf.mxu0
        %v1918 = vadd.f32 %v1820, %v1917
        %1919 = vmatmul.f32.gmra.mxu0 %v1797
        %v1920 = vpop.f32.mrf.mxu0
        %v1921 = vadd.f32 %v1820, %v1920
        %1922 = vmatmul.f32.gmra.mxu0 %v1798
        %v1923 = vpop.f32.mrf.mxu0
        %v1924 = vadd.f32 %v1820, %v1923
        %1925 = vmatmul.f32.gmra.mxu0 %v1799
        %v1926 = vpop.f32.mrf.mxu0
        %v1927 = vadd.f32 %v1820, %v1926
        %1928 = vmatmul.f32.gmra.mxu0 %v1800
        %v1929 = vpop.f32.mrf.mxu0
        %v1930 = vadd.f32 %v1820, %v1929
        %1931 = vmatmul.f32.gmra.mxu0 %v1801
        %v1932 = vpop.f32.mrf.mxu0
        %v1933 = vadd.f32 %v1820, %v1932
        %1934 = vdwg.mxu0
        %1935 = vst [vmem:[%s177] sm:$0xff] %v1840
        %1936 = vst [vmem:[%s177 + $0x8] sm:$0xff] %v1843
        %1937 = vst [vmem:[%s177 + $0x10] sm:$0xff] %v1846
        %1938 = vst [vmem:[%s177 + $0x18] sm:$0xff] %v1849
        %1939 = vst [vmem:[%s177 + $0x20] sm:$0xff] %v1852
        %1940 = vst [vmem:[%s177 + $0x28] sm:$0xff] %v1855
        %1941 = vst [vmem:[%s177 + $0x30] sm:$0xff] %v1858
        %1942 = vst [vmem:[%s177 + $0x38] sm:$0xff] %v1861
        %1943 = vst [vmem:[%s177 + $0x40] sm:$0xff] %v1864
        %1944 = vst [vmem:[%s177 + $0x48] sm:$0xff] %v1867
        %1945 = vst [vmem:[%s177 + $0x50] sm:$0xff] %v1870
        %1946 = vst [vmem:[%s177 + $0x58] sm:$0xff] %v1873
        %1947 = vst [vmem:[%s177 + $0x60] sm:$0xff] %v1876
        %1948 = vst [vmem:[%s177 + $0x68] sm:$0xff] %v1879
        %1949 = vst [vmem:[%s177 + $0x70] sm:$0xff] %v1882
        %1950 = vst [vmem:[%s177 + $0x78] sm:$0xff] %v1885
        %1951 = vst [vmem:[%s177 + $0x80] sm:$0xff] %v1888
        %1952 = vst [vmem:[%s177 + $0x88] sm:$0xff] %v1891
        %1953 = vst [vmem:[%s177 + $0x90] sm:$0xff] %v1894
        %1954 = vst [vmem:[%s177 + $0x98] sm:$0xff] %v1897
        %1955 = vst [vmem:[%s177 + $0xa0] sm:$0xff] %v1900
        %1956 = vst [vmem:[%s177 + $0xa8] sm:$0xff] %v1903
        %1957 = vst [vmem:[%s177 + $0xb0] sm:$0xff] %v1906
        %1958 = vst [vmem:[%s177 + $0xb8] sm:$0xff] %v1909
        %1959 = vst [vmem:[%s177 + $0xc0] sm:$0xff] %v1912
        %1960 = vst [vmem:[%s177 + $0xc8] sm:$0xff] %v1915
        %1961 = vst [vmem:[%s177 + $0xd0] sm:$0xff] %v1918
        %1962 = vst [vmem:[%s177 + $0xd8] sm:$0xff] %v1921
        %1963 = vst [vmem:[%s177 + $0xe0] sm:$0xff] %v1924
        %1964 = vst [vmem:[%s177 + $0xe8] sm:$0xff] %v1927
        %1965 = vst [vmem:[%s177 + $0xf0] sm:$0xff] %v1930
        %1966 = vst [vmem:[%s177 + $0xf8] sm:$0xff] %v1933
        %s1967 = sand.u32 %s107, 1
        %s1968 = scalar_lea.sflag [#allocation3], %s1967
        %s1969 = sand.u32 %s107, 1
        %s1970 = smul.addr %s1969, 256
        %s1971 = scalar_lea.vmem [#allocation2], %s1970
        // Predicated region
        $region33: #{tpu_custom_call.1} parent=31 // pred_check
          %p1972 = pneg %p117
        $region34: #{tpu_custom_call.1} parent=31 // pred_check_branch
          %1974 = sbr.rel (%p1972) target = $region36
        $region35: #{tpu_custom_call.1} parent=31 // pred_region
          %s1975 = smul.u32 32, %s22
          %1977 = vsyncadd %s1968, 0
          %s1978 = smul.addr %s21, 32
          %s1979 = sadd.s32 %s1975, %s1978
          %s1980 = smul.addr %s1979, 8
          %s1981 = scalar_lea.hbm %s3, %s1980
          %s1982 = sshll.u32 %s1971, 4
          %s1983 = int_to_ptr.vmem [resolvable:$true] %s1982
          %s1984 = sshll.u32 %s1981, 4
          %s1985 = int_to_ptr.hbm [resolvable:$true] %s1984
          %1990 = dma.vmem_to_hbm [thread:$0]  %s1983, 4096, %s1985, %s1968, 128, 128, 8
        $region36: #{tpu_custom_call.1} parent=31 // pred_fallthru
          _
      $region32: #{tpu_custom_call.1} parent=5 // pred_fallthru
        _
      %p1991 = scmp.le.s32.totalorder 2, %s12
      // Predicated region
      $region37: #{tpu_custom_call.1} parent=5 // pred_check
        %p1992 = pneg %p1991
      $region38: #{tpu_custom_call.1} parent=5 // pred_check_branch
        %1994 = sbr.rel (%p1992) target = $region40
      $region39: #{tpu_custom_call.1} parent=5 // pred_region
        %s1995 = ssub.s32 %s12, 2
        // Predicated region
        $region41: #{tpu_custom_call.1} parent=39 // pred_check
          %p1996 = pneg %p123
        $region42: #{tpu_custom_call.1} parent=39 // pred_check_branch
          %1998 = sbr.rel (%p1996) target = $region44
        $region43: #{tpu_custom_call.1} parent=39 // pred_region
          %s1999 = sand.u32 %s108, 1
          %s2000 = scalar_lea.sflag [#allocation3], %s1999
          %s2001 = sand.u32 %s108, 1
          %s2002 = smul.addr %s2001, 256
          %s2003 = scalar_lea.vmem [#allocation2], %s2002
          %2005 = dma.done %s2000, 4096
        $region44: #{tpu_custom_call.1} parent=39 // pred_fallthru
          _
      $region40: #{tpu_custom_call.1} parent=5 // pred_fallthru
        _
    $region6: #{tpu_custom_call.1} parent=1 // loop_footer
      %s16 = sadd.s32 1, %s12
    $region7: #{tpu_custom_call.1} parent=1 // loop_footer_branch
      %11 = sbr.rel target = $region3
    $region8: #{tpu_custom_call.1} parent=1 // loop_exit
      _
    %2006 = vsyncpa [#allocation3], 1
    %s2007 = scalar_lea.sflag [#allocation3], 1
    %2008 = vsyncpa %s2007, 1

// kernel: tpu_custom_call.1
$region0: #{tpu_custom_call.1}
  #allocation0 [shape = 'u32[]', space=smem, size = 0x4, offset = 0x4, fixed_abs, tag = 'smem constant byte address 0x4 - core index']
  #allocation1 [shape = 'u32[72,128]{1,0:T(1,128)}', space=vmem, size = 0x9000, scoped, tag = 'internal scratch']
  #allocation2 [shape = 'f32[256,128]{1,0:T(8,128)}', space=vmem, size = 0x20000, scoped, tag = 'scratch operand']
  %s0 = inlined_call_operand.vmem [shape: f32[2,18,18,4], index: 0, kind: input, shape index: {}]
  %s1 = inlined_call_operand.vmem [shape: f32[128,128], index: 1, kind: input, shape index: {}]
  %s2 = inlined_call_operand.vmem [shape: f32[1,128], index: 2, kind: input, shape index: {}]
  %s3 = inlined_call_operand.hbm [shape: f32[2,256,128], index: 3, kind: output, shape index: {}]
  %s4 = sld [smem:[#allocation0]]
  $region45: #{tpu_custom_call.1} parent=0
    _
  %s6 = ssub.s32 1, %s4
  %s7 = scalar_select 0, %s6, %s4
  $region1: #{tpu_custom_call.1} parent=0
    #allocation3 [shape = 'u8[262144]{0}', space=vmem, size = 0x40000, scoped, tag = 'output window, operand 0']
    #allocation4 [shape = 's32[2]{0}', space=sflag, size = 0x8, scoped, tag = 'scoped memory for tpu_custom_call.1']
    %8 = vsyncpa [#allocation4], 0
    %s9 = scalar_lea.sflag [#allocation4], 1
    %10 = vsyncpa %s9, 0
    loop: start=0, step=1, limit=4
    $region2: #{tpu_custom_call.1} parent=1 // loop_pre_header
      _
    $region3: #{tpu_custom_call.1} parent=1 // loop_header
      %s12 = sphi 0, %s16
      %p13 = scmp.ge.s32.totalorder %s12, 4
      %s19 = sphi 0, %s31
      %s20 = sphi 0, %s27
      %s21 = sphi 0, %s19
      %s22 = sphi 0, %s20
      %s23 = sphi 0, %s21
      %s24 = sphi 0, %s22
      %s34 = sphi 0, %s36
      %s37 = sphi 0, %s34
      %s38 = sphi 0, %s37
      %s54 = sphi 0, %s38
      %s58 = sphi 0, %s58
      %s60 = sphi 0, %s58
      %s61 = sphi 0, %s60
      %s75 = sphi 0, %s61
      %s79 = sphi 0, %s79
      %s81 = sphi 0, %s79
      %s82 = sphi 0, %s81
      %s96 = sphi 0, %s82
      %s104 = sphi 0, %s106
      %s107 = sphi 0, %s104
      %s108 = sphi 0, %s107
      %s124 = sphi 0, %s108
    $region4: #{tpu_custom_call.1} parent=1 // loop_header_branch
      %15 = sbr.rel (%p13) target = $region8
    $region5: #{tpu_custom_call.1} parent=1 // loop_body
      %s17 = ssub.s32 %s12, 1
      %s18 = ssub.s32 %s12, 2
      %s25 = sadd.s32 1, %s20
      %p26 = scmp.ge.s32.totalorder %s25, 1
      %s27 = scalar_select %p26, 0, %s25
      %s28 = sadd.s32 1, %s19
      %s29 = scalar_select %p26, %s28, %s19
      %p30 = scmp.ge.s32.totalorder %s29, 2
      %s31 = scalar_select %p30, 0, %s29
      %s32 = ssub.s32 %s19, %s31
      %p33 = scmp.eq.s32.totalorder %s32, 0
      %s35 = sadd.s32 %s34, 1
      %s36 = scalar_select %p33, %s34, %s35
      %p39 = pneg %p33
      %p40 = scmp.eq.s32.totalorder %s12, 1
      %p41 = por %p39, %p40
      %p42 = scmp.ne.s32.totalorder %s34, %s37
      %p43 = scmp.eq.s32.totalorder %s12, 0
      %p44 = por %p42, %p43
      %p45 = scmp.ne.s32.totalorder %s34, %s37
      %p46 = scmp.eq.s32.totalorder %s17, 1
      %p47 = por %p45, %p46
      %p48 = scmp.ne.s32.totalorder %s37, %s38
      %p49 = scmp.eq.s32.totalorder %s17, 0
      %p50 = por %p48, %p49
      %p51 = scmp.ne.s32.totalorder %s37, %s38
      %p52 = scmp.eq.s32.totalorder %s18, 1
      %p53 = por %p51, %p52
      %p55 = scmp.ne.s32.totalorder %s38, %s54
      %p56 = scmp.eq.s32.totalorder %s18, 0
      %p57 = por %p55, %p56
      %s59 = sadd.s32 %s58, 1
      %p62 = scmp.eq.s32.totalorder %s12, 1
      %p63 = scmp.ne.s32.totalorder %s58, %s60
      %p64 = scmp.eq.s32.totalorder %s12, 0
      %p65 = por %p63, %p64
      %p66 = scmp.ne.s32.totalorder %s58, %s60
      %p67 = scmp.eq.s32.totalorder %s17, 1
      %p68 = por %p66, %p67
      %p69 = scmp.ne.s32.totalorder %s60, %s61
      %p70 = scmp.eq.s32.totalorder %s17, 0
      %p71 = por %p69, %p70
      %p72 = scmp.ne.s32.totalorder %s60, %s61
      %p73 = scmp.eq.s32.totalorder %s18, 1
      %p74 = por %p72, %p73
      %p76 = scmp.ne.s32.totalorder %s61, %s75
      %p77 = scmp.eq.s32.totalorder %s18, 0
      %p78 = por %p76, %p77
      %s80 = sadd.s32 %s79, 1
      %p83 = scmp.eq.s32.totalorder %s12, 1
      %p84 = scmp.ne.s32.totalorder %s79, %s81
      %p85 = scmp.eq.s32.totalorder %s12, 0
      %p86 = por %p84, %p85
      %p87 = scmp.ne.s32.totalorder %s79, %s81
      %p88 = scmp.eq.s32.totalorder %s17, 1
      %p89 = por %p87, %p88
      %p90 = scmp.ne.s32.totalorder %s81, %s82
      %p91 = scmp.eq.s32.totalorder %s17, 0
      %p92 = por %p90, %p91
      %p93 = scmp.ne.s32.totalorder %s81, %s82
      %p94 = scmp.eq.s32.totalorder %s18, 1
      %p95 = por %p93, %p94
      %p97 = scmp.ne.s32.totalorder %s82, %s96
      %p98 = scmp.eq.s32.totalorder %s18, 0
      %p99 = por %p97, %p98
      %s100 = ssub.s32 %s19, %s31
      %s101 = ssub.s32 %s20, %s27
      %s102 = sor.u32 %s100, %s101
      %p103 = scmp.eq.s32.totalorder %s102, 0
      %s105 = sadd.s32 %s104, 1
      %s106 = scalar_select %p103, %s104, %s105
      %p109 = pneg %p103
      %p110 = scmp.eq.s32.totalorder %s12, 1
      %p111 = por %p109, %p110
      %p112 = scmp.ne.s32.totalorder %s104, %s107
      %p113 = scmp.eq.s32.totalorder %s12, 0
      %p114 = por %p112, %p113
      %p115 = scmp.ne.s32.totalorder %s104, %s107
      %p116 = scmp.eq.s32.totalorder %s17, 1
      %p117 = por %p115, %p116
      %p118 = scmp.ne.s32.totalorder %s107, %s108
      %p119 = scmp.eq.s32.totalorder %s17, 0
      %p120 = por %p118, %p119
      %p121 = scmp.ne.s32.totalorder %s107, %s108
      %p122 = scmp.eq.s32.totalorder %s18, 1
      %p123 = por %p121, %p122
      %p125 = scmp.ne.s32.totalorder %s108, %s124
      %p126 = scmp.eq.s32.totalorder %s18, 0
      %p127 = por %p125, %p126
      %p128 = scmp.le.s32.totalorder 1, %s12
      %p129 = scmp.lt.s32.totalorder %s12, 3
      %p130 = pnand %p128, %p129
      %p131 = pneg %p130
      // Predicated region
      $region9: #{tpu_custom_call.1} parent=5 // pred_check
        _
      $region10: #{tpu_custom_call.1} parent=5 // pred_check_branch
        %133 = sbr.rel (%p130) target = $region12
      $region11: #{tpu_custom_call.1} parent=5 // pred_region
        %s134 = ssub.s32 %s12, 1
        // Predicated region
        $region13: #{tpu_custom_call.1} parent=11 // pred_check
          %p135 = pneg %p71
        $region14: #{tpu_custom_call.1} parent=11 // pred_check_branch
          %137 = sbr.rel (%p135) target = $region16
        $region15: #{tpu_custom_call.1} parent=11 // pred_region
          _
        $region16: #{tpu_custom_call.1} parent=11 // pred_fallthru
          _
        // Predicated region
        $region17: #{tpu_custom_call.1} parent=11 // pred_check
          %p138 = pneg %p92
        $region18: #{tpu_custom_call.1} parent=11 // pred_check_branch
          %140 = sbr.rel (%p138) target = $region20
        $region19: #{tpu_custom_call.1} parent=11 // pred_region
          _
        $region20: #{tpu_custom_call.1} parent=11 // pred_fallthru
          _
      $region12: #{tpu_custom_call.1} parent=5 // pred_fallthru
        _
      %p141 = scmp.lt.s32.totalorder %s12, 2
      // Predicated region
      $region21: #{tpu_custom_call.1} parent=5 // pred_check
        %p142 = pneg %p141
      $region22: #{tpu_custom_call.1} parent=5 // pred_check_branch
        %144 = sbr.rel (%p142) target = $region24
      $region23: #{tpu_custom_call.1} parent=5 // pred_region
        // Predicated region
        $region25: #{tpu_custom_call.1} parent=23 // pred_check
          %p145 = pneg %p44
        $region26: #{tpu_custom_call.1} parent=23 // pred_check_branch
          %147 = sbr.rel (%p145) target = $region28
        $region27: #{tpu_custom_call.1} parent=23 // pred_region
          %p148 = scmp.lt.s32.totalorder %s19, 1
          %s149 = scalar_select %p148, %s19, 1
          %s150 = smul.addr %s149, 54
          %s151 = smul.addr %s150, 8
          %s152 = scalar_lea.vmem %s0, %s151
        $region28: #{tpu_custom_call.1} parent=23 // pred_fallthru
          _
      $region24: #{tpu_custom_call.1} parent=5 // pred_fallthru
        _
      %p153 = scmp.le.s32.totalorder 1, %s12
      %p154 = scmp.lt.s32.totalorder %s12, 3
      %p155 = pnand %p153, %p154
      %p156 = pneg %p155
      // Predicated region
      $region29: #{tpu_custom_call.1} parent=5 // pred_check
        _
      $region30: #{tpu_custom_call.1} parent=5 // pred_check_branch
        %158 = sbr.rel (%p155) target = $region32
      $region31: #{tpu_custom_call.1} parent=5 // pred_region
        %s159 = ssub.s32 %s12, 1
        %p160 = scmp.lt.s32.totalorder %s21, 1
        %s161 = scalar_select %p160, %s21, 1
        %s162 = smul.addr %s161, 54
        %s163 = smul.addr %s162, 8
        %s164 = scalar_lea.vmem %s0, %s163
        %p165 = pneg %p50
        %p166 = pneg %p47
        %p167 = pneg %p71
        %p168 = pneg %p68
        %p169 = pneg %p92
        %p170 = pneg %p89
        %p171 = pneg %p120
        %p172 = pneg %p117
        %s173 = sand.u32 %s107, 1
        %s174 = scalar_lea.sflag [#allocation4], %s173
        %s175 = sand.u32 %s107, 1
        %s176 = smul.addr %s175, 256
        %s177 = scalar_lea.vmem [#allocation3], %s176
        %p178 = scmp.lt.s32.totalorder %s21, 1
        %s179 = scalar_select %p178, %s21, 1
        %s180 = smul.addr %s179, 54
        %s181 = smul.addr %s180, 8
        %s182 = scalar_lea.vmem %s0, %s181
        %s183 = smul.u32 32, %s22
        %s184 = smul.u32 %s22, 16
        %s185 = smul.u32 %s184, 24
        %s186 = scalar_lea.vmem %s182, %s185
        %v187 = vld [vmem:[%s186] sm:$0xff]
        %v188 = vld [vmem:[%s186 + $0x8] sm:$0xff]
        %v189 = vld [vmem:[%s186 + $0x18] sm:$0xff]
        %v190 = vld [vmem:[%s186 + $0x20] sm:$0xff]
        %v191 = vld [vmem:[%s186 + $0x30] sm:$0xff]
        %v192 = vld [vmem:[%s186 + $0x38] sm:$0xff]
        %v193 = vld [vmem:[%s186 + $0x48] sm:$0xff]
        %v194 = vld [vmem:[%s186 + $0x50] sm:$0xff]
        %v195 = vld [vmem:[%s186 + $0x60] sm:$0xff]
        %v196 = vld [vmem:[%s186 + $0x68] sm:$0xff]
        %v197 = vld [vmem:[%s186 + $0x78] sm:$0xff]
        %v198 = vld [vmem:[%s186 + $0x80] sm:$0xff]
        %v199 = vld [vmem:[%s186 + $0x90] sm:$0xff]
        %v200 = vld [vmem:[%s186 + $0x98] sm:$0xff]
        %v201 = vld [vmem:[%s186 + $0xa8] sm:$0xff]
        %v202 = vld [vmem:[%s186 + $0xb0] sm:$0xff]
        %v203 = vld [vmem:[%s186 + $0xc0] sm:$0xff]
        %v204 = vld [vmem:[%s186 + $0xc8] sm:$0xff]
        %v205 = vld [vmem:[%s186 + $0xd8] sm:$0xff]
        %v206 = vld [vmem:[%s186 + $0xe0] sm:$0xff]
        %v207 = vld [vmem:[%s186 + $0xf0] sm:$0xff]
        %v208 = vld [vmem:[%s186 + $0xf8] sm:$0xff]
        %v209 = vld [vmem:[%s186 + $0x108] sm:$0xff]
        %v210 = vld [vmem:[%s186 + $0x110] sm:$0xff]
        %v211 = vld [vmem:[%s186 + $0x120] sm:$0xff]
        %v212 = vld [vmem:[%s186 + $0x128] sm:$0xff]
        %v213 = vld [vmem:[%s186 + $0x138] sm:$0xff]
        %v214 = vld [vmem:[%s186 + $0x140] sm:$0xff]
        %v215 = vld [vmem:[%s186 + $0x150] sm:$0xff]
        %v216 = vld [vmem:[%s186 + $0x158] sm:$0xff]
        %v217 = vld [vmem:[%s186 + $0x168] sm:$0xff]
        %v218 = vld [vmem:[%s186 + $0x170] sm:$0xff]
        %v219 = vld [vmem:[%s186 + $0x1] sm:$0xff]
        %v220 = vld [vmem:[%s186 + $0x9] sm:$0xff]
        %v221 = vld [vmem:[%s186 + $0x19] sm:$0xff]
        %v222 = vld [vmem:[%s186 + $0x21] sm:$0xff]
        %v223 = vld [vmem:[%s186 + $0x31] sm:$0xff]
        %v224 = vld [vmem:[%s186 + $0x39] sm:$0xff]
        %v225 = vld [vmem:[%s186 + $0x49] sm:$0xff]
        %v226 = vld [vmem:[%s186 + $0x51] sm:$0xff]
        %v227 = vld [vmem:[%s186 + $0x61] sm:$0xff]
        %v228 = vld [vmem:[%s186 + $0x69] sm:$0xff]
        %v229 = vld [vmem:[%s186 + $0x79] sm:$0xff]
        %v230 = vld [vmem:[%s186 + $0x81] sm:$0xff]
        %v231 = vld [vmem:[%s186 + $0x91] sm:$0xff]
        %v232 = vld [vmem:[%s186 + $0x99] sm:$0xff]
        %v233 = vld [vmem:[%s186 + $0xa9] sm:$0xff]
        %v234 = vld [vmem:[%s186 + $0xb1] sm:$0xff]
        %v235 = vld [vmem:[%s186 + $0xc1] sm:$0xff]
        %v236 = vld [vmem:[%s186 + $0xc9] sm:$0xff]
        %v237 = vld [vmem:[%s186 + $0xd9] sm:$0xff]
        %v238 = vld [vmem:[%s186 + $0xe1] sm:$0xff]
        %v239 = vld [vmem:[%s186 + $0xf1] sm:$0xff]
        %v240 = vld [vmem:[%s186 + $0xf9] sm:$0xff]
        %v241 = vld [vmem:[%s186 + $0x109] sm:$0xff]
        %v242 = vld [vmem:[%s186 + $0x111] sm:$0xff]
        %v243 = vld [vmem:[%s186 + $0x121] sm:$0xff]
        %v244 = vld [vmem:[%s186 + $0x129] sm:$0xff]
        %v245 = vld [vmem:[%s186 + $0x139] sm:$0xff]
        %v246 = vld [vmem:[%s186 + $0x141] sm:$0xff]
        %v247 = vld [vmem:[%s186 + $0x151] sm:$0xff]
        %v248 = vld [vmem:[%s186 + $0x159] sm:$0xff]
        %v249 = vld [vmem:[%s186 + $0x169] sm:$0xff]
        %v250 = vld [vmem:[%s186 + $0x171] sm:$0xff]
        %v251 = vld [vmem:[%s186 + $0x2] sm:$0xff]
        %v252 = vld [vmem:[%s186 + $0xa] sm:$0xff]
        %v253 = vld [vmem:[%s186 + $0x1a] sm:$0xff]
        %v254 = vld [vmem:[%s186 + $0x22] sm:$0xff]
        %v255 = vld [vmem:[%s186 + $0x32] sm:$0xff]
        %v256 = vld [vmem:[%s186 + $0x3a] sm:$0xff]
        %v257 = vld [vmem:[%s186 + $0x4a] sm:$0xff]
        %v258 = vld [vmem:[%s186 + $0x52] sm:$0xff]
        %v259 = vld [vmem:[%s186 + $0x62] sm:$0xff]
        %v260 = vld [vmem:[%s186 + $0x6a] sm:$0xff]
        %v261 = vld [vmem:[%s186 + $0x7a] sm:$0xff]
        %v262 = vld [vmem:[%s186 + $0x82] sm:$0xff]
        %v263 = vld [vmem:[%s186 + $0x92] sm:$0xff]
        %v264 = vld [vmem:[%s186 + $0x9a] sm:$0xff]
        %v265 = vld [vmem:[%s186 + $0xaa] sm:$0xff]
        %v266 = vld [vmem:[%s186 + $0xb2] sm:$0xff]
        %v267 = vld [vmem:[%s186 + $0xc2] sm:$0xff]
        %v268 = vld [vmem:[%s186 + $0xca] sm:$0xff]
        %v269 = vld [vmem:[%s186 + $0xda] sm:$0xff]
        %v270 = vld [vmem:[%s186 + $0xe2] sm:$0xff]
        %v271 = vld [vmem:[%s186 + $0xf2] sm:$0xff]
        %v272 = vld [vmem:[%s186 + $0xfa] sm:$0xff]
        %v273 = vld [vmem:[%s186 + $0x10a] sm:$0xff]
        %v274 = vld [vmem:[%s186 + $0x112] sm:$0xff]
        %v275 = vld [vmem:[%s186 + $0x122] sm:$0xff]
        %v276 = vld [vmem:[%s186 + $0x12a] sm:$0xff]
        %v277 = vld [vmem:[%s186 + $0x13a] sm:$0xff]
        %v278 = vld [vmem:[%s186 + $0x142] sm:$0xff]
        %v279 = vld [vmem:[%s186 + $0x152] sm:$0xff]
        %v280 = vld [vmem:[%s186 + $0x15a] sm:$0xff]
        %v281 = vld [vmem:[%s186 + $0x16a] sm:$0xff]
        %v282 = vld [vmem:[%s186 + $0x172] sm:$0xff]
        %s283 = sadd.s32 %s184, 1
        %s284 = smul.u32 %s283, 24
        %s285 = scalar_lea.vmem %s182, %s284
        %v286 = vld [vmem:[%s285] sm:$0xff]
        %v287 = vld [vmem:[%s285 + $0x8] sm:$0xff]
        %v288 = vld [vmem:[%s285 + $0x18] sm:$0xff]
        %v289 = vld [vmem:[%s285 + $0x20] sm:$0xff]
        %v290 = vld [vmem:[%s285 + $0x30] sm:$0xff]
        %v291 = vld [vmem:[%s285 + $0x38] sm:$0xff]
        %v292 = vld [vmem:[%s285 + $0x48] sm:$0xff]
        %v293 = vld [vmem:[%s285 + $0x50] sm:$0xff]
        %v294 = vld [vmem:[%s285 + $0x60] sm:$0xff]
        %v295 = vld [vmem:[%s285 + $0x68] sm:$0xff]
        %v296 = vld [vmem:[%s285 + $0x78] sm:$0xff]
        %v297 = vld [vmem:[%s285 + $0x80] sm:$0xff]
        %v298 = vld [vmem:[%s285 + $0x90] sm:$0xff]
        %v299 = vld [vmem:[%s285 + $0x98] sm:$0xff]
        %v300 = vld [vmem:[%s285 + $0xa8] sm:$0xff]
        %v301 = vld [vmem:[%s285 + $0xb0] sm:$0xff]
        %v302 = vld [vmem:[%s285 + $0xc0] sm:$0xff]
        %v303 = vld [vmem:[%s285 + $0xc8] sm:$0xff]
        %v304 = vld [vmem:[%s285 + $0xd8] sm:$0xff]
        %v305 = vld [vmem:[%s285 + $0xe0] sm:$0xff]
        %v306 = vld [vmem:[%s285 + $0xf0] sm:$0xff]
        %v307 = vld [vmem:[%s285 + $0xf8] sm:$0xff]
        %v308 = vld [vmem:[%s285 + $0x108] sm:$0xff]
        %v309 = vld [vmem:[%s285 + $0x110] sm:$0xff]
        %v310 = vld [vmem:[%s285 + $0x120] sm:$0xff]
        %v311 = vld [vmem:[%s285 + $0x128] sm:$0xff]
        %v312 = vld [vmem:[%s285 + $0x138] sm:$0xff]
        %v313 = vld [vmem:[%s285 + $0x140] sm:$0xff]
        %v314 = vld [vmem:[%s285 + $0x150] sm:$0xff]
        %v315 = vld [vmem:[%s285 + $0x158] sm:$0xff]
        %v316 = vld [vmem:[%s285 + $0x168] sm:$0xff]
        %v317 = vld [vmem:[%s285 + $0x170] sm:$0xff]
        %v318 = vld [vmem:[%s285 + $0x1] sm:$0xff]
        %v319 = vld [vmem:[%s285 + $0x9] sm:$0xff]
        %v320 = vld [vmem:[%s285 + $0x19] sm:$0xff]
        %v321 = vld [vmem:[%s285 + $0x21] sm:$0xff]
        %v322 = vld [vmem:[%s285 + $0x31] sm:$0xff]
        %v323 = vld [vmem:[%s285 + $0x39] sm:$0xff]
        %v324 = vld [vmem:[%s285 + $0x49] sm:$0xff]
        %v325 = vld [vmem:[%s285 + $0x51] sm:$0xff]
        %v326 = vld [vmem:[%s285 + $0x61] sm:$0xff]
        %v327 = vld [vmem:[%s285 + $0x69] sm:$0xff]
        %v328 = vld [vmem:[%s285 + $0x79] sm:$0xff]
        %v329 = vld [vmem:[%s285 + $0x81] sm:$0xff]
        %v330 = vld [vmem:[%s285 + $0x91] sm:$0xff]
        %v331 = vld [vmem:[%s285 + $0x99] sm:$0xff]
        %v332 = vld [vmem:[%s285 + $0xa9] sm:$0xff]
        %v333 = vld [vmem:[%s285 + $0xb1] sm:$0xff]
        %v334 = vld [vmem:[%s285 + $0xc1] sm:$0xff]
        %v335 = vld [vmem:[%s285 + $0xc9] sm:$0xff]
        %v336 = vld [vmem:[%s285 + $0xd9] sm:$0xff]
        %v337 = vld [vmem:[%s285 + $0xe1] sm:$0xff]
        %v338 = vld [vmem:[%s285 + $0xf1] sm:$0xff]
        %v339 = vld [vmem:[%s285 + $0xf9] sm:$0xff]
        %v340 = vld [vmem:[%s285 + $0x109] sm:$0xff]
        %v341 = vld [vmem:[%s285 + $0x111] sm:$0xff]
        %v342 = vld [vmem:[%s285 + $0x121] sm:$0xff]
        %v343 = vld [vmem:[%s285 + $0x129] sm:$0xff]
        %v344 = vld [vmem:[%s285 + $0x139] sm:$0xff]
        %v345 = vld [vmem:[%s285 + $0x141] sm:$0xff]
        %v346 = vld [vmem:[%s285 + $0x151] sm:$0xff]
        %v347 = vld [vmem:[%s285 + $0x159] sm:$0xff]
        %v348 = vld [vmem:[%s285 + $0x169] sm:$0xff]
        %v349 = vld [vmem:[%s285 + $0x171] sm:$0xff]
        %v350 = vld [vmem:[%s285 + $0x2] sm:$0xff]
        %v351 = vld [vmem:[%s285 + $0xa] sm:$0xff]
        %v352 = vld [vmem:[%s285 + $0x1a] sm:$0xff]
        %v353 = vld [vmem:[%s285 + $0x22] sm:$0xff]
        %v354 = vld [vmem:[%s285 + $0x32] sm:$0xff]
        %v355 = vld [vmem:[%s285 + $0x3a] sm:$0xff]
        %v356 = vld [vmem:[%s285 + $0x4a] sm:$0xff]
        %v357 = vld [vmem:[%s285 + $0x52] sm:$0xff]
        %v358 = vld [vmem:[%s285 + $0x62] sm:$0xff]
        %v359 = vld [vmem:[%s285 + $0x6a] sm:$0xff]
        %v360 = vld [vmem:[%s285 + $0x7a] sm:$0xff]
        %v361 = vld [vmem:[%s285 + $0x82] sm:$0xff]
        %v362 = vld [vmem:[%s285 + $0x92] sm:$0xff]
        %v363 = vld [vmem:[%s285 + $0x9a] sm:$0xff]
        %v364 = vld [vmem:[%s285 + $0xaa] sm:$0xff]
        %v365 = vld [vmem:[%s285 + $0xb2] sm:$0xff]
        %v366 = vld [vmem:[%s285 + $0xc2] sm:$0xff]
        %v367 = vld [vmem:[%s285 + $0xca] sm:$0xff]
        %v368 = vld [vmem:[%s285 + $0xda] sm:$0xff]
        %v369 = vld [vmem:[%s285 + $0xe2] sm:$0xff]
        %v370 = vld [vmem:[%s285 + $0xf2] sm:$0xff]
        %v371 = vld [vmem:[%s285 + $0xfa] sm:$0xff]
        %v372 = vld [vmem:[%s285 + $0x10a] sm:$0xff]
        %v373 = vld [vmem:[%s285 + $0x112] sm:$0xff]
        %v374 = vld [vmem:[%s285 + $0x122] sm:$0xff]
        %v375 = vld [vmem:[%s285 + $0x12a] sm:$0xff]
        %v376 = vld [vmem:[%s285 + $0x13a] sm:$0xff]
        %v377 = vld [vmem:[%s285 + $0x142] sm:$0xff]
        %v378 = vld [vmem:[%s285 + $0x152] sm:$0xff]
        %v379 = vld [vmem:[%s285 + $0x15a] sm:$0xff]
        %v380 = vld [vmem:[%s285 + $0x16a] sm:$0xff]
        %v381 = vld [vmem:[%s285 + $0x172] sm:$0xff]
        %s382 = sadd.s32 %s184, 2
        %s383 = smul.u32 %s382, 24
        %s384 = scalar_lea.vmem %s182, %s383
        %v385 = vld [vmem:[%s384] sm:$0xff]
        %v386 = vld [vmem:[%s384 + $0x8] sm:$0xff]
        %v387 = vld [vmem:[%s384 + $0x18] sm:$0xff]
        %v388 = vld [vmem:[%s384 + $0x20] sm:$0xff]
        %v389 = vld [vmem:[%s384 + $0x30] sm:$0xff]
        %v390 = vld [vmem:[%s384 + $0x38] sm:$0xff]
        %v391 = vld [vmem:[%s384 + $0x48] sm:$0xff]
        %v392 = vld [vmem:[%s384 + $0x50] sm:$0xff]
        %v393 = vld [vmem:[%s384 + $0x60] sm:$0xff]
        %v394 = vld [vmem:[%s384 + $0x68] sm:$0xff]
        %v395 = vld [vmem:[%s384 + $0x78] sm:$0xff]
        %v396 = vld [vmem:[%s384 + $0x80] sm:$0xff]
        %v397 = vld [vmem:[%s384 + $0x90] sm:$0xff]
        %v398 = vld [vmem:[%s384 + $0x98] sm:$0xff]
        %v399 = vld [vmem:[%s384 + $0xa8] sm:$0xff]
        %v400 = vld [vmem:[%s384 + $0xb0] sm:$0xff]
        %v401 = vld [vmem:[%s384 + $0xc0] sm:$0xff]
        %v402 = vld [vmem:[%s384 + $0xc8] sm:$0xff]
        %v403 = vld [vmem:[%s384 + $0xd8] sm:$0xff]
        %v404 = vld [vmem:[%s384 + $0xe0] sm:$0xff]
        %v405 = vld [vmem:[%s384 + $0xf0] sm:$0xff]
        %v406 = vld [vmem:[%s384 + $0xf8] sm:$0xff]
        %v407 = vld [vmem:[%s384 + $0x108] sm:$0xff]
        %v408 = vld [vmem:[%s384 + $0x110] sm:$0xff]
        %v409 = vld [vmem:[%s384 + $0x120] sm:$0xff]
        %v410 = vld [vmem:[%s384 + $0x128] sm:$0xff]
        %v411 = vld [vmem:[%s384 + $0x138] sm:$0xff]
        %v412 = vld [vmem:[%s384 + $0x140] sm:$0xff]
        %v413 = vld [vmem:[%s384 + $0x150] sm:$0xff]
        %v414 = vld [vmem:[%s384 + $0x158] sm:$0xff]
        %v415 = vld [vmem:[%s384 + $0x168] sm:$0xff]
        %v416 = vld [vmem:[%s384 + $0x170] sm:$0xff]
        %v417 = vld [vmem:[%s384 + $0x1] sm:$0xff]
        %v418 = vld [vmem:[%s384 + $0x9] sm:$0xff]
        %v419 = vld [vmem:[%s384 + $0x19] sm:$0xff]
        %v420 = vld [vmem:[%s384 + $0x21] sm:$0xff]
        %v421 = vld [vmem:[%s384 + $0x31] sm:$0xff]
        %v422 = vld [vmem:[%s384 + $0x39] sm:$0xff]
        %v423 = vld [vmem:[%s384 + $0x49] sm:$0xff]
        %v424 = vld [vmem:[%s384 + $0x51] sm:$0xff]
        %v425 = vld [vmem:[%s384 + $0x61] sm:$0xff]
        %v426 = vld [vmem:[%s384 + $0x69] sm:$0xff]
        %v427 = vld [vmem:[%s384 + $0x79] sm:$0xff]
        %v428 = vld [vmem:[%s384 + $0x81] sm:$0xff]
        %v429 = vld [vmem:[%s384 + $0x91] sm:$0xff]
        %v430 = vld [vmem:[%s384 + $0x99] sm:$0xff]
        %v431 = vld [vmem:[%s384 + $0xa9] sm:$0xff]
        %v432 = vld [vmem:[%s384 + $0xb1] sm:$0xff]
        %v433 = vld [vmem:[%s384 + $0xc1] sm:$0xff]
        %v434 = vld [vmem:[%s384 + $0xc9] sm:$0xff]
        %v435 = vld [vmem:[%s384 + $0xd9] sm:$0xff]
        %v436 = vld [vmem:[%s384 + $0xe1] sm:$0xff]
        %v437 = vld [vmem:[%s384 + $0xf1] sm:$0xff]
        %v438 = vld [vmem:[%s384 + $0xf9] sm:$0xff]
        %v439 = vld [vmem:[%s384 + $0x109] sm:$0xff]
        %v440 = vld [vmem:[%s384 + $0x111] sm:$0xff]
        %v441 = vld [vmem:[%s384 + $0x121] sm:$0xff]
        %v442 = vld [vmem:[%s384 + $0x129] sm:$0xff]
        %v443 = vld [vmem:[%s384 + $0x139] sm:$0xff]
        %v444 = vld [vmem:[%s384 + $0x141] sm:$0xff]
        %v445 = vld [vmem:[%s384 + $0x151] sm:$0xff]
        %v446 = vld [vmem:[%s384 + $0x159] sm:$0xff]
        %v447 = vld [vmem:[%s384 + $0x169] sm:$0xff]
        %v448 = vld [vmem:[%s384 + $0x171] sm:$0xff]
        %v449 = vld [vmem:[%s384 + $0x2] sm:$0xff]
        %v450 = vld [vmem:[%s384 + $0xa] sm:$0xff]
        %v451 = vld [vmem:[%s384 + $0x1a] sm:$0xff]
        %v452 = vld [vmem:[%s384 + $0x22] sm:$0xff]
        %v453 = vld [vmem:[%s384 + $0x32] sm:$0xff]
        %v454 = vld [vmem:[%s384 + $0x3a] sm:$0xff]
        %v455 = vld [vmem:[%s384 + $0x4a] sm:$0xff]
        %v456 = vld [vmem:[%s384 + $0x52] sm:$0xff]
        %v457 = vld [vmem:[%s384 + $0x62] sm:$0xff]
        %v458 = vld [vmem:[%s384 + $0x6a] sm:$0xff]
        %v459 = vld [vmem:[%s384 + $0x7a] sm:$0xff]
        %v460 = vld [vmem:[%s384 + $0x82] sm:$0xff]
        %v461 = vld [vmem:[%s384 + $0x92] sm:$0xff]
        %v462 = vld [vmem:[%s384 + $0x9a] sm:$0xff]
        %v463 = vld [vmem:[%s384 + $0xaa] sm:$0xff]
        %v464 = vld [vmem:[%s384 + $0xb2] sm:$0xff]
        %v465 = vld [vmem:[%s384 + $0xc2] sm:$0xff]
        %v466 = vld [vmem:[%s384 + $0xca] sm:$0xff]
        %v467 = vld [vmem:[%s384 + $0xda] sm:$0xff]
        %v468 = vld [vmem:[%s384 + $0xe2] sm:$0xff]
        %v469 = vld [vmem:[%s384 + $0xf2] sm:$0xff]
        %v470 = vld [vmem:[%s384 + $0xfa] sm:$0xff]
        %v471 = vld [vmem:[%s384 + $0x10a] sm:$0xff]
        %v472 = vld [vmem:[%s384 + $0x112] sm:$0xff]
        %v473 = vld [vmem:[%s384 + $0x122] sm:$0xff]
        %v474 = vld [vmem:[%s384 + $0x12a] sm:$0xff]
        %v475 = vld [vmem:[%s384 + $0x13a] sm:$0xff]
        %v476 = vld [vmem:[%s384 + $0x142] sm:$0xff]
        %v477 = vld [vmem:[%s384 + $0x152] sm:$0xff]
        %v478 = vld [vmem:[%s384 + $0x15a] sm:$0xff]
        %v479 = vld [vmem:[%s384 + $0x16a] sm:$0xff]
        %v480 = vld [vmem:[%s384 + $0x172] sm:$0xff]
        %vm481 = vcmask 31744
        %482 = vst.msk [vmem:[#allocation2] sm:$0xff] %vm481, %v187
        %483 = vst.msk [vmem:[#allocation2 + $0x8] sm:$0xff] %vm481, %v188
        %484 = vst.msk [vmem:[#allocation2 + $0x10] sm:$0xff] %vm481, %v189
        %485 = vst.msk [vmem:[#allocation2 + $0x18] sm:$0xff] %vm481, %v190
        %486 = vst.msk [vmem:[#allocation2 + $0x20] sm:$0xff] %vm481, %v191
        %487 = vst.msk [vmem:[#allocation2 + $0x28] sm:$0xff] %vm481, %v192
        %488 = vst.msk [vmem:[#allocation2 + $0x30] sm:$0xff] %vm481, %v193
        %489 = vst.msk [vmem:[#allocation2 + $0x38] sm:$0xff] %vm481, %v194
        %490 = vst.msk [vmem:[#allocation2 + $0x40] sm:$0xff] %vm481, %v195
        %491 = vst.msk [vmem:[#allocation2 + $0x48] sm:$0xff] %vm481, %v196
        %492 = vst.msk [vmem:[#allocation2 + $0x50] sm:$0xff] %vm481, %v197
        %493 = vst.msk [vmem:[#allocation2 + $0x58] sm:$0xff] %vm481, %v198
        %494 = vst.msk [vmem:[#allocation2 + $0x60] sm:$0xff] %vm481, %v199
        %495 = vst.msk [vmem:[#allocation2 + $0x68] sm:$0xff] %vm481, %v200
        %496 = vst.msk [vmem:[#allocation2 + $0x70] sm:$0xff] %vm481, %v201
        %497 = vst.msk [vmem:[#allocation2 + $0x78] sm:$0xff] %vm481, %v202
        %498 = vst.msk [vmem:[#allocation2 + $0x80] sm:$0xff] %vm481, %v203
        %499 = vst.msk [vmem:[#allocation2 + $0x88] sm:$0xff] %vm481, %v204
        %500 = vst.msk [vmem:[#allocation2 + $0x90] sm:$0xff] %vm481, %v205
        %501 = vst.msk [vmem:[#allocation2 + $0x98] sm:$0xff] %vm481, %v206
        %502 = vst.msk [vmem:[#allocation2 + $0xa0] sm:$0xff] %vm481, %v207
        %503 = vst.msk [vmem:[#allocation2 + $0xa8] sm:$0xff] %vm481, %v208
        %504 = vst.msk [vmem:[#allocation2 + $0xb0] sm:$0xff] %vm481, %v209
        %505 = vst.msk [vmem:[#allocation2 + $0xb8] sm:$0xff] %vm481, %v210
        %506 = vst.msk [vmem:[#allocation2 + $0xc0] sm:$0xff] %vm481, %v211
        %507 = vst.msk [vmem:[#allocation2 + $0xc8] sm:$0xff] %vm481, %v212
        %508 = vst.msk [vmem:[#allocation2 + $0xd0] sm:$0xff] %vm481, %v213
        %509 = vst.msk [vmem:[#allocation2 + $0xd8] sm:$0xff] %vm481, %v214
        %510 = vst.msk [vmem:[#allocation2 + $0xe0] sm:$0xff] %vm481, %v215
        %511 = vst.msk [vmem:[#allocation2 + $0xe8] sm:$0xff] %vm481, %v216
        %512 = vst.msk [vmem:[#allocation2 + $0xf0] sm:$0xff] %vm481, %v217
        %513 = vst.msk [vmem:[#allocation2 + $0xf8] sm:$0xff] %vm481, %v218
        %546 = vrot.lane.b32.xlu0 %v219, 4
        %v547 = vpop.permute.xlu0 %546
        %548 = vrot.lane.b32.xlu0 %v220, 4
        %v549 = vpop.permute.xlu0 %548
        %550 = vrot.lane.b32.xlu0 %v221, 4
        %v551 = vpop.permute.xlu0 %550
        %552 = vrot.lane.b32.xlu0 %v222, 4
        %v553 = vpop.permute.xlu0 %552
        %554 = vrot.lane.b32.xlu0 %v223, 4
        %v555 = vpop.permute.xlu0 %554
        %556 = vrot.lane.b32.xlu0 %v224, 4
        %v557 = vpop.permute.xlu0 %556
        %558 = vrot.lane.b32.xlu0 %v225, 4
        %v559 = vpop.permute.xlu0 %558
        %560 = vrot.lane.b32.xlu0 %v226, 4
        %v561 = vpop.permute.xlu0 %560
        %562 = vrot.lane.b32.xlu0 %v227, 4
        %v563 = vpop.permute.xlu0 %562
        %564 = vrot.lane.b32.xlu0 %v228, 4
        %v565 = vpop.permute.xlu0 %564
        %566 = vrot.lane.b32.xlu0 %v229, 4
        %v567 = vpop.permute.xlu0 %566
        %568 = vrot.lane.b32.xlu0 %v230, 4
        %v569 = vpop.permute.xlu0 %568
        %570 = vrot.lane.b32.xlu0 %v231, 4
        %v571 = vpop.permute.xlu0 %570
        %572 = vrot.lane.b32.xlu0 %v232, 4
        %v573 = vpop.permute.xlu0 %572
        %574 = vrot.lane.b32.xlu0 %v233, 4
        %v575 = vpop.permute.xlu0 %574
        %576 = vrot.lane.b32.xlu0 %v234, 4
        %v577 = vpop.permute.xlu0 %576
        %578 = vrot.lane.b32.xlu0 %v235, 4
        %v579 = vpop.permute.xlu0 %578
        %580 = vrot.lane.b32.xlu0 %v236, 4
        %v581 = vpop.permute.xlu0 %580
        %582 = vrot.lane.b32.xlu0 %v237, 4
        %v583 = vpop.permute.xlu0 %582
        %584 = vrot.lane.b32.xlu0 %v238, 4
        %v585 = vpop.permute.xlu0 %584
        %586 = vrot.lane.b32.xlu0 %v239, 4
        %v587 = vpop.permute.xlu0 %586
        %588 = vrot.lane.b32.xlu0 %v240, 4
        %v589 = vpop.permute.xlu0 %588
        %590 = vrot.lane.b32.xlu0 %v241, 4
        %v591 = vpop.permute.xlu0 %590
        %592 = vrot.lane.b32.xlu0 %v242, 4
        %v593 = vpop.permute.xlu0 %592
        %594 = vrot.lane.b32.xlu0 %v243, 4
        %v595 = vpop.permute.xlu0 %594
        %596 = vrot.lane.b32.xlu0 %v244, 4
        %v597 = vpop.permute.xlu0 %596
        %598 = vrot.lane.b32.xlu0 %v245, 4
        %v599 = vpop.permute.xlu0 %598
        %600 = vrot.lane.b32.xlu0 %v246, 4
        %v601 = vpop.permute.xlu0 %600
        %602 = vrot.lane.b32.xlu0 %v247, 4
        %v603 = vpop.permute.xlu0 %602
        %604 = vrot.lane.b32.xlu0 %v248, 4
        %v605 = vpop.permute.xlu0 %604
        %606 = vrot.lane.b32.xlu0 %v249, 4
        %v607 = vpop.permute.xlu0 %606
        %608 = vrot.lane.b32.xlu0 %v250, 4
        %v609 = vpop.permute.xlu0 %608
        %vm642 = vcmask 64544
        %643 = vst.msk [vmem:[#allocation2] sm:$0xff] %vm642, %v547
        %644 = vst.msk [vmem:[#allocation2 + $0x8] sm:$0xff] %vm642, %v549
        %645 = vst.msk [vmem:[#allocation2 + $0x10] sm:$0xff] %vm642, %v551
        %646 = vst.msk [vmem:[#allocation2 + $0x18] sm:$0xff] %vm642, %v553
        %647 = vst.msk [vmem:[#allocation2 + $0x20] sm:$0xff] %vm642, %v555
        %648 = vst.msk [vmem:[#allocation2 + $0x28] sm:$0xff] %vm642, %v557
        %649 = vst.msk [vmem:[#allocation2 + $0x30] sm:$0xff] %vm642, %v559
        %650 = vst.msk [vmem:[#allocation2 + $0x38] sm:$0xff] %vm642, %v561
        %651 = vst.msk [vmem:[#allocation2 + $0x40] sm:$0xff] %vm642, %v563
        %652 = vst.msk [vmem:[#allocation2 + $0x48] sm:$0xff] %vm642, %v565
        %653 = vst.msk [vmem:[#allocation2 + $0x50] sm:$0xff] %vm642, %v567
        %654 = vst.msk [vmem:[#allocation2 + $0x58] sm:$0xff] %vm642, %v569
        %655 = vst.msk [vmem:[#allocation2 + $0x60] sm:$0xff] %vm642, %v571
        %656 = vst.msk [vmem:[#allocation2 + $0x68] sm:$0xff] %vm642, %v573
        %657 = vst.msk [vmem:[#allocation2 + $0x70] sm:$0xff] %vm642, %v575
        %658 = vst.msk [vmem:[#allocation2 + $0x78] sm:$0xff] %vm642, %v577
        %659 = vst.msk [vmem:[#allocation2 + $0x80] sm:$0xff] %vm642, %v579
        %660 = vst.msk [vmem:[#allocation2 + $0x88] sm:$0xff] %vm642, %v581
        %661 = vst.msk [vmem:[#allocation2 + $0x90] sm:$0xff] %vm642, %v583
        %662 = vst.msk [vmem:[#allocation2 + $0x98] sm:$0xff] %vm642, %v585
        %663 = vst.msk [vmem:[#allocation2 + $0xa0] sm:$0xff] %vm642, %v587
        %664 = vst.msk [vmem:[#allocation2 + $0xa8] sm:$0xff] %vm642, %v589
        %665 = vst.msk [vmem:[#allocation2 + $0xb0] sm:$0xff] %vm642, %v591
        %666 = vst.msk [vmem:[#allocation2 + $0xb8] sm:$0xff] %vm642, %v593
        %667 = vst.msk [vmem:[#allocation2 + $0xc0] sm:$0xff] %vm642, %v595
        %668 = vst.msk [vmem:[#allocation2 + $0xc8] sm:$0xff] %vm642, %v597
        %669 = vst.msk [vmem:[#allocation2 + $0xd0] sm:$0xff] %vm642, %v599
        %670 = vst.msk [vmem:[#allocation2 + $0xd8] sm:$0xff] %vm642, %v601
        %671 = vst.msk [vmem:[#allocation2 + $0xe0] sm:$0xff] %vm642, %v603
        %672 = vst.msk [vmem:[#allocation2 + $0xe8] sm:$0xff] %vm642, %v605
        %673 = vst.msk [vmem:[#allocation2 + $0xf0] sm:$0xff] %vm642, %v607
        %674 = vst.msk [vmem:[#allocation2 + $0xf8] sm:$0xff] %vm642, %v609
        %707 = vrot.lane.b32.xlu0 %v251, 8
        %v708 = vpop.permute.xlu0 %707
        %709 = vrot.lane.b32.xlu0 %v252, 8
        %v710 = vpop.permute.xlu0 %709
        %711 = vrot.lane.b32.xlu0 %v253, 8
        %v712 = vpop.permute.xlu0 %711
        %713 = vrot.lane.b32.xlu0 %v254, 8
        %v714 = vpop.permute.xlu0 %713
        %715 = vrot.lane.b32.xlu0 %v255, 8
        %v716 = vpop.permute.xlu0 %715
        %717 = vrot.lane.b32.xlu0 %v256, 8
        %v718 = vpop.permute.xlu0 %717
        %719 = vrot.lane.b32.xlu0 %v257, 8
        %v720 = vpop.permute.xlu0 %719
        %721 = vrot.lane.b32.xlu0 %v258, 8
        %v722 = vpop.permute.xlu0 %721
        %723 = vrot.lane.b32.xlu0 %v259, 8
        %v724 = vpop.permute.xlu0 %723
        %725 = vrot.lane.b32.xlu0 %v260, 8
        %v726 = vpop.permute.xlu0 %725
        %727 = vrot.lane.b32.xlu0 %v261, 8
        %v728 = vpop.permute.xlu0 %727
        %729 = vrot.lane.b32.xlu0 %v262, 8
        %v730 = vpop.permute.xlu0 %729
        %731 = vrot.lane.b32.xlu0 %v263, 8
        %v732 = vpop.permute.xlu0 %731
        %733 = vrot.lane.b32.xlu0 %v264, 8
        %v734 = vpop.permute.xlu0 %733
        %735 = vrot.lane.b32.xlu0 %v265, 8
        %v736 = vpop.permute.xlu0 %735
        %737 = vrot.lane.b32.xlu0 %v266, 8
        %v738 = vpop.permute.xlu0 %737
        %739 = vrot.lane.b32.xlu0 %v267, 8
        %v740 = vpop.permute.xlu0 %739
        %741 = vrot.lane.b32.xlu0 %v268, 8
        %v742 = vpop.permute.xlu0 %741
        %743 = vrot.lane.b32.xlu0 %v269, 8
        %v744 = vpop.permute.xlu0 %743
        %745 = vrot.lane.b32.xlu0 %v270, 8
        %v746 = vpop.permute.xlu0 %745
        %747 = vrot.lane.b32.xlu0 %v271, 8
        %v748 = vpop.permute.xlu0 %747
        %749 = vrot.lane.b32.xlu0 %v272, 8
        %v750 = vpop.permute.xlu0 %749
        %751 = vrot.lane.b32.xlu0 %v273, 8
        %v752 = vpop.permute.xlu0 %751
        %753 = vrot.lane.b32.xlu0 %v274, 8
        %v754 = vpop.permute.xlu0 %753
        %755 = vrot.lane.b32.xlu0 %v275, 8
        %v756 = vpop.permute.xlu0 %755
        %757 = vrot.lane.b32.xlu0 %v276, 8
        %v758 = vpop.permute.xlu0 %757
        %759 = vrot.lane.b32.xlu0 %v277, 8
        %v760 = vpop.permute.xlu0 %759
        %761 = vrot.lane.b32.xlu0 %v278, 8
        %v762 = vpop.permute.xlu0 %761
        %763 = vrot.lane.b32.xlu0 %v279, 8
        %v764 = vpop.permute.xlu0 %763
        %765 = vrot.lane.b32.xlu0 %v280, 8
        %v766 = vpop.permute.xlu0 %765
        %767 = vrot.lane.b32.xlu0 %v281, 8
        %v768 = vpop.permute.xlu0 %767
        %769 = vrot.lane.b32.xlu0 %v282, 8
        %v770 = vpop.permute.xlu0 %769
        %vm803 = vcmask 97344
        %804 = vst.msk [vmem:[#allocation2] sm:$0xff] %vm803, %v708
        %805 = vst.msk [vmem:[#allocation2 + $0x8] sm:$0xff] %vm803, %v710
        %806 = vst.msk [vmem:[#allocation2 + $0x10] sm:$0xff] %vm803, %v712
        %807 = vst.msk [vmem:[#allocation2 + $0x18] sm:$0xff] %vm803, %v714
        %808 = vst.msk [vmem:[#allocation2 + $0x20] sm:$0xff] %vm803, %v716
        %809 = vst.msk [vmem:[#allocation2 + $0x28] sm:$0xff] %vm803, %v718
        %810 = vst.msk [vmem:[#allocation2 + $0x30] sm:$0xff] %vm803, %v720
        %811 = vst.msk [vmem:[#allocation2 + $0x38] sm:$0xff] %vm803, %v722
        %812 = vst.msk [vmem:[#allocation2 + $0x40] sm:$0xff] %vm803, %v724
        %813 = vst.msk [vmem:[#allocation2 + $0x48] sm:$0xff] %vm803, %v726
        %814 = vst.msk [vmem:[#allocation2 + $0x50] sm:$0xff] %vm803, %v728
        %815 = vst.msk [vmem:[#allocation2 + $0x58] sm:$0xff] %vm803, %v730
        %816 = vst.msk [vmem:[#allocation2 + $0x60] sm:$0xff] %vm803, %v732
        %817 = vst.msk [vmem:[#allocation2 + $0x68] sm:$0xff] %vm803, %v734
        %818 = vst.msk [vmem:[#allocation2 + $0x70] sm:$0xff] %vm803, %v736
        %819 = vst.msk [vmem:[#allocation2 + $0x78] sm:$0xff] %vm803, %v738
        %820 = vst.msk [vmem:[#allocation2 + $0x80] sm:$0xff] %vm803, %v740
        %821 = vst.msk [vmem:[#allocation2 + $0x88] sm:$0xff] %vm803, %v742
        %822 = vst.msk [vmem:[#allocation2 + $0x90] sm:$0xff] %vm803, %v744
        %823 = vst.msk [vmem:[#allocation2 + $0x98] sm:$0xff] %vm803, %v746
        %824 = vst.msk [vmem:[#allocation2 + $0xa0] sm:$0xff] %vm803, %v748
        %825 = vst.msk [vmem:[#allocation2 + $0xa8] sm:$0xff] %vm803, %v750
        %826 = vst.msk [vmem:[#allocation2 + $0xb0] sm:$0xff] %vm803, %v752
        %827 = vst.msk [vmem:[#allocation2 + $0xb8] sm:$0xff] %vm803, %v754
        %828 = vst.msk [vmem:[#allocation2 + $0xc0] sm:$0xff] %vm803, %v756
        %829 = vst.msk [vmem:[#allocation2 + $0xc8] sm:$0xff] %vm803, %v758
        %830 = vst.msk [vmem:[#allocation2 + $0xd0] sm:$0xff] %vm803, %v760
        %831 = vst.msk [vmem:[#allocation2 + $0xd8] sm:$0xff] %vm803, %v762
        %832 = vst.msk [vmem:[#allocation2 + $0xe0] sm:$0xff] %vm803, %v764
        %833 = vst.msk [vmem:[#allocation2 + $0xe8] sm:$0xff] %vm803, %v766
        %834 = vst.msk [vmem:[#allocation2 + $0xf0] sm:$0xff] %vm803, %v768
        %835 = vst.msk [vmem:[#allocation2 + $0xf8] sm:$0xff] %vm803, %v770
        %868 = vrot.lane.b32.xlu0 %v286, 12
        %v869 = vpop.permute.xlu0 %868
        %870 = vrot.lane.b32.xlu0 %v287, 12
        %v871 = vpop.permute.xlu0 %870
        %872 = vrot.lane.b32.xlu0 %v288, 12
        %v873 = vpop.permute.xlu0 %872
        %874 = vrot.lane.b32.xlu0 %v289, 12
        %v875 = vpop.permute.xlu0 %874
        %876 = vrot.lane.b32.xlu0 %v290, 12
        %v877 = vpop.permute.xlu0 %876
        %878 = vrot.lane.b32.xlu0 %v291, 12
        %v879 = vpop.permute.xlu0 %878
        %880 = vrot.lane.b32.xlu0 %v292, 12
        %v881 = vpop.permute.xlu0 %880
        %882 = vrot.lane.b32.xlu0 %v293, 12
        %v883 = vpop.permute.xlu0 %882
        %884 = vrot.lane.b32.xlu0 %v294, 12
        %v885 = vpop.permute.xlu0 %884
        %886 = vrot.lane.b32.xlu0 %v295, 12
        %v887 = vpop.permute.xlu0 %886
        %888 = vrot.lane.b32.xlu0 %v296, 12
        %v889 = vpop.permute.xlu0 %888
        %890 = vrot.lane.b32.xlu0 %v297, 12
        %v891 = vpop.permute.xlu0 %890
        %892 = vrot.lane.b32.xlu0 %v298, 12
        %v893 = vpop.permute.xlu0 %892
        %894 = vrot.lane.b32.xlu0 %v299, 12
        %v895 = vpop.permute.xlu0 %894
        %896 = vrot.lane.b32.xlu0 %v300, 12
        %v897 = vpop.permute.xlu0 %896
        %898 = vrot.lane.b32.xlu0 %v301, 12
        %v899 = vpop.permute.xlu0 %898
        %900 = vrot.lane.b32.xlu0 %v302, 12
        %v901 = vpop.permute.xlu0 %900
        %902 = vrot.lane.b32.xlu0 %v303, 12
        %v903 = vpop.permute.xlu0 %902
        %904 = vrot.lane.b32.xlu0 %v304, 12
        %v905 = vpop.permute.xlu0 %904
        %906 = vrot.lane.b32.xlu0 %v305, 12
        %v907 = vpop.permute.xlu0 %906
        %908 = vrot.lane.b32.xlu0 %v306, 12
        %v909 = vpop.permute.xlu0 %908
        %910 = vrot.lane.b32.xlu0 %v307, 12
        %v911 = vpop.permute.xlu0 %910
        %912 = vrot.lane.b32.xlu0 %v308, 12
        %v913 = vpop.permute.xlu0 %912
        %914 = vrot.lane.b32.xlu0 %v309, 12
        %v915 = vpop.permute.xlu0 %914
        %916 = vrot.lane.b32.xlu0 %v310, 12
        %v917 = vpop.permute.xlu0 %916
        %918 = vrot.lane.b32.xlu0 %v311, 12
        %v919 = vpop.permute.xlu0 %918
        %920 = vrot.lane.b32.xlu0 %v312, 12
        %v921 = vpop.permute.xlu0 %920
        %922 = vrot.lane.b32.xlu0 %v313, 12
        %v923 = vpop.permute.xlu0 %922
        %924 = vrot.lane.b32.xlu0 %v314, 12
        %v925 = vpop.permute.xlu0 %924
        %926 = vrot.lane.b32.xlu0 %v315, 12
        %v927 = vpop.permute.xlu0 %926
        %928 = vrot.lane.b32.xlu0 %v316, 12
        %v929 = vpop.permute.xlu0 %928
        %930 = vrot.lane.b32.xlu0 %v317, 12
        %v931 = vpop.permute.xlu0 %930
        %vm964 = vcmask 130144
        %965 = vst.msk [vmem:[#allocation2] sm:$0xff] %vm964, %v869
        %966 = vst.msk [vmem:[#allocation2 + $0x8] sm:$0xff] %vm964, %v871
        %967 = vst.msk [vmem:[#allocation2 + $0x10] sm:$0xff] %vm964, %v873
        %968 = vst.msk [vmem:[#allocation2 + $0x18] sm:$0xff] %vm964, %v875
        %969 = vst.msk [vmem:[#allocation2 + $0x20] sm:$0xff] %vm964, %v877
        %970 = vst.msk [vmem:[#allocation2 + $0x28] sm:$0xff] %vm964, %v879
        %971 = vst.msk [vmem:[#allocation2 + $0x30] sm:$0xff] %vm964, %v881
        %972 = vst.msk [vmem:[#allocation2 + $0x38] sm:$0xff] %vm964, %v883
        %973 = vst.msk [vmem:[#allocation2 + $0x40] sm:$0xff] %vm964, %v885
        %974 = vst.msk [vmem:[#allocation2 + $0x48] sm:$0xff] %vm964, %v887
        %975 = vst.msk [vmem:[#allocation2 + $0x50] sm:$0xff] %vm964, %v889
        %976 = vst.msk [vmem:[#allocation2 + $0x58] sm:$0xff] %vm964, %v891
        %977 = vst.msk [vmem:[#allocation2 + $0x60] sm:$0xff] %vm964, %v893
        %978 = vst.msk [vmem:[#allocation2 + $0x68] sm:$0xff] %vm964, %v895
        %979 = vst.msk [vmem:[#allocation2 + $0x70] sm:$0xff] %vm964, %v897
        %980 = vst.msk [vmem:[#allocation2 + $0x78] sm:$0xff] %vm964, %v899
        %981 = vst.msk [vmem:[#allocation2 + $0x80] sm:$0xff] %vm964, %v901
        %982 = vst.msk [vmem:[#allocation2 + $0x88] sm:$0xff] %vm964, %v903
        %983 = vst.msk [vmem:[#allocation2 + $0x90] sm:$0xff] %vm964, %v905
        %984 = vst.msk [vmem:[#allocation2 + $0x98] sm:$0xff] %vm964, %v907
        %985 = vst.msk [vmem:[#allocation2 + $0xa0] sm:$0xff] %vm964, %v909
        %986 = vst.msk [vmem:[#allocation2 + $0xa8] sm:$0xff] %vm964, %v911
        %987 = vst.msk [vmem:[#allocation2 + $0xb0] sm:$0xff] %vm964, %v913
        %988 = vst.msk [vmem:[#allocation2 + $0xb8] sm:$0xff] %vm964, %v915
        %989 = vst.msk [vmem:[#allocation2 + $0xc0] sm:$0xff] %vm964, %v917
        %990 = vst.msk [vmem:[#allocation2 + $0xc8] sm:$0xff] %vm964, %v919
        %991 = vst.msk [vmem:[#allocation2 + $0xd0] sm:$0xff] %vm964, %v921
        %992 = vst.msk [vmem:[#allocation2 + $0xd8] sm:$0xff] %vm964, %v923
        %993 = vst.msk [vmem:[#allocation2 + $0xe0] sm:$0xff] %vm964, %v925
        %994 = vst.msk [vmem:[#allocation2 + $0xe8] sm:$0xff] %vm964, %v927
        %995 = vst.msk [vmem:[#allocation2 + $0xf0] sm:$0xff] %vm964, %v929
        %996 = vst.msk [vmem:[#allocation2 + $0xf8] sm:$0xff] %vm964, %v931
        %1029 = vrot.lane.b32.xlu0 %v318, 16
        %v1030 = vpop.permute.xlu0 %1029
        %1031 = vrot.lane.b32.xlu0 %v319, 16
        %v1032 = vpop.permute.xlu0 %1031
        %1033 = vrot.lane.b32.xlu0 %v320, 16
        %v1034 = vpop.permute.xlu0 %1033
        %1035 = vrot.lane.b32.xlu0 %v321, 16
        %v1036 = vpop.permute.xlu0 %1035
        %1037 = vrot.lane.b32.xlu0 %v322, 16
        %v1038 = vpop.permute.xlu0 %1037
        %1039 = vrot.lane.b32.xlu0 %v323, 16
        %v1040 = vpop.permute.xlu0 %1039
        %1041 = vrot.lane.b32.xlu0 %v324, 16
        %v1042 = vpop.permute.xlu0 %1041
        %1043 = vrot.lane.b32.xlu0 %v325, 16
        %v1044 = vpop.permute.xlu0 %1043
        %1045 = vrot.lane.b32.xlu0 %v326, 16
        %v1046 = vpop.permute.xlu0 %1045
        %1047 = vrot.lane.b32.xlu0 %v327, 16
        %v1048 = vpop.permute.xlu0 %1047
        %1049 = vrot.lane.b32.xlu0 %v328, 16
        %v1050 = vpop.permute.xlu0 %1049
        %1051 = vrot.lane.b32.xlu0 %v329, 16
        %v1052 = vpop.permute.xlu0 %1051
        %1053 = vrot.lane.b32.xlu0 %v330, 16
        %v1054 = vpop.permute.xlu0 %1053
        %1055 = vrot.lane.b32.xlu0 %v331, 16
        %v1056 = vpop.permute.xlu0 %1055
        %1057 = vrot.lane.b32.xlu0 %v332, 16
        %v1058 = vpop.permute.xlu0 %1057
        %1059 = vrot.lane.b32.xlu0 %v333, 16
        %v1060 = vpop.permute.xlu0 %1059
        %1061 = vrot.lane.b32.xlu0 %v334, 16
        %v1062 = vpop.permute.xlu0 %1061
        %1063 = vrot.lane.b32.xlu0 %v335, 16
        %v1064 = vpop.permute.xlu0 %1063
        %1065 = vrot.lane.b32.xlu0 %v336, 16
        %v1066 = vpop.permute.xlu0 %1065
        %1067 = vrot.lane.b32.xlu0 %v337, 16
        %v1068 = vpop.permute.xlu0 %1067
        %1069 = vrot.lane.b32.xlu0 %v338, 16
        %v1070 = vpop.permute.xlu0 %1069
        %1071 = vrot.lane.b32.xlu0 %v339, 16
        %v1072 = vpop.permute.xlu0 %1071
        %1073 = vrot.lane.b32.xlu0 %v340, 16
        %v1074 = vpop.permute.xlu0 %1073
        %1075 = vrot.lane.b32.xlu0 %v341, 16
        %v1076 = vpop.permute.xlu0 %1075
        %1077 = vrot.lane.b32.xlu0 %v342, 16
        %v1078 = vpop.permute.xlu0 %1077
        %1079 = vrot.lane.b32.xlu0 %v343, 16
        %v1080 = vpop.permute.xlu0 %1079
        %1081 = vrot.lane.b32.xlu0 %v344, 16
        %v1082 = vpop.permute.xlu0 %1081
        %1083 = vrot.lane.b32.xlu0 %v345, 16
        %v1084 = vpop.permute.xlu0 %1083
        %1085 = vrot.lane.b32.xlu0 %v346, 16
        %v1086 = vpop.permute.xlu0 %1085
        %1087 = vrot.lane.b32.xlu0 %v347, 16
        %v1088 = vpop.permute.xlu0 %1087
        %1089 = vrot.lane.b32.xlu0 %v348, 16
        %v1090 = vpop.permute.xlu0 %1089
        %1091 = vrot.lane.b32.xlu0 %v349, 16
        %v1092 = vpop.permute.xlu0 %1091
        %vm1125 = vcmask 162944
        %1126 = vst.msk [vmem:[#allocation2] sm:$0xff] %vm1125, %v1030
        %1127 = vst.msk [vmem:[#allocation2 + $0x8] sm:$0xff] %vm1125, %v1032
        %1128 = vst.msk [vmem:[#allocation2 + $0x10] sm:$0xff] %vm1125, %v1034
        %1129 = vst.msk [vmem:[#allocation2 + $0x18] sm:$0xff] %vm1125, %v1036
        %1130 = vst.msk [vmem:[#allocation2 + $0x20] sm:$0xff] %vm1125, %v1038
        %1131 = vst.msk [vmem:[#allocation2 + $0x28] sm:$0xff] %vm1125, %v1040
        %1132 = vst.msk [vmem:[#allocation2 + $0x30] sm:$0xff] %vm1125, %v1042
        %1133 = vst.msk [vmem:[#allocation2 + $0x38] sm:$0xff] %vm1125, %v1044
        %1134 = vst.msk [vmem:[#allocation2 + $0x40] sm:$0xff] %vm1125, %v1046
        %1135 = vst.msk [vmem:[#allocation2 + $0x48] sm:$0xff] %vm1125, %v1048
        %1136 = vst.msk [vmem:[#allocation2 + $0x50] sm:$0xff] %vm1125, %v1050
        %1137 = vst.msk [vmem:[#allocation2 + $0x58] sm:$0xff] %vm1125, %v1052
        %1138 = vst.msk [vmem:[#allocation2 + $0x60] sm:$0xff] %vm1125, %v1054
        %1139 = vst.msk [vmem:[#allocation2 + $0x68] sm:$0xff] %vm1125, %v1056
        %1140 = vst.msk [vmem:[#allocation2 + $0x70] sm:$0xff] %vm1125, %v1058
        %1141 = vst.msk [vmem:[#allocation2 + $0x78] sm:$0xff] %vm1125, %v1060
        %1142 = vst.msk [vmem:[#allocation2 + $0x80] sm:$0xff] %vm1125, %v1062
        %1143 = vst.msk [vmem:[#allocation2 + $0x88] sm:$0xff] %vm1125, %v1064
        %1144 = vst.msk [vmem:[#allocation2 + $0x90] sm:$0xff] %vm1125, %v1066
        %1145 = vst.msk [vmem:[#allocation2 + $0x98] sm:$0xff] %vm1125, %v1068
        %1146 = vst.msk [vmem:[#allocation2 + $0xa0] sm:$0xff] %vm1125, %v1070
        %1147 = vst.msk [vmem:[#allocation2 + $0xa8] sm:$0xff] %vm1125, %v1072
        %1148 = vst.msk [vmem:[#allocation2 + $0xb0] sm:$0xff] %vm1125, %v1074
        %1149 = vst.msk [vmem:[#allocation2 + $0xb8] sm:$0xff] %vm1125, %v1076
        %1150 = vst.msk [vmem:[#allocation2 + $0xc0] sm:$0xff] %vm1125, %v1078
        %1151 = vst.msk [vmem:[#allocation2 + $0xc8] sm:$0xff] %vm1125, %v1080
        %1152 = vst.msk [vmem:[#allocation2 + $0xd0] sm:$0xff] %vm1125, %v1082
        %1153 = vst.msk [vmem:[#allocation2 + $0xd8] sm:$0xff] %vm1125, %v1084
        %1154 = vst.msk [vmem:[#allocation2 + $0xe0] sm:$0xff] %vm1125, %v1086
        %1155 = vst.msk [vmem:[#allocation2 + $0xe8] sm:$0xff] %vm1125, %v1088
        %1156 = vst.msk [vmem:[#allocation2 + $0xf0] sm:$0xff] %vm1125, %v1090
        %1157 = vst.msk [vmem:[#allocation2 + $0xf8] sm:$0xff] %vm1125, %v1092
        %1190 = vrot.lane.b32.xlu0 %v350, 20
        %v1191 = vpop.permute.xlu0 %1190
        %1192 = vrot.lane.b32.xlu0 %v351, 20
        %v1193 = vpop.permute.xlu0 %1192
        %1194 = vrot.lane.b32.xlu0 %v352, 20
        %v1195 = vpop.permute.xlu0 %1194
        %1196 = vrot.lane.b32.xlu0 %v353, 20
        %v1197 = vpop.permute.xlu0 %1196
        %1198 = vrot.lane.b32.xlu0 %v354, 20
        %v1199 = vpop.permute.xlu0 %1198
        %1200 = vrot.lane.b32.xlu0 %v355, 20
        %v1201 = vpop.permute.xlu0 %1200
        %1202 = vrot.lane.b32.xlu0 %v356, 20
        %v1203 = vpop.permute.xlu0 %1202
        %1204 = vrot.lane.b32.xlu0 %v357, 20
        %v1205 = vpop.permute.xlu0 %1204
        %1206 = vrot.lane.b32.xlu0 %v358, 20
        %v1207 = vpop.permute.xlu0 %1206
        %1208 = vrot.lane.b32.xlu0 %v359, 20
        %v1209 = vpop.permute.xlu0 %1208
        %1210 = vrot.lane.b32.xlu0 %v360, 20
        %v1211 = vpop.permute.xlu0 %1210
        %1212 = vrot.lane.b32.xlu0 %v361, 20
        %v1213 = vpop.permute.xlu0 %1212
        %1214 = vrot.lane.b32.xlu0 %v362, 20
        %v1215 = vpop.permute.xlu0 %1214
        %1216 = vrot.lane.b32.xlu0 %v363, 20
        %v1217 = vpop.permute.xlu0 %1216
        %1218 = vrot.lane.b32.xlu0 %v364, 20
        %v1219 = vpop.permute.xlu0 %1218
        %1220 = vrot.lane.b32.xlu0 %v365, 20
        %v1221 = vpop.permute.xlu0 %1220
        %1222 = vrot.lane.b32.xlu0 %v366, 20
        %v1223 = vpop.permute.xlu0 %1222
        %1224 = vrot.lane.b32.xlu0 %v367, 20
        %v1225 = vpop.permute.xlu0 %1224
        %1226 = vrot.lane.b32.xlu0 %v368, 20
        %v1227 = vpop.permute.xlu0 %1226
        %1228 = vrot.lane.b32.xlu0 %v369, 20
        %v1229 = vpop.permute.xlu0 %1228
        %1230 = vrot.lane.b32.xlu0 %v370, 20
        %v1231 = vpop.permute.xlu0 %1230
        %1232 = vrot.lane.b32.xlu0 %v371, 20
        %v1233 = vpop.permute.xlu0 %1232
        %1234 = vrot.lane.b32.xlu0 %v372, 20
        %v1235 = vpop.permute.xlu0 %1234
        %1236 = vrot.lane.b32.xlu0 %v373, 20
        %v1237 = vpop.permute.xlu0 %1236
        %1238 = vrot.lane.b32.xlu0 %v374, 20
        %v1239 = vpop.permute.xlu0 %1238
        %1240 = vrot.lane.b32.xlu0 %v375, 20
        %v1241 = vpop.permute.xlu0 %1240
        %1242 = vrot.lane.b32.xlu0 %v376, 20
        %v1243 = vpop.permute.xlu0 %1242
        %1244 = vrot.lane.b32.xlu0 %v377, 20
        %v1245 = vpop.permute.xlu0 %1244
        %1246 = vrot.lane.b32.xlu0 %v378, 20
        %v1247 = vpop.permute.xlu0 %1246
        %1248 = vrot.lane.b32.xlu0 %v379, 20
        %v1249 = vpop.permute.xlu0 %1248
        %1250 = vrot.lane.b32.xlu0 %v380, 20
        %v1251 = vpop.permute.xlu0 %1250
        %1252 = vrot.lane.b32.xlu0 %v381, 20
        %v1253 = vpop.permute.xlu0 %1252
        %vm1286 = vcmask 195744
        %1287 = vst.msk [vmem:[#allocation2] sm:$0xff] %vm1286, %v1191
        %1288 = vst.msk [vmem:[#allocation2 + $0x8] sm:$0xff] %vm1286, %v1193
        %1289 = vst.msk [vmem:[#allocation2 + $0x10] sm:$0xff] %vm1286, %v1195
        %1290 = vst.msk [vmem:[#allocation2 + $0x18] sm:$0xff] %vm1286, %v1197
        %1291 = vst.msk [vmem:[#allocation2 + $0x20] sm:$0xff] %vm1286, %v1199
        %1292 = vst.msk [vmem:[#allocation2 + $0x28] sm:$0xff] %vm1286, %v1201
        %1293 = vst.msk [vmem:[#allocation2 + $0x30] sm:$0xff] %vm1286, %v1203
        %1294 = vst.msk [vmem:[#allocation2 + $0x38] sm:$0xff] %vm1286, %v1205
        %1295 = vst.msk [vmem:[#allocation2 + $0x40] sm:$0xff] %vm1286, %v1207
        %1296 = vst.msk [vmem:[#allocation2 + $0x48] sm:$0xff] %vm1286, %v1209
        %1297 = vst.msk [vmem:[#allocation2 + $0x50] sm:$0xff] %vm1286, %v1211
        %1298 = vst.msk [vmem:[#allocation2 + $0x58] sm:$0xff] %vm1286, %v1213
        %1299 = vst.msk [vmem:[#allocation2 + $0x60] sm:$0xff] %vm1286, %v1215
        %1300 = vst.msk [vmem:[#allocation2 + $0x68] sm:$0xff] %vm1286, %v1217
        %1301 = vst.msk [vmem:[#allocation2 + $0x70] sm:$0xff] %vm1286, %v1219
        %1302 = vst.msk [vmem:[#allocation2 + $0x78] sm:$0xff] %vm1286, %v1221
        %1303 = vst.msk [vmem:[#allocation2 + $0x80] sm:$0xff] %vm1286, %v1223
        %1304 = vst.msk [vmem:[#allocation2 + $0x88] sm:$0xff] %vm1286, %v1225
        %1305 = vst.msk [vmem:[#allocation2 + $0x90] sm:$0xff] %vm1286, %v1227
        %1306 = vst.msk [vmem:[#allocation2 + $0x98] sm:$0xff] %vm1286, %v1229
        %1307 = vst.msk [vmem:[#allocation2 + $0xa0] sm:$0xff] %vm1286, %v1231
        %1308 = vst.msk [vmem:[#allocation2 + $0xa8] sm:$0xff] %vm1286, %v1233
        %1309 = vst.msk [vmem:[#allocation2 + $0xb0] sm:$0xff] %vm1286, %v1235
        %1310 = vst.msk [vmem:[#allocation2 + $0xb8] sm:$0xff] %vm1286, %v1237
        %1311 = vst.msk [vmem:[#allocation2 + $0xc0] sm:$0xff] %vm1286, %v1239
        %1312 = vst.msk [vmem:[#allocation2 + $0xc8] sm:$0xff] %vm1286, %v1241
        %1313 = vst.msk [vmem:[#allocation2 + $0xd0] sm:$0xff] %vm1286, %v1243
        %1314 = vst.msk [vmem:[#allocation2 + $0xd8] sm:$0xff] %vm1286, %v1245
        %1315 = vst.msk [vmem:[#allocation2 + $0xe0] sm:$0xff] %vm1286, %v1247
        %1316 = vst.msk [vmem:[#allocation2 + $0xe8] sm:$0xff] %vm1286, %v1249
        %1317 = vst.msk [vmem:[#allocation2 + $0xf0] sm:$0xff] %vm1286, %v1251
        %1318 = vst.msk [vmem:[#allocation2 + $0xf8] sm:$0xff] %vm1286, %v1253
        %1351 = vrot.lane.b32.xlu0 %v385, 24
        %v1352 = vpop.permute.xlu0 %1351
        %1353 = vrot.lane.b32.xlu0 %v386, 24
        %v1354 = vpop.permute.xlu0 %1353
        %1355 = vrot.lane.b32.xlu0 %v387, 24
        %v1356 = vpop.permute.xlu0 %1355
        %1357 = vrot.lane.b32.xlu0 %v388, 24
        %v1358 = vpop.permute.xlu0 %1357
        %1359 = vrot.lane.b32.xlu0 %v389, 24
        %v1360 = vpop.permute.xlu0 %1359
        %1361 = vrot.lane.b32.xlu0 %v390, 24
        %v1362 = vpop.permute.xlu0 %1361
        %1363 = vrot.lane.b32.xlu0 %v391, 24
        %v1364 = vpop.permute.xlu0 %1363
        %1365 = vrot.lane.b32.xlu0 %v392, 24
        %v1366 = vpop.permute.xlu0 %1365
        %1367 = vrot.lane.b32.xlu0 %v393, 24
        %v1368 = vpop.permute.xlu0 %1367
        %1369 = vrot.lane.b32.xlu0 %v394, 24
        %v1370 = vpop.permute.xlu0 %1369
        %1371 = vrot.lane.b32.xlu0 %v395, 24
        %v1372 = vpop.permute.xlu0 %1371
        %1373 = vrot.lane.b32.xlu0 %v396, 24
        %v1374 = vpop.permute.xlu0 %1373
        %1375 = vrot.lane.b32.xlu0 %v397, 24
        %v1376 = vpop.permute.xlu0 %1375
        %1377 = vrot.lane.b32.xlu0 %v398, 24
        %v1378 = vpop.permute.xlu0 %1377
        %1379 = vrot.lane.b32.xlu0 %v399, 24
        %v1380 = vpop.permute.xlu0 %1379
        %1381 = vrot.lane.b32.xlu0 %v400, 24
        %v1382 = vpop.permute.xlu0 %1381
        %1383 = vrot.lane.b32.xlu0 %v401, 24
        %v1384 = vpop.permute.xlu0 %1383
        %1385 = vrot.lane.b32.xlu0 %v402, 24
        %v1386 = vpop.permute.xlu0 %1385
        %1387 = vrot.lane.b32.xlu0 %v403, 24
        %v1388 = vpop.permute.xlu0 %1387
        %1389 = vrot.lane.b32.xlu0 %v404, 24
        %v1390 = vpop.permute.xlu0 %1389
        %1391 = vrot.lane.b32.xlu0 %v405, 24
        %v1392 = vpop.permute.xlu0 %1391
        %1393 = vrot.lane.b32.xlu0 %v406, 24
        %v1394 = vpop.permute.xlu0 %1393
        %1395 = vrot.lane.b32.xlu0 %v407, 24
        %v1396 = vpop.permute.xlu0 %1395
        %1397 = vrot.lane.b32.xlu0 %v408, 24
        %v1398 = vpop.permute.xlu0 %1397
        %1399 = vrot.lane.b32.xlu0 %v409, 24
        %v1400 = vpop.permute.xlu0 %1399
        %1401 = vrot.lane.b32.xlu0 %v410, 24
        %v1402 = vpop.permute.xlu0 %1401
        %1403 = vrot.lane.b32.xlu0 %v411, 24
        %v1404 = vpop.permute.xlu0 %1403
        %1405 = vrot.lane.b32.xlu0 %v412, 24
        %v1406 = vpop.permute.xlu0 %1405
        %1407 = vrot.lane.b32.xlu0 %v413, 24
        %v1408 = vpop.permute.xlu0 %1407
        %1409 = vrot.lane.b32.xlu0 %v414, 24
        %v1410 = vpop.permute.xlu0 %1409
        %1411 = vrot.lane.b32.xlu0 %v415, 24
        %v1412 = vpop.permute.xlu0 %1411
        %1413 = vrot.lane.b32.xlu0 %v416, 24
        %v1414 = vpop.permute.xlu0 %1413
        %vm1447 = vcmask 228544
        %1448 = vst.msk [vmem:[#allocation2] sm:$0xff] %vm1447, %v1352
        %1449 = vst.msk [vmem:[#allocation2 + $0x8] sm:$0xff] %vm1447, %v1354
        %1450 = vst.msk [vmem:[#allocation2 + $0x10] sm:$0xff] %vm1447, %v1356
        %1451 = vst.msk [vmem:[#allocation2 + $0x18] sm:$0xff] %vm1447, %v1358
        %1452 = vst.msk [vmem:[#allocation2 + $0x20] sm:$0xff] %vm1447, %v1360
        %1453 = vst.msk [vmem:[#allocation2 + $0x28] sm:$0xff] %vm1447, %v1362
        %1454 = vst.msk [vmem:[#allocation2 + $0x30] sm:$0xff] %vm1447, %v1364
        %1455 = vst.msk [vmem:[#allocation2 + $0x38] sm:$0xff] %vm1447, %v1366
        %1456 = vst.msk [vmem:[#allocation2 + $0x40] sm:$0xff] %vm1447, %v1368
        %1457 = vst.msk [vmem:[#allocation2 + $0x48] sm:$0xff] %vm1447, %v1370
        %1458 = vst.msk [vmem:[#allocation2 + $0x50] sm:$0xff] %vm1447, %v1372
        %1459 = vst.msk [vmem:[#allocation2 + $0x58] sm:$0xff] %vm1447, %v1374
        %1460 = vst.msk [vmem:[#allocation2 + $0x60] sm:$0xff] %vm1447, %v1376
        %1461 = vst.msk [vmem:[#allocation2 + $0x68] sm:$0xff] %vm1447, %v1378
        %1462 = vst.msk [vmem:[#allocation2 + $0x70] sm:$0xff] %vm1447, %v1380
        %1463 = vst.msk [vmem:[#allocation2 + $0x78] sm:$0xff] %vm1447, %v1382
        %1464 = vst.msk [vmem:[#allocation2 + $0x80] sm:$0xff] %vm1447, %v1384
        %1465 = vst.msk [vmem:[#allocation2 + $0x88] sm:$0xff] %vm1447, %v1386
        %1466 = vst.msk [vmem:[#allocation2 + $0x90] sm:$0xff] %vm1447, %v1388
        %1467 = vst.msk [vmem:[#allocation2 + $0x98] sm:$0xff] %vm1447, %v1390
        %1468 = vst.msk [vmem:[#allocation2 + $0xa0] sm:$0xff] %vm1447, %v1392
        %1469 = vst.msk [vmem:[#allocation2 + $0xa8] sm:$0xff] %vm1447, %v1394
        %1470 = vst.msk [vmem:[#allocation2 + $0xb0] sm:$0xff] %vm1447, %v1396
        %1471 = vst.msk [vmem:[#allocation2 + $0xb8] sm:$0xff] %vm1447, %v1398
        %1472 = vst.msk [vmem:[#allocation2 + $0xc0] sm:$0xff] %vm1447, %v1400
        %1473 = vst.msk [vmem:[#allocation2 + $0xc8] sm:$0xff] %vm1447, %v1402
        %1474 = vst.msk [vmem:[#allocation2 + $0xd0] sm:$0xff] %vm1447, %v1404
        %1475 = vst.msk [vmem:[#allocation2 + $0xd8] sm:$0xff] %vm1447, %v1406
        %1476 = vst.msk [vmem:[#allocation2 + $0xe0] sm:$0xff] %vm1447, %v1408
        %1477 = vst.msk [vmem:[#allocation2 + $0xe8] sm:$0xff] %vm1447, %v1410
        %1478 = vst.msk [vmem:[#allocation2 + $0xf0] sm:$0xff] %vm1447, %v1412
        %1479 = vst.msk [vmem:[#allocation2 + $0xf8] sm:$0xff] %vm1447, %v1414
        %1512 = vrot.lane.b32.xlu0 %v417, 28
        %v1513 = vpop.permute.xlu0 %1512
        %1514 = vrot.lane.b32.xlu0 %v418, 28
        %v1515 = vpop.permute.xlu0 %1514
        %1516 = vrot.lane.b32.xlu0 %v419, 28
        %v1517 = vpop.permute.xlu0 %1516
        %1518 = vrot.lane.b32.xlu0 %v420, 28
        %v1519 = vpop.permute.xlu0 %1518
        %1520 = vrot.lane.b32.xlu0 %v421, 28
        %v1521 = vpop.permute.xlu0 %1520
        %1522 = vrot.lane.b32.xlu0 %v422, 28
        %v1523 = vpop.permute.xlu0 %1522
        %1524 = vrot.lane.b32.xlu0 %v423, 28
        %v1525 = vpop.permute.xlu0 %1524
        %1526 = vrot.lane.b32.xlu0 %v424, 28
        %v1527 = vpop.permute.xlu0 %1526
        %1528 = vrot.lane.b32.xlu0 %v425, 28
        %v1529 = vpop.permute.xlu0 %1528
        %1530 = vrot.lane.b32.xlu0 %v426, 28
        %v1531 = vpop.permute.xlu0 %1530
        %1532 = vrot.lane.b32.xlu0 %v427, 28
        %v1533 = vpop.permute.xlu0 %1532
        %1534 = vrot.lane.b32.xlu0 %v428, 28
        %v1535 = vpop.permute.xlu0 %1534
        %1536 = vrot.lane.b32.xlu0 %v429, 28
        %v1537 = vpop.permute.xlu0 %1536
        %1538 = vrot.lane.b32.xlu0 %v430, 28
        %v1539 = vpop.permute.xlu0 %1538
        %1540 = vrot.lane.b32.xlu0 %v431, 28
        %v1541 = vpop.permute.xlu0 %1540
        %1542 = vrot.lane.b32.xlu0 %v432, 28
        %v1543 = vpop.permute.xlu0 %1542
        %1544 = vrot.lane.b32.xlu0 %v433, 28
        %v1545 = vpop.permute.xlu0 %1544
        %1546 = vrot.lane.b32.xlu0 %v434, 28
        %v1547 = vpop.permute.xlu0 %1546
        %1548 = vrot.lane.b32.xlu0 %v435, 28
        %v1549 = vpop.permute.xlu0 %1548
        %1550 = vrot.lane.b32.xlu0 %v436, 28
        %v1551 = vpop.permute.xlu0 %1550
        %1552 = vrot.lane.b32.xlu0 %v437, 28
        %v1553 = vpop.permute.xlu0 %1552
        %1554 = vrot.lane.b32.xlu0 %v438, 28
        %v1555 = vpop.permute.xlu0 %1554
        %1556 = vrot.lane.b32.xlu0 %v439, 28
        %v1557 = vpop.permute.xlu0 %1556
        %1558 = vrot.lane.b32.xlu0 %v440, 28
        %v1559 = vpop.permute.xlu0 %1558
        %1560 = vrot.lane.b32.xlu0 %v441, 28
        %v1561 = vpop.permute.xlu0 %1560
        %1562 = vrot.lane.b32.xlu0 %v442, 28
        %v1563 = vpop.permute.xlu0 %1562
        %1564 = vrot.lane.b32.xlu0 %v443, 28
        %v1565 = vpop.permute.xlu0 %1564
        %1566 = vrot.lane.b32.xlu0 %v444, 28
        %v1567 = vpop.permute.xlu0 %1566
        %1568 = vrot.lane.b32.xlu0 %v445, 28
        %v1569 = vpop.permute.xlu0 %1568
        %1570 = vrot.lane.b32.xlu0 %v446, 28
        %v1571 = vpop.permute.xlu0 %1570
        %1572 = vrot.lane.b32.xlu0 %v447, 28
        %v1573 = vpop.permute.xlu0 %1572
        %1574 = vrot.lane.b32.xlu0 %v448, 28
        %v1575 = vpop.permute.xlu0 %1574
        %vm1608 = vcmask 261344
        %1609 = vst.msk [vmem:[#allocation2] sm:$0xff] %vm1608, %v1513
        %1610 = vst.msk [vmem:[#allocation2 + $0x8] sm:$0xff] %vm1608, %v1515
        %1611 = vst.msk [vmem:[#allocation2 + $0x10] sm:$0xff] %vm1608, %v1517
        %1612 = vst.msk [vmem:[#allocation2 + $0x18] sm:$0xff] %vm1608, %v1519
        %1613 = vst.msk [vmem:[#allocation2 + $0x20] sm:$0xff] %vm1608, %v1521
        %1614 = vst.msk [vmem:[#allocation2 + $0x28] sm:$0xff] %vm1608, %v1523
        %1615 = vst.msk [vmem:[#allocation2 + $0x30] sm:$0xff] %vm1608, %v1525
        %1616 = vst.msk [vmem:[#allocation2 + $0x38] sm:$0xff] %vm1608, %v1527
        %1617 = vst.msk [vmem:[#allocation2 + $0x40] sm:$0xff] %vm1608, %v1529
        %1618 = vst.msk [vmem:[#allocation2 + $0x48] sm:$0xff] %vm1608, %v1531
        %1619 = vst.msk [vmem:[#allocation2 + $0x50] sm:$0xff] %vm1608, %v1533
        %1620 = vst.msk [vmem:[#allocation2 + $0x58] sm:$0xff] %vm1608, %v1535
        %1621 = vst.msk [vmem:[#allocation2 + $0x60] sm:$0xff] %vm1608, %v1537
        %1622 = vst.msk [vmem:[#allocation2 + $0x68] sm:$0xff] %vm1608, %v1539
        %1623 = vst.msk [vmem:[#allocation2 + $0x70] sm:$0xff] %vm1608, %v1541
        %1624 = vst.msk [vmem:[#allocation2 + $0x78] sm:$0xff] %vm1608, %v1543
        %1625 = vst.msk [vmem:[#allocation2 + $0x80] sm:$0xff] %vm1608, %v1545
        %1626 = vst.msk [vmem:[#allocation2 + $0x88] sm:$0xff] %vm1608, %v1547
        %1627 = vst.msk [vmem:[#allocation2 + $0x90] sm:$0xff] %vm1608, %v1549
        %1628 = vst.msk [vmem:[#allocation2 + $0x98] sm:$0xff] %vm1608, %v1551
        %1629 = vst.msk [vmem:[#allocation2 + $0xa0] sm:$0xff] %vm1608, %v1553
        %1630 = vst.msk [vmem:[#allocation2 + $0xa8] sm:$0xff] %vm1608, %v1555
        %1631 = vst.msk [vmem:[#allocation2 + $0xb0] sm:$0xff] %vm1608, %v1557
        %1632 = vst.msk [vmem:[#allocation2 + $0xb8] sm:$0xff] %vm1608, %v1559
        %1633 = vst.msk [vmem:[#allocation2 + $0xc0] sm:$0xff] %vm1608, %v1561
        %1634 = vst.msk [vmem:[#allocation2 + $0xc8] sm:$0xff] %vm1608, %v1563
        %1635 = vst.msk [vmem:[#allocation2 + $0xd0] sm:$0xff] %vm1608, %v1565
        %1636 = vst.msk [vmem:[#allocation2 + $0xd8] sm:$0xff] %vm1608, %v1567
        %1637 = vst.msk [vmem:[#allocation2 + $0xe0] sm:$0xff] %vm1608, %v1569
        %1638 = vst.msk [vmem:[#allocation2 + $0xe8] sm:$0xff] %vm1608, %v1571
        %1639 = vst.msk [vmem:[#allocation2 + $0xf0] sm:$0xff] %vm1608, %v1573
        %1640 = vst.msk [vmem:[#allocation2 + $0xf8] sm:$0xff] %vm1608, %v1575
        %1673 = vrot.lane.b32.xlu0 %v449, 32
        %v1674 = vpop.permute.xlu0 %1673
        %1675 = vrot.lane.b32.xlu0 %v450, 32
        %v1676 = vpop.permute.xlu0 %1675
        %1677 = vrot.lane.b32.xlu0 %v451, 32
        %v1678 = vpop.permute.xlu0 %1677
        %1679 = vrot.lane.b32.xlu0 %v452, 32
        %v1680 = vpop.permute.xlu0 %1679
        %1681 = vrot.lane.b32.xlu0 %v453, 32
        %v1682 = vpop.permute.xlu0 %1681
        %1683 = vrot.lane.b32.xlu0 %v454, 32
        %v1684 = vpop.permute.xlu0 %1683
        %1685 = vrot.lane.b32.xlu0 %v455, 32
        %v1686 = vpop.permute.xlu0 %1685
        %1687 = vrot.lane.b32.xlu0 %v456, 32
        %v1688 = vpop.permute.xlu0 %1687
        %1689 = vrot.lane.b32.xlu0 %v457, 32
        %v1690 = vpop.permute.xlu0 %1689
        %1691 = vrot.lane.b32.xlu0 %v458, 32
        %v1692 = vpop.permute.xlu0 %1691
        %1693 = vrot.lane.b32.xlu0 %v459, 32
        %v1694 = vpop.permute.xlu0 %1693
        %1695 = vrot.lane.b32.xlu0 %v460, 32
        %v1696 = vpop.permute.xlu0 %1695
        %1697 = vrot.lane.b32.xlu0 %v461, 32
        %v1698 = vpop.permute.xlu0 %1697
        %1699 = vrot.lane.b32.xlu0 %v462, 32
        %v1700 = vpop.permute.xlu0 %1699
        %1701 = vrot.lane.b32.xlu0 %v463, 32
        %v1702 = vpop.permute.xlu0 %1701
        %1703 = vrot.lane.b32.xlu0 %v464, 32
        %v1704 = vpop.permute.xlu0 %1703
        %1705 = vrot.lane.b32.xlu0 %v465, 32
        %v1706 = vpop.permute.xlu0 %1705
        %1707 = vrot.lane.b32.xlu0 %v466, 32
        %v1708 = vpop.permute.xlu0 %1707
        %1709 = vrot.lane.b32.xlu0 %v467, 32
        %v1710 = vpop.permute.xlu0 %1709
        %1711 = vrot.lane.b32.xlu0 %v468, 32
        %v1712 = vpop.permute.xlu0 %1711
        %1713 = vrot.lane.b32.xlu0 %v469, 32
        %v1714 = vpop.permute.xlu0 %1713
        %1715 = vrot.lane.b32.xlu0 %v470, 32
        %v1716 = vpop.permute.xlu0 %1715
        %1717 = vrot.lane.b32.xlu0 %v471, 32
        %v1718 = vpop.permute.xlu0 %1717
        %1719 = vrot.lane.b32.xlu0 %v472, 32
        %v1720 = vpop.permute.xlu0 %1719
        %1721 = vrot.lane.b32.xlu0 %v473, 32
        %v1722 = vpop.permute.xlu0 %1721
        %1723 = vrot.lane.b32.xlu0 %v474, 32
        %v1724 = vpop.permute.xlu0 %1723
        %1725 = vrot.lane.b32.xlu0 %v475, 32
        %v1726 = vpop.permute.xlu0 %1725
        %1727 = vrot.lane.b32.xlu0 %v476, 32
        %v1728 = vpop.permute.xlu0 %1727
        %1729 = vrot.lane.b32.xlu0 %v477, 32
        %v1730 = vpop.permute.xlu0 %1729
        %1731 = vrot.lane.b32.xlu0 %v478, 32
        %v1732 = vpop.permute.xlu0 %1731
        %1733 = vrot.lane.b32.xlu0 %v479, 32
        %v1734 = vpop.permute.xlu0 %1733
        %1735 = vrot.lane.b32.xlu0 %v480, 32
        %v1736 = vpop.permute.xlu0 %1735
        %vm1769 = vcmask 294144
        %1770 = vst.msk [vmem:[#allocation2] sm:$0xff] %vm1769, %v1674
        %1771 = vst.msk [vmem:[#allocation2 + $0x8] sm:$0xff] %vm1769, %v1676
        %1772 = vst.msk [vmem:[#allocation2 + $0x10] sm:$0xff] %vm1769, %v1678
        %1773 = vst.msk [vmem:[#allocation2 + $0x18] sm:$0xff] %vm1769, %v1680
        %1774 = vst.msk [vmem:[#allocation2 + $0x20] sm:$0xff] %vm1769, %v1682
        %1775 = vst.msk [vmem:[#allocation2 + $0x28] sm:$0xff] %vm1769, %v1684
        %1776 = vst.msk [vmem:[#allocation2 + $0x30] sm:$0xff] %vm1769, %v1686
        %1777 = vst.msk [vmem:[#allocation2 + $0x38] sm:$0xff] %vm1769, %v1688
        %1778 = vst.msk [vmem:[#allocation2 + $0x40] sm:$0xff] %vm1769, %v1690
        %1779 = vst.msk [vmem:[#allocation2 + $0x48] sm:$0xff] %vm1769, %v1692
        %1780 = vst.msk [vmem:[#allocation2 + $0x50] sm:$0xff] %vm1769, %v1694
        %1781 = vst.msk [vmem:[#allocation2 + $0x58] sm:$0xff] %vm1769, %v1696
        %1782 = vst.msk [vmem:[#allocation2 + $0x60] sm:$0xff] %vm1769, %v1698
        %1783 = vst.msk [vmem:[#allocation2 + $0x68] sm:$0xff] %vm1769, %v1700
        %1784 = vst.msk [vmem:[#allocation2 + $0x70] sm:$0xff] %vm1769, %v1702
        %1785 = vst.msk [vmem:[#allocation2 + $0x78] sm:$0xff] %vm1769, %v1704
        %1786 = vst.msk [vmem:[#allocation2 + $0x80] sm:$0xff] %vm1769, %v1706
        %1787 = vst.msk [vmem:[#allocation2 + $0x88] sm:$0xff] %vm1769, %v1708
        %1788 = vst.msk [vmem:[#allocation2 + $0x90] sm:$0xff] %vm1769, %v1710
        %1789 = vst.msk [vmem:[#allocation2 + $0x98] sm:$0xff] %vm1769, %v1712
        %1790 = vst.msk [vmem:[#allocation2 + $0xa0] sm:$0xff] %vm1769, %v1714
        %1791 = vst.msk [vmem:[#allocation2 + $0xa8] sm:$0xff] %vm1769, %v1716
        %1792 = vst.msk [vmem:[#allocation2 + $0xb0] sm:$0xff] %vm1769, %v1718
        %1793 = vst.msk [vmem:[#allocation2 + $0xb8] sm:$0xff] %vm1769, %v1720
        %1794 = vst.msk [vmem:[#allocation2 + $0xc0] sm:$0xff] %vm1769, %v1722
        %1795 = vst.msk [vmem:[#allocation2 + $0xc8] sm:$0xff] %vm1769, %v1724
        %1796 = vst.msk [vmem:[#allocation2 + $0xd0] sm:$0xff] %vm1769, %v1726
        %1797 = vst.msk [vmem:[#allocation2 + $0xd8] sm:$0xff] %vm1769, %v1728
        %1798 = vst.msk [vmem:[#allocation2 + $0xe0] sm:$0xff] %vm1769, %v1730
        %1799 = vst.msk [vmem:[#allocation2 + $0xe8] sm:$0xff] %vm1769, %v1732
        %1800 = vst.msk [vmem:[#allocation2 + $0xf0] sm:$0xff] %vm1769, %v1734
        %1801 = vst.msk [vmem:[#allocation2 + $0xf8] sm:$0xff] %vm1769, %v1736
        %vm1802 = vcmask 1047840
        %1803 = vst.msk [vmem:[#allocation2] sm:$0xff] %vm1802, 0.0
        %1804 = vst.msk [vmem:[#allocation2 + $0x8] sm:$0xff] %vm1802, 0.0
        %1805 = vst.msk [vmem:[#allocation2 + $0x10] sm:$0xff] %vm1802, 0.0
        %1806 = vst.msk [vmem:[#allocation2 + $0x18] sm:$0xff] %vm1802, 0.0
        %1807 = vst.msk [vmem:[#allocation2 + $0x20] sm:$0xff] %vm1802, 0.0
        %1808 = vst.msk [vmem:[#allocation2 + $0x28] sm:$0xff] %vm1802, 0.0
        %1809 = vst.msk [vmem:[#allocation2 + $0x30] sm:$0xff] %vm1802, 0.0
        %1810 = vst.msk [vmem:[#allocation2 + $0x38] sm:$0xff] %vm1802, 0.0
        %1811 = vst.msk [vmem:[#allocation2 + $0x40] sm:$0xff] %vm1802, 0.0
        %1812 = vst.msk [vmem:[#allocation2 + $0x48] sm:$0xff] %vm1802, 0.0
        %1813 = vst.msk [vmem:[#allocation2 + $0x50] sm:$0xff] %vm1802, 0.0
        %1814 = vst.msk [vmem:[#allocation2 + $0x58] sm:$0xff] %vm1802, 0.0
        %1815 = vst.msk [vmem:[#allocation2 + $0x60] sm:$0xff] %vm1802, 0.0
        %1816 = vst.msk [vmem:[#allocation2 + $0x68] sm:$0xff] %vm1802, 0.0
        %1817 = vst.msk [vmem:[#allocation2 + $0x70] sm:$0xff] %vm1802, 0.0
        %1818 = vst.msk [vmem:[#allocation2 + $0x78] sm:$0xff] %vm1802, 0.0
        %1819 = vst.msk [vmem:[#allocation2 + $0x80] sm:$0xff] %vm1802, 0.0
        %1820 = vst.msk [vmem:[#allocation2 + $0x88] sm:$0xff] %vm1802, 0.0
        %1821 = vst.msk [vmem:[#allocation2 + $0x90] sm:$0xff] %vm1802, 0.0
        %1822 = vst.msk [vmem:[#allocation2 + $0x98] sm:$0xff] %vm1802, 0.0
        %1823 = vst.msk [vmem:[#allocation2 + $0xa0] sm:$0xff] %vm1802, 0.0
        %1824 = vst.msk [vmem:[#allocation2 + $0xa8] sm:$0xff] %vm1802, 0.0
        %1825 = vst.msk [vmem:[#allocation2 + $0xb0] sm:$0xff] %vm1802, 0.0
        %1826 = vst.msk [vmem:[#allocation2 + $0xb8] sm:$0xff] %vm1802, 0.0
        %1827 = vst.msk [vmem:[#allocation2 + $0xc0] sm:$0xff] %vm1802, 0.0
        %1828 = vst.msk [vmem:[#allocation2 + $0xc8] sm:$0xff] %vm1802, 0.0
        %1829 = vst.msk [vmem:[#allocation2 + $0xd0] sm:$0xff] %vm1802, 0.0
        %1830 = vst.msk [vmem:[#allocation2 + $0xd8] sm:$0xff] %vm1802, 0.0
        %1831 = vst.msk [vmem:[#allocation2 + $0xe0] sm:$0xff] %vm1802, 0.0
        %1832 = vst.msk [vmem:[#allocation2 + $0xe8] sm:$0xff] %vm1802, 0.0
        %1833 = vst.msk [vmem:[#allocation2 + $0xf0] sm:$0xff] %vm1802, 0.0
        %1834 = vst.msk [vmem:[#allocation2 + $0xf8] sm:$0xff] %vm1802, 0.0
        %v1835 = vld [vmem:[#allocation2] sm:$0xff]
        %v1836 = vld [vmem:[#allocation2 + $0x8] sm:$0xff]
        %v1837 = vld [vmem:[#allocation2 + $0x10] sm:$0xff]
        %v1838 = vld [vmem:[#allocation2 + $0x18] sm:$0xff]
        %v1839 = vld [vmem:[#allocation2 + $0x20] sm:$0xff]
        %v1840 = vld [vmem:[#allocation2 + $0x28] sm:$0xff]
        %v1841 = vld [vmem:[#allocation2 + $0x30] sm:$0xff]
        %v1842 = vld [vmem:[#allocation2 + $0x38] sm:$0xff]
        %v1843 = vld [vmem:[#allocation2 + $0x40] sm:$0xff]
        %v1844 = vld [vmem:[#allocation2 + $0x48] sm:$0xff]
        %v1845 = vld [vmem:[#allocation2 + $0x50] sm:$0xff]
        %v1846 = vld [vmem:[#allocation2 + $0x58] sm:$0xff]
        %v1847 = vld [vmem:[#allocation2 + $0x60] sm:$0xff]
        %v1848 = vld [vmem:[#allocation2 + $0x68] sm:$0xff]
        %v1849 = vld [vmem:[#allocation2 + $0x70] sm:$0xff]
        %v1850 = vld [vmem:[#allocation2 + $0x78] sm:$0xff]
        %v1851 = vld [vmem:[#allocation2 + $0x80] sm:$0xff]
        %v1852 = vld [vmem:[#allocation2 + $0x88] sm:$0xff]
        %v1853 = vld [vmem:[#allocation2 + $0x90] sm:$0xff]
        %v1854 = vld [vmem:[#allocation2 + $0x98] sm:$0xff]
        %v1855 = vld [vmem:[#allocation2 + $0xa0] sm:$0xff]
        %v1856 = vld [vmem:[#allocation2 + $0xa8] sm:$0xff]
        %v1857 = vld [vmem:[#allocation2 + $0xb0] sm:$0xff]
        %v1858 = vld [vmem:[#allocation2 + $0xb8] sm:$0xff]
        %v1859 = vld [vmem:[#allocation2 + $0xc0] sm:$0xff]
        %v1860 = vld [vmem:[#allocation2 + $0xc8] sm:$0xff]
        %v1861 = vld [vmem:[#allocation2 + $0xd0] sm:$0xff]
        %v1862 = vld [vmem:[#allocation2 + $0xd8] sm:$0xff]
        %v1863 = vld [vmem:[#allocation2 + $0xe0] sm:$0xff]
        %v1864 = vld [vmem:[#allocation2 + $0xe8] sm:$0xff]
        %v1865 = vld [vmem:[#allocation2 + $0xf0] sm:$0xff]
        %v1866 = vld [vmem:[#allocation2 + $0xf8] sm:$0xff]
        %v1867 = vld [vmem:[%s1] sm:$0xff]
        %v1868 = vld [vmem:[%s1 + $0x8] sm:$0xff]
        %v1869 = vld [vmem:[%s1 + $0x10] sm:$0xff]
        %v1870 = vld [vmem:[%s1 + $0x18] sm:$0xff]
        %v1871 = vld [vmem:[%s1 + $0x20] sm:$0xff]
        %v1872 = vld [vmem:[%s1 + $0x28] sm:$0xff]
        %v1873 = vld [vmem:[%s1 + $0x30] sm:$0xff]
        %v1874 = vld [vmem:[%s1 + $0x38] sm:$0xff]
        %v1875 = vld [vmem:[%s1 + $0x40] sm:$0xff]
        %v1876 = vld [vmem:[%s1 + $0x48] sm:$0xff]
        %v1877 = vld [vmem:[%s1 + $0x50] sm:$0xff]
        %v1878 = vld [vmem:[%s1 + $0x58] sm:$0xff]
        %v1879 = vld [vmem:[%s1 + $0x60] sm:$0xff]
        %v1880 = vld [vmem:[%s1 + $0x68] sm:$0xff]
        %v1881 = vld [vmem:[%s1 + $0x70] sm:$0xff]
        %v1882 = vld [vmem:[%s1 + $0x78] sm:$0xff]
        %v1883 = vld [vmem:[%s2] sm:$0x1]
        %v1885 = vperm.slane %v1883, 0
        %1887 = vmatpush.msra.mxu0 %v1882
        %1888 = vmatpush.msra.mxu0 %v1881
        %1889 = vmatpush.msra.mxu0 %v1880
        %1890 = vmatpush.msra.mxu0 %v1879
        %1891 = vmatpush.msra.mxu0 %v1878
        %1892 = vmatpush.msra.mxu0 %v1877
        %1893 = vmatpush.msra.mxu0 %v1876
        %1894 = vmatpush.msra.mxu0 %v1875
        %1895 = vmatpush.msra.mxu0 %v1874
        %1896 = vmatpush.msra.mxu0 %v1873
        %1897 = vmatpush.msra.mxu0 %v1872
        %1898 = vmatpush.msra.mxu0 %v1871
        %1899 = vmatpush.msra.mxu0 %v1870
        %1900 = vmatpush.msra.mxu0 %v1869
        %1901 = vmatpush.msra.mxu0 %v1868
        %1902 = vmatpush.msra.mxu0 %v1867
        %1903 = vmatmul.f32.gmra.mxu0 %v1835
        %v1904 = vpop.f32.mrf.mxu0
        %v1905 = vadd.f32 %v1885, %v1904
        %1906 = vmatmul.f32.gmra.mxu0 %v1836
        %v1907 = vpop.f32.mrf.mxu0
        %v1908 = vadd.f32 %v1885, %v1907
        %1909 = vmatmul.f32.gmra.mxu0 %v1837
        %v1910 = vpop.f32.mrf.mxu0
        %v1911 = vadd.f32 %v1885, %v1910
        %1912 = vmatmul.f32.gmra.mxu0 %v1838
        %v1913 = vpop.f32.mrf.mxu0
        %v1914 = vadd.f32 %v1885, %v1913
        %1915 = vmatmul.f32.gmra.mxu0 %v1839
        %v1916 = vpop.f32.mrf.mxu0
        %v1917 = vadd.f32 %v1885, %v1916
        %1918 = vmatmul.f32.gmra.mxu0 %v1840
        %v1919 = vpop.f32.mrf.mxu0
        %v1920 = vadd.f32 %v1885, %v1919
        %1921 = vmatmul.f32.gmra.mxu0 %v1841
        %v1922 = vpop.f32.mrf.mxu0
        %v1923 = vadd.f32 %v1885, %v1922
        %1924 = vmatmul.f32.gmra.mxu0 %v1842
        %v1925 = vpop.f32.mrf.mxu0
        %v1926 = vadd.f32 %v1885, %v1925
        %1927 = vmatmul.f32.gmra.mxu0 %v1843
        %v1928 = vpop.f32.mrf.mxu0
        %v1929 = vadd.f32 %v1885, %v1928
        %1930 = vmatmul.f32.gmra.mxu0 %v1844
        %v1931 = vpop.f32.mrf.mxu0
        %v1932 = vadd.f32 %v1885, %v1931
        %1933 = vmatmul.f32.gmra.mxu0 %v1845
        %v1934 = vpop.f32.mrf.mxu0
        %v1935 = vadd.f32 %v1885, %v1934
        %1936 = vmatmul.f32.gmra.mxu0 %v1846
        %v1937 = vpop.f32.mrf.mxu0
        %v1938 = vadd.f32 %v1885, %v1937
        %1939 = vmatmul.f32.gmra.mxu0 %v1847
        %v1940 = vpop.f32.mrf.mxu0
        %v1941 = vadd.f32 %v1885, %v1940
        %1942 = vmatmul.f32.gmra.mxu0 %v1848
        %v1943 = vpop.f32.mrf.mxu0
        %v1944 = vadd.f32 %v1885, %v1943
        %1945 = vmatmul.f32.gmra.mxu0 %v1849
        %v1946 = vpop.f32.mrf.mxu0
        %v1947 = vadd.f32 %v1885, %v1946
        %1948 = vmatmul.f32.gmra.mxu0 %v1850
        %v1949 = vpop.f32.mrf.mxu0
        %v1950 = vadd.f32 %v1885, %v1949
        %1951 = vmatmul.f32.gmra.mxu0 %v1851
        %v1952 = vpop.f32.mrf.mxu0
        %v1953 = vadd.f32 %v1885, %v1952
        %1954 = vmatmul.f32.gmra.mxu0 %v1852
        %v1955 = vpop.f32.mrf.mxu0
        %v1956 = vadd.f32 %v1885, %v1955
        %1957 = vmatmul.f32.gmra.mxu0 %v1853
        %v1958 = vpop.f32.mrf.mxu0
        %v1959 = vadd.f32 %v1885, %v1958
        %1960 = vmatmul.f32.gmra.mxu0 %v1854
        %v1961 = vpop.f32.mrf.mxu0
        %v1962 = vadd.f32 %v1885, %v1961
        %1963 = vmatmul.f32.gmra.mxu0 %v1855
        %v1964 = vpop.f32.mrf.mxu0
        %v1965 = vadd.f32 %v1885, %v1964
        %1966 = vmatmul.f32.gmra.mxu0 %v1856
        %v1967 = vpop.f32.mrf.mxu0
        %v1968 = vadd.f32 %v1885, %v1967
        %1969 = vmatmul.f32.gmra.mxu0 %v1857
        %v1970 = vpop.f32.mrf.mxu0
        %v1971 = vadd.f32 %v1885, %v1970
        %1972 = vmatmul.f32.gmra.mxu0 %v1858
        %v1973 = vpop.f32.mrf.mxu0
        %v1974 = vadd.f32 %v1885, %v1973
        %1975 = vmatmul.f32.gmra.mxu0 %v1859
        %v1976 = vpop.f32.mrf.mxu0
        %v1977 = vadd.f32 %v1885, %v1976
        %1978 = vmatmul.f32.gmra.mxu0 %v1860
        %v1979 = vpop.f32.mrf.mxu0
        %v1980 = vadd.f32 %v1885, %v1979
        %1981 = vmatmul.f32.gmra.mxu0 %v1861
        %v1982 = vpop.f32.mrf.mxu0
        %v1983 = vadd.f32 %v1885, %v1982
        %1984 = vmatmul.f32.gmra.mxu0 %v1862
        %v1985 = vpop.f32.mrf.mxu0
        %v1986 = vadd.f32 %v1885, %v1985
        %1987 = vmatmul.f32.gmra.mxu0 %v1863
        %v1988 = vpop.f32.mrf.mxu0
        %v1989 = vadd.f32 %v1885, %v1988
        %1990 = vmatmul.f32.gmra.mxu0 %v1864
        %v1991 = vpop.f32.mrf.mxu0
        %v1992 = vadd.f32 %v1885, %v1991
        %1993 = vmatmul.f32.gmra.mxu0 %v1865
        %v1994 = vpop.f32.mrf.mxu0
        %v1995 = vadd.f32 %v1885, %v1994
        %1996 = vmatmul.f32.gmra.mxu0 %v1866
        %v1997 = vpop.f32.mrf.mxu0
        %v1998 = vadd.f32 %v1885, %v1997
        %1999 = vdwg.mxu0
        %2000 = vst [vmem:[%s177] sm:$0xff] %v1905
        %2001 = vst [vmem:[%s177 + $0x8] sm:$0xff] %v1908
        %2002 = vst [vmem:[%s177 + $0x10] sm:$0xff] %v1911
        %2003 = vst [vmem:[%s177 + $0x18] sm:$0xff] %v1914
        %2004 = vst [vmem:[%s177 + $0x20] sm:$0xff] %v1917
        %2005 = vst [vmem:[%s177 + $0x28] sm:$0xff] %v1920
        %2006 = vst [vmem:[%s177 + $0x30] sm:$0xff] %v1923
        %2007 = vst [vmem:[%s177 + $0x38] sm:$0xff] %v1926
        %2008 = vst [vmem:[%s177 + $0x40] sm:$0xff] %v1929
        %2009 = vst [vmem:[%s177 + $0x48] sm:$0xff] %v1932
        %2010 = vst [vmem:[%s177 + $0x50] sm:$0xff] %v1935
        %2011 = vst [vmem:[%s177 + $0x58] sm:$0xff] %v1938
        %2012 = vst [vmem:[%s177 + $0x60] sm:$0xff] %v1941
        %2013 = vst [vmem:[%s177 + $0x68] sm:$0xff] %v1944
        %2014 = vst [vmem:[%s177 + $0x70] sm:$0xff] %v1947
        %2015 = vst [vmem:[%s177 + $0x78] sm:$0xff] %v1950
        %2016 = vst [vmem:[%s177 + $0x80] sm:$0xff] %v1953
        %2017 = vst [vmem:[%s177 + $0x88] sm:$0xff] %v1956
        %2018 = vst [vmem:[%s177 + $0x90] sm:$0xff] %v1959
        %2019 = vst [vmem:[%s177 + $0x98] sm:$0xff] %v1962
        %2020 = vst [vmem:[%s177 + $0xa0] sm:$0xff] %v1965
        %2021 = vst [vmem:[%s177 + $0xa8] sm:$0xff] %v1968
        %2022 = vst [vmem:[%s177 + $0xb0] sm:$0xff] %v1971
        %2023 = vst [vmem:[%s177 + $0xb8] sm:$0xff] %v1974
        %2024 = vst [vmem:[%s177 + $0xc0] sm:$0xff] %v1977
        %2025 = vst [vmem:[%s177 + $0xc8] sm:$0xff] %v1980
        %2026 = vst [vmem:[%s177 + $0xd0] sm:$0xff] %v1983
        %2027 = vst [vmem:[%s177 + $0xd8] sm:$0xff] %v1986
        %2028 = vst [vmem:[%s177 + $0xe0] sm:$0xff] %v1989
        %2029 = vst [vmem:[%s177 + $0xe8] sm:$0xff] %v1992
        %2030 = vst [vmem:[%s177 + $0xf0] sm:$0xff] %v1995
        %2031 = vst [vmem:[%s177 + $0xf8] sm:$0xff] %v1998
        %s2032 = sand.u32 %s107, 1
        %s2033 = scalar_lea.sflag [#allocation4], %s2032
        %s2034 = sand.u32 %s107, 1
        %s2035 = smul.addr %s2034, 256
        %s2036 = scalar_lea.vmem [#allocation3], %s2035
        // Predicated region
        $region33: #{tpu_custom_call.1} parent=31 // pred_check
          %p2037 = pneg %p117
        $region34: #{tpu_custom_call.1} parent=31 // pred_check_branch
          %2039 = sbr.rel (%p2037) target = $region36
        $region35: #{tpu_custom_call.1} parent=31 // pred_region
          %s2040 = smul.u32 32, %s22
          %2042 = vsyncadd %s2033, 0
          %s2043 = smul.addr %s21, 32
          %s2044 = sadd.s32 %s2040, %s2043
          %s2045 = smul.addr %s2044, 8
          %s2046 = scalar_lea.hbm %s3, %s2045
          %s2047 = sshll.u32 %s2036, 4
          %s2048 = int_to_ptr.vmem [resolvable:$true] %s2047
          %s2049 = sshll.u32 %s2046, 4
          %s2050 = int_to_ptr.hbm [resolvable:$true] %s2049
          %2055 = dma.vmem_to_hbm [thread:$0]  %s2048, 4096, %s2050, %s2033, 128, 128, 8
        $region36: #{tpu_custom_call.1} parent=31 // pred_fallthru
          _
      $region32: #{tpu_custom_call.1} parent=5 // pred_fallthru
        _
      %p2056 = scmp.le.s32.totalorder 2, %s12
      // Predicated region
      $region37: #{tpu_custom_call.1} parent=5 // pred_check
        %p2057 = pneg %p2056
      $region38: #{tpu_custom_call.1} parent=5 // pred_check_branch
        %2059 = sbr.rel (%p2057) target = $region40
      $region39: #{tpu_custom_call.1} parent=5 // pred_region
        %s2060 = ssub.s32 %s12, 2
        // Predicated region
        $region41: #{tpu_custom_call.1} parent=39 // pred_check
          %p2061 = pneg %p123
        $region42: #{tpu_custom_call.1} parent=39 // pred_check_branch
          %2063 = sbr.rel (%p2061) target = $region44
        $region43: #{tpu_custom_call.1} parent=39 // pred_region
          %s2064 = sand.u32 %s108, 1
          %s2065 = scalar_lea.sflag [#allocation4], %s2064
          %s2066 = sand.u32 %s108, 1
          %s2067 = smul.addr %s2066, 256
          %s2068 = scalar_lea.vmem [#allocation3], %s2067
          %2070 = dma.done %s2065, 4096
        $region44: #{tpu_custom_call.1} parent=39 // pred_fallthru
          _
      $region40: #{tpu_custom_call.1} parent=5 // pred_fallthru
        _
    $region6: #{tpu_custom_call.1} parent=1 // loop_footer
      %s16 = sadd.s32 1, %s12
    $region7: #{tpu_custom_call.1} parent=1 // loop_footer_branch
      %11 = sbr.rel target = $region3
    $region8: #{tpu_custom_call.1} parent=1 // loop_exit
      _
    %2071 = vsyncpa [#allocation4], 1
    %s2072 = scalar_lea.sflag [#allocation4], 1
    %2073 = vsyncpa %s2072, 1

</llo_original>
